<compile_context>
chip_gen: v7x
topology: tpu7x:2x2x1
jax: 0.10.0
libtpu: 0.0.40
codegen_flags: <defaults>
</compile_context>

<pallas_src>
import functools

import jax
import jax.numpy as jnp
from jax.experimental import pallas as pl
from jax.experimental.pallas import tpu as pltpu


def _conv_relu_pool_kernel(x_ref, w_ref, b_ref, o_ref, *, nb, H, W, Hp, Wp):
    # x_ref: (nb*H*W, Cin)    bf16 -- nb images, rows ordered (n, h, w)
    # w_ref: (3, Cin, Cout)   bf16 -- one (Cin, Cout) matrix per kw tap
    # b_ref: (1, Cout)        f32  -- conv bias
    # o_ref: (nb*Hp*Wp, Cout) f32  -- rows ordered (n, hp, wp)
    R = nb * H * W
    Cout = w_ref.shape[-1]

    x = x_ref[...]                                          # (R, Cin), no relayout

    # Conv (1,3): three full-width MXU matmuls; tap shift via XLU roll on the
    # narrow (R, Cout) outputs:  acc[i] = sum_kw y_kw[i + kw].  Positions with
    # w > W-3 pick up wrapped/garbage taps and are cropped before pooling.
    acc = jnp.dot(x, w_ref[0], preferred_element_type=jnp.float32)
    for kw in (1, 2):
        y = jnp.dot(x, w_ref[kw], preferred_element_type=jnp.float32)
        acc = acc + pltpu.roll(y, (R - kw) % R, axis=0)     # == y shifted by -kw rows

    # MaxPool2d(2, 2) over (H, W-2), floor semantics, applied BEFORE bias+ReLU.
    Hc, Wc = 2 * Hp, 2 * Wp                                 # even, cropped extents
    acc3 = acc.reshape(nb * H, W, Cout)                     # rows (n, h)
    if Hc != H:                                             # odd H: drop last row/image
        acc3 = acc3.reshape(nb, H, W, Cout)[:, :Hc].reshape(nb * Hc, W, Cout)
    y = acc3[:, :Wc, :]                                     # drop invalid / odd cols
    y = jnp.max(y.reshape(nb * Hc, Wp, 2, Cout), axis=2)    # pool along W
    y = jnp.max(y.reshape(nb * Hp, 2, Wp, Cout), axis=1)    # pool along H
    out = y.reshape(nb * Hp * Wp, Cout)                     # dense output rows

    # Bias + ReLU on the pooled (4x smaller) tensor, then one dense store.
    out = jnp.maximum(out + b_ref[...], 0.0)
    o_ref[...] = out.astype(o_ref.dtype)


def _pick_images_per_block(N, H, W, Hp, Wp, target_rows=256):
    """Smallest divisor nb of N whose block is legal (row dims % 8 unless full) and
    whose matmul M = nb*H*W reaches ~256 rows (fills v6e/v7x MXU, >=2x v5e MXU),
    while leaving as many grid steps as possible for pipelining / megacore."""
    choice = N
    for nb in range(1, N + 1):
        if N % nb:
            continue
        if nb < N and ((nb * H * W) % 8 or (nb * Hp * Wp) % 8):
            continue
        choice = nb
        if nb * H * W >= target_rows:
            break
    return choice


def net_forward(x_nchw, weight, bias, *, compute_dtype=jnp.bfloat16):
    """x_nchw: (N, 1024, H, W); weight: (256, 1024, 1, 3); bias: (256,). Returns NCHW f32."""
    N, Cin, H, W = x_nchw.shape
    Cout, Cin_w, kh, kw = weight.shape
    assert Cin_w == Cin and kh == 1 and kw == 3
    Wout = W - 2
    Hp, Wp = H // 2, Wout // 2
    assert Hp >= 1 and Wp >= 1, "input too small for conv(1,3) + maxpool(2,2)"

    nb = _pick_images_per_block(N, H, W, Hp, Wp)
    G = N // nb
    rows_in, rows_out = nb * H * W, nb * Hp * Wp

    # Layout glue only (all compute lives in the kernel): NCHW -> channels-last,
    # flattened to lane/sublane-dense row slabs; bf16 matmul inputs.
    x_rows = jnp.transpose(x_nchw, (0, 2, 3, 1)).reshape(N * H * W, Cin).astype(compute_dtype)
    w_kio = jnp.transpose(weight[:, :, 0, :], (2, 1, 0)).astype(compute_dtype)  # (3, Cin, Cout)
    b_2d = bias.reshape(1, Cout).astype(jnp.float32)

    # Explicit VMEM budget: double-buffered blocks + f32 intermediates, 2x headroom,
    # capped well under v7x's 64 MiB physical VMEM.
    isz = jnp.dtype(compute_dtype).itemsize
    need = (2 * (rows_in * Cin * isz + 3 * Cin * Cout * isz + Cout * 4 + rows_out * Cout * 4)
            + 5 * rows_in * Cout * 4)
    vmem_limit = int(min(max(2 * need, 16 << 20), 48 << 20))

    kernel = functools.partial(_conv_relu_pool_kernel, nb=nb, H=H, W=W, Hp=Hp, Wp=Wp)

    out_flat = pl.pallas_call(
        kernel,
        out_shape=jax.ShapeDtypeStruct((N * Hp * Wp, Cout), jnp.float32),
        grid_spec=pltpu.PrefetchScalarGridSpec(
            num_scalar_prefetch=0,
            grid=(G,),
            in_specs=[
                pl.BlockSpec((rows_in, Cin), lambda g: (g, 0)),
                pl.BlockSpec((3, Cin, Cout), lambda g: (0, 0, 0)),
                pl.BlockSpec((1, Cout), lambda g: (0, 0)),
            ],
            out_specs=pl.BlockSpec((rows_out, Cout), lambda g: (g, 0)),
        ),
        compiler_params=pltpu.CompilerParams(
            dimension_semantics=("parallel",),
            vmem_limit_bytes=vmem_limit,
        ),
    )(x_rows, w_kio, b_2d)

    # Back to the PyTorch NCHW convention.  (If the surrounding model can consume
    # NHWC, these transposes can be dropped entirely.)
    return jnp.transpose(out_flat.reshape(N, Hp, Wp, Cout), (0, 3, 1, 2))


def reference_forward(x_nchw, weight, bias):
    """Pure-JAX/XLA reference matching the PyTorch module semantics (f32)."""
    y = jax.lax.conv_general_dilated(
        x_nchw, weight, window_strides=(1, 1), padding="VALID",
        dimension_numbers=("NCHW", "OIHW", "NCHW"))
    y = y + bias[None, :, None, None]
    y = jnp.maximum(y, 0.0)
    y = jax.lax.reduce_window(
        y, -jnp.inf, jax.lax.max,
        window_dimensions=(1, 1, 2, 2), window_strides=(1, 1, 2, 2),
        padding="VALID")
    return y


if __name__ == "__main__":
    # Small shapes consistent with the module: C_in must be 1024.
    N, Cin, H, W = 2, 1024, 8, 10
    Cout = 256

    key = jax.random.PRNGKey(0)
    kx, kw, kb = jax.random.split(key, 3)
    x = jax.random.normal(kx, (N, Cin, H, W), dtype=jnp.float32)
    weight = jax.random.normal(kw, (Cout, Cin, 1, 3), dtype=jnp.float32) * 0.01
    bias = jax.random.normal(kb, (Cout,), dtype=jnp.float32) * 0.01

    out = jax.block_until_ready(jax.jit(net_forward)(x, weight, bias))
    ref = jax.block_until_ready(reference_forward(x, weight, bias))

    assert out.shape == (N, Cout, H // 2, (W - 2) // 2), out.shape
    # bf16 matmul inputs (f32 accumulate) vs f32 reference -> loose tolerance.
    assert jnp.allclose(out, ref, atol=3e-2, rtol=3e-2), float(jnp.max(jnp.abs(out - ref)))

    print("KERNEL_OK")
</pallas_src>

<mosaic_0001>
module attributes {stable_mosaic.version = 11 : i64} {
  func.func @_conv_relu_pool_kernel(%arg0: i32, %arg1: memref<160x1024xbf16, #tpu.memory_space<vmem>>, %arg2: memref<3x1024x256xbf16, #tpu.memory_space<vmem>>, %arg3: memref<1x256xf32, #tpu.memory_space<vmem>>, %arg4: memref<32x256xf32, #tpu.memory_space<vmem>>) attributes {dimension_semantics = [#tpu.dimension_semantics<parallel>], iteration_bounds = array<i64: 1>, scalar_prefetch = 0 : i64, scratch_operands = 0 : i64, tpu.core_type = #tpu.core_type<tc>, window_params = [{transform_indices = @transform_0, window_bounds = array<i64: 160, 1024>}, {pipeline_mode = #tpu.pipeline_mode<synchronous>, transform_indices = @transform_1, window_bounds = array<i64: 3, 1024, 256>}, {pipeline_mode = #tpu.pipeline_mode<synchronous>, transform_indices = @transform_2, window_bounds = array<i64: 1, 256>}, {transform_indices = @transform_3, window_bounds = array<i64: 32, 256>}]} {
    %c0 = arith.constant 0 : index
    %c0_0 = arith.constant 0 : index
    %0 = vector.load %arg1[%c0, %c0_0] : memref<160x1024xbf16, #tpu.memory_space<vmem>>, vector<160x1024xbf16>
    %c0_1 = arith.constant 0 : index
    %c0_2 = arith.constant 0 : index
    %c0_3 = arith.constant 0 : index
    %1 = vector.load %arg2[%c0_1, %c0_2, %c0_3] : memref<3x1024x256xbf16, #tpu.memory_space<vmem>>, vector<1x1024x256xbf16>
    %2 = vector.shape_cast %1 : vector<1x1024x256xbf16> to vector<1024x256xbf16>
    %cst = arith.constant dense<0.000000e+00> : vector<160x256xf32>
    %3 = tpu.matmul %0, %2, %cst {dimension_numbers = #tpu.dot_dimension_numbers<[1], [0], [0], [1], [0, 0, 1, 1], [], []>} : vector<160x1024xbf16>, vector<1024x256xbf16>, vector<160x256xf32> -> vector<160x256xf32>
    %c1 = arith.constant 1 : index
    %c0_4 = arith.constant 0 : index
    %c0_5 = arith.constant 0 : index
    %4 = vector.load %arg2[%c1, %c0_4, %c0_5] : memref<3x1024x256xbf16, #tpu.memory_space<vmem>>, vector<1x1024x256xbf16>
    %5 = vector.shape_cast %4 : vector<1x1024x256xbf16> to vector<1024x256xbf16>
    %cst_6 = arith.constant dense<0.000000e+00> : vector<160x256xf32>
    %6 = tpu.matmul %0, %5, %cst_6 {dimension_numbers = #tpu.dot_dimension_numbers<[1], [0], [0], [1], [0, 0, 1, 1], [], []>} : vector<160x1024xbf16>, vector<1024x256xbf16>, vector<160x256xf32> -> vector<160x256xf32>
    %c159_i32 = arith.constant 159 : i32
    %7 = tpu.dynamic_rotate %6 by %c159_i32 dim 0 : vector<160x256xf32>, i32 -> vector<160x256xf32>
    %8 = arith.addf %3, %7 : vector<160x256xf32>
    %c2 = arith.constant 2 : index
    %c0_7 = arith.constant 0 : index
    %c0_8 = arith.constant 0 : index
    %9 = vector.load %arg2[%c2, %c0_7, %c0_8] : memref<3x1024x256xbf16, #tpu.memory_space<vmem>>, vector<1x1024x256xbf16>
    %10 = vector.shape_cast %9 : vector<1x1024x256xbf16> to vector<1024x256xbf16>
    %cst_9 = arith.constant dense<0.000000e+00> : vector<160x256xf32>
    %11 = tpu.matmul %0, %10, %cst_9 {dimension_numbers = #tpu.dot_dimension_numbers<[1], [0], [0], [1], [0, 0, 1, 1], [], []>} : vector<160x1024xbf16>, vector<1024x256xbf16>, vector<160x256xf32> -> vector<160x256xf32>
    %c158_i32 = arith.constant 158 : i32
    %12 = tpu.dynamic_rotate %11 by %c158_i32 dim 0 : vector<160x256xf32>, i32 -> vector<160x256xf32>
    %13 = arith.addf %8, %12 : vector<160x256xf32>
    %14 = vector.shape_cast %13 : vector<160x256xf32> to vector<16x10x256xf32>
    %15 = vector.extract_strided_slice %14 {offsets = [0, 0, 0], sizes = [16, 8, 256], strides = [1, 1, 1]} : vector<16x10x256xf32> to vector<16x8x256xf32>
    %16 = vector.shape_cast %15 : vector<16x8x256xf32> to vector<16x4x2x256xf32>
    %cst_10 = arith.constant dense<0xFF800000> : vector<16x4x256xf32>
    %17 = vector.multi_reduction <maximumf>, %16, %cst_10 [2] : vector<16x4x2x256xf32> to vector<16x4x256xf32>
    %18 = vector.shape_cast %17 : vector<16x4x256xf32> to vector<8x2x4x256xf32>
    %cst_11 = arith.constant dense<0xFF800000> : vector<8x4x256xf32>
    %19 = vector.multi_reduction <maximumf>, %18, %cst_11 [1] : vector<8x2x4x256xf32> to vector<8x4x256xf32>
    %20 = vector.shape_cast %19 : vector<8x4x256xf32> to vector<32x256xf32>
    %c0_12 = arith.constant 0 : index
    %c0_13 = arith.constant 0 : index
    %21 = vector.load %arg3[%c0_12, %c0_13] : memref<1x256xf32, #tpu.memory_space<vmem>>, vector<1x256xf32>
    %22 = vector.broadcast %21 : vector<1x256xf32> to vector<32x256xf32>
    %23 = arith.addf %20, %22 : vector<32x256xf32>
    %cst_14 = arith.constant 0.000000e+00 : f32
    %24 = vector.broadcast %cst_14 : f32 to vector<32x256xf32>
    %25 = arith.maximumf %23, %24 : vector<32x256xf32>
    %c0_15 = arith.constant 0 : index
    %c0_16 = arith.constant 0 : index
    %26 = vector.load %arg4[%c0_15, %c0_16] : memref<32x256xf32, #tpu.memory_space<vmem>>, vector<32x256xf32>
    tpu.vector_store %arg4[%c0_15, %c0_16], %25 {strides = array<i32>} : memref<32x256xf32, #tpu.memory_space<vmem>>, vector<32x256xf32>,
    return
  }
  func.func @transform_0(%arg0: i32) -> (i32, i32) {
    %c0_i32 = arith.constant 0 : i32
    %c0_i32_0 = arith.constant 0 : i32
    return %arg0, %c0_i32 : i32, i32
  }
  func.func @transform_1(%arg0: i32) -> (i32, i32, i32) {
    %c0_i32 = arith.constant 0 : i32
    %c0_i32_0 = arith.constant 0 : i32
    %c0_i32_1 = arith.constant 0 : i32
    %c0_i32_2 = arith.constant 0 : i32
    return %c0_i32, %c0_i32_0, %c0_i32_1 : i32, i32, i32
  }
  func.func @transform_2(%arg0: i32) -> (i32, i32) {
    %c0_i32 = arith.constant 0 : i32
    %c0_i32_0 = arith.constant 0 : i32
    %c0_i32_1 = arith.constant 0 : i32
    return %c0_i32, %c0_i32_0 : i32, i32
  }
  func.func @transform_3(%arg0: i32) -> (i32, i32) {
    %c0_i32 = arith.constant 0 : i32
    %c0_i32_0 = arith.constant 0 : i32
    return %arg0, %c0_i32 : i32, i32
  }
}

</mosaic_0001>

<llo_original>
// kernel: net_forward.1
$region0: #{net_forward.1}
  #allocation0 [shape = 'u32[]', space=smem, size = 0x4, offset = 0x4, fixed_abs, tag = 'smem constant byte address 0x4 - core index']
  #allocation1 [shape = 'u32[144,128]{1,0:T(1,128)}', space=vmem, size = 0x12000, scoped, tag = 'internal scratch']
  %s0 = inlined_call_operand.vmem [shape: bf16[160,1024], index: 0, kind: input, shape index: {}]
  %s1 = inlined_call_operand.vmem [shape: bf16[3,1024,256], index: 1, kind: input, shape index: {}]
  %s2 = inlined_call_operand.vmem [shape: f32[1,256], index: 2, kind: input, shape index: {}]
  %s3 = inlined_call_operand.vmem [shape: f32[32,256], index: 3, kind: output, shape index: {}]
  %s4 = sld [smem:[#allocation0]]
  $region22: #{net_forward.1} parent=0
    _
  %s6 = ssub.s32 1, %s4
  %s7 = scalar_select 0, %s6, %s4
  // Predicated region
  $region2: #{net_forward.1} parent=0 // pred_check
    _
  $region3: #{net_forward.1} parent=0 // pred_check_branch
    %9 = sbr.rel (0) target = $region5
  $region4: #{net_forward.1} parent=0 // pred_region
    _
  $region5: #{net_forward.1} parent=0 // pred_fallthru
    _
  // Predicated region
  $region6: #{net_forward.1} parent=0 // pred_check
    _
  $region7: #{net_forward.1} parent=0 // pred_check_branch
    %11 = sbr.rel (0) target = $region9
  $region8: #{net_forward.1} parent=0 // pred_region
    _
  $region9: #{net_forward.1} parent=0 // pred_fallthru
    _
  // Predicated region
  $region10: #{net_forward.1} parent=0 // pred_check
    _
  $region11: #{net_forward.1} parent=0 // pred_check_branch
    %13 = sbr.rel (0) target = $region13
  $region12: #{net_forward.1} parent=0 // pred_region
    _
  $region13: #{net_forward.1} parent=0 // pred_fallthru
    _
  %v14 = vld [vmem:[%s0] sm:$0xff]
  %v15 = vld [vmem:[%s0 + $0x8] sm:$0xff]
  %v16 = vld [vmem:[%s0 + $0x10] sm:$0xff]
  %v17 = vld [vmem:[%s0 + $0x18] sm:$0xff]
  %v18 = vld [vmem:[%s0 + $0x20] sm:$0xff]
  %v19 = vld [vmem:[%s0 + $0x28] sm:$0xff]
  %v20 = vld [vmem:[%s0 + $0x30] sm:$0xff]
  %v21 = vld [vmem:[%s0 + $0x38] sm:$0xff]
  %v22 = vld [vmem:[%s0 + $0x40] sm:$0xff]
  %v23 = vld [vmem:[%s0 + $0x48] sm:$0xff]
  %v24 = vld [vmem:[%s0 + $0x50] sm:$0xff]
  %v25 = vld [vmem:[%s0 + $0x58] sm:$0xff]
  %v26 = vld [vmem:[%s0 + $0x60] sm:$0xff]
  %v27 = vld [vmem:[%s0 + $0x68] sm:$0xff]
  %v28 = vld [vmem:[%s0 + $0x70] sm:$0xff]
  %v29 = vld [vmem:[%s0 + $0x78] sm:$0xff]
  %v30 = vld [vmem:[%s0 + $0x80] sm:$0xff]
  %v31 = vld [vmem:[%s0 + $0x88] sm:$0xff]
  %v32 = vld [vmem:[%s0 + $0x90] sm:$0xff]
  %v33 = vld [vmem:[%s0 + $0x98] sm:$0xff]
  %v34 = vld [vmem:[%s0 + $0xa0] sm:$0xff]
  %v35 = vld [vmem:[%s0 + $0xa8] sm:$0xff]
  %v36 = vld [vmem:[%s0 + $0xb0] sm:$0xff]
  %v37 = vld [vmem:[%s0 + $0xb8] sm:$0xff]
  %v38 = vld [vmem:[%s0 + $0xc0] sm:$0xff]
  %v39 = vld [vmem:[%s0 + $0xc8] sm:$0xff]
  %v40 = vld [vmem:[%s0 + $0xd0] sm:$0xff]
  %v41 = vld [vmem:[%s0 + $0xd8] sm:$0xff]
  %v42 = vld [vmem:[%s0 + $0xe0] sm:$0xff]
  %v43 = vld [vmem:[%s0 + $0xe8] sm:$0xff]
  %v44 = vld [vmem:[%s0 + $0xf0] sm:$0xff]
  %v45 = vld [vmem:[%s0 + $0xf8] sm:$0xff]
  %v46 = vld [vmem:[%s0 + $0x100] sm:$0xff]
  %v47 = vld [vmem:[%s0 + $0x108] sm:$0xff]
  %v48 = vld [vmem:[%s0 + $0x110] sm:$0xff]
  %v49 = vld [vmem:[%s0 + $0x118] sm:$0xff]
  %v50 = vld [vmem:[%s0 + $0x120] sm:$0xff]
  %v51 = vld [vmem:[%s0 + $0x128] sm:$0xff]
  %v52 = vld [vmem:[%s0 + $0x130] sm:$0xff]
  %v53 = vld [vmem:[%s0 + $0x138] sm:$0xff]
  %v54 = vld [vmem:[%s0 + $0x140] sm:$0xff]
  %v55 = vld [vmem:[%s0 + $0x148] sm:$0xff]
  %v56 = vld [vmem:[%s0 + $0x150] sm:$0xff]
  %v57 = vld [vmem:[%s0 + $0x158] sm:$0xff]
  %v58 = vld [vmem:[%s0 + $0x160] sm:$0xff]
  %v59 = vld [vmem:[%s0 + $0x168] sm:$0xff]
  %v60 = vld [vmem:[%s0 + $0x170] sm:$0xff]
  %v61 = vld [vmem:[%s0 + $0x178] sm:$0xff]
  %v62 = vld [vmem:[%s0 + $0x180] sm:$0xff]
  %v63 = vld [vmem:[%s0 + $0x188] sm:$0xff]
  %v64 = vld [vmem:[%s0 + $0x190] sm:$0xff]
  %v65 = vld [vmem:[%s0 + $0x198] sm:$0xff]
  %v66 = vld [vmem:[%s0 + $0x1a0] sm:$0xff]
  %v67 = vld [vmem:[%s0 + $0x1a8] sm:$0xff]
  %v68 = vld [vmem:[%s0 + $0x1b0] sm:$0xff]
  %v69 = vld [vmem:[%s0 + $0x1b8] sm:$0xff]
  %v70 = vld [vmem:[%s0 + $0x1c0] sm:$0xff]
  %v71 = vld [vmem:[%s0 + $0x1c8] sm:$0xff]
  %v72 = vld [vmem:[%s0 + $0x1d0] sm:$0xff]
  %v73 = vld [vmem:[%s0 + $0x1d8] sm:$0xff]
  %v74 = vld [vmem:[%s0 + $0x1e0] sm:$0xff]
  %v75 = vld [vmem:[%s0 + $0x1e8] sm:$0xff]
  %v76 = vld [vmem:[%s0 + $0x1f0] sm:$0xff]
  %v77 = vld [vmem:[%s0 + $0x1f8] sm:$0xff]
  %v78 = vld [vmem:[%s0 + $0x200] sm:$0xff]
  %v79 = vld [vmem:[%s0 + $0x208] sm:$0xff]
  %v80 = vld [vmem:[%s0 + $0x210] sm:$0xff]
  %v81 = vld [vmem:[%s0 + $0x218] sm:$0xff]
  %v82 = vld [vmem:[%s0 + $0x220] sm:$0xff]
  %v83 = vld [vmem:[%s0 + $0x228] sm:$0xff]
  %v84 = vld [vmem:[%s0 + $0x230] sm:$0xff]
  %v85 = vld [vmem:[%s0 + $0x238] sm:$0xff]
  %v86 = vld [vmem:[%s0 + $0x240] sm:$0xff]
  %v87 = vld [vmem:[%s0 + $0x248] sm:$0xff]
  %v88 = vld [vmem:[%s0 + $0x250] sm:$0xff]
  %v89 = vld [vmem:[%s0 + $0x258] sm:$0xff]
  %v90 = vld [vmem:[%s0 + $0x260] sm:$0xff]
  %v91 = vld [vmem:[%s0 + $0x268] sm:$0xff]
  %v92 = vld [vmem:[%s0 + $0x270] sm:$0xff]
  %v93 = vld [vmem:[%s0 + $0x278] sm:$0xff]
  %v94 = vld [vmem:[%s1] sm:$0xff]
  %v95 = vld [vmem:[%s1 + $0x8] sm:$0xff]
  %v96 = vld [vmem:[%s1 + $0x10] sm:$0xff]
  %v97 = vld [vmem:[%s1 + $0x18] sm:$0xff]
  %v98 = vld [vmem:[%s1 + $0x20] sm:$0xff]
  %v99 = vld [vmem:[%s1 + $0x28] sm:$0xff]
  %v100 = vld [vmem:[%s1 + $0x30] sm:$0xff]
  %v101 = vld [vmem:[%s1 + $0x38] sm:$0xff]
  %v102 = vld [vmem:[%s1 + $0x40] sm:$0xff]
  %v103 = vld [vmem:[%s1 + $0x48] sm:$0xff]
  %v104 = vld [vmem:[%s1 + $0x50] sm:$0xff]
  %v105 = vld [vmem:[%s1 + $0x58] sm:$0xff]
  %v106 = vld [vmem:[%s1 + $0x60] sm:$0xff]
  %v107 = vld [vmem:[%s1 + $0x68] sm:$0xff]
  %v108 = vld [vmem:[%s1 + $0x70] sm:$0xff]
  %v109 = vld [vmem:[%s1 + $0x78] sm:$0xff]
  %v110 = vld [vmem:[%s1 + $0x80] sm:$0xff]
  %v111 = vld [vmem:[%s1 + $0x88] sm:$0xff]
  %v112 = vld [vmem:[%s1 + $0x90] sm:$0xff]
  %v113 = vld [vmem:[%s1 + $0x98] sm:$0xff]
  %v114 = vld [vmem:[%s1 + $0xa0] sm:$0xff]
  %v115 = vld [vmem:[%s1 + $0xa8] sm:$0xff]
  %v116 = vld [vmem:[%s1 + $0xb0] sm:$0xff]
  %v117 = vld [vmem:[%s1 + $0xb8] sm:$0xff]
  %v118 = vld [vmem:[%s1 + $0xc0] sm:$0xff]
  %v119 = vld [vmem:[%s1 + $0xc8] sm:$0xff]
  %v120 = vld [vmem:[%s1 + $0xd0] sm:$0xff]
  %v121 = vld [vmem:[%s1 + $0xd8] sm:$0xff]
  %v122 = vld [vmem:[%s1 + $0xe0] sm:$0xff]
  %v123 = vld [vmem:[%s1 + $0xe8] sm:$0xff]
  %v124 = vld [vmem:[%s1 + $0xf0] sm:$0xff]
  %v125 = vld [vmem:[%s1 + $0xf8] sm:$0xff]
  %v126 = vld [vmem:[%s1 + $0x100] sm:$0xff]
  %v127 = vld [vmem:[%s1 + $0x108] sm:$0xff]
  %v128 = vld [vmem:[%s1 + $0x110] sm:$0xff]
  %v129 = vld [vmem:[%s1 + $0x118] sm:$0xff]
  %v130 = vld [vmem:[%s1 + $0x120] sm:$0xff]
  %v131 = vld [vmem:[%s1 + $0x128] sm:$0xff]
  %v132 = vld [vmem:[%s1 + $0x130] sm:$0xff]
  %v133 = vld [vmem:[%s1 + $0x138] sm:$0xff]
  %v134 = vld [vmem:[%s1 + $0x140] sm:$0xff]
  %v135 = vld [vmem:[%s1 + $0x148] sm:$0xff]
  %v136 = vld [vmem:[%s1 + $0x150] sm:$0xff]
  %v137 = vld [vmem:[%s1 + $0x158] sm:$0xff]
  %v138 = vld [vmem:[%s1 + $0x160] sm:$0xff]
  %v139 = vld [vmem:[%s1 + $0x168] sm:$0xff]
  %v140 = vld [vmem:[%s1 + $0x170] sm:$0xff]
  %v141 = vld [vmem:[%s1 + $0x178] sm:$0xff]
  %v142 = vld [vmem:[%s1 + $0x180] sm:$0xff]
  %v143 = vld [vmem:[%s1 + $0x188] sm:$0xff]
  %v144 = vld [vmem:[%s1 + $0x190] sm:$0xff]
  %v145 = vld [vmem:[%s1 + $0x198] sm:$0xff]
  %v146 = vld [vmem:[%s1 + $0x1a0] sm:$0xff]
  %v147 = vld [vmem:[%s1 + $0x1a8] sm:$0xff]
  %v148 = vld [vmem:[%s1 + $0x1b0] sm:$0xff]
  %v149 = vld [vmem:[%s1 + $0x1b8] sm:$0xff]
  %v150 = vld [vmem:[%s1 + $0x1c0] sm:$0xff]
  %v151 = vld [vmem:[%s1 + $0x1c8] sm:$0xff]
  %v152 = vld [vmem:[%s1 + $0x1d0] sm:$0xff]
  %v153 = vld [vmem:[%s1 + $0x1d8] sm:$0xff]
  %v154 = vld [vmem:[%s1 + $0x1e0] sm:$0xff]
  %v155 = vld [vmem:[%s1 + $0x1e8] sm:$0xff]
  %v156 = vld [vmem:[%s1 + $0x1f0] sm:$0xff]
  %v157 = vld [vmem:[%s1 + $0x1f8] sm:$0xff]
  %v158 = vld [vmem:[%s1 + $0x200] sm:$0xff]
  %v159 = vld [vmem:[%s1 + $0x208] sm:$0xff]
  %v160 = vld [vmem:[%s1 + $0x210] sm:$0xff]
  %v161 = vld [vmem:[%s1 + $0x218] sm:$0xff]
  %v162 = vld [vmem:[%s1 + $0x220] sm:$0xff]
  %v163 = vld [vmem:[%s1 + $0x228] sm:$0xff]
  %v164 = vld [vmem:[%s1 + $0x230] sm:$0xff]
  %v165 = vld [vmem:[%s1 + $0x238] sm:$0xff]
  %v166 = vld [vmem:[%s1 + $0x240] sm:$0xff]
  %v167 = vld [vmem:[%s1 + $0x248] sm:$0xff]
  %v168 = vld [vmem:[%s1 + $0x250] sm:$0xff]
  %v169 = vld [vmem:[%s1 + $0x258] sm:$0xff]
  %v170 = vld [vmem:[%s1 + $0x260] sm:$0xff]
  %v171 = vld [vmem:[%s1 + $0x268] sm:$0xff]
  %v172 = vld [vmem:[%s1 + $0x270] sm:$0xff]
  %v173 = vld [vmem:[%s1 + $0x278] sm:$0xff]
  %v174 = vld [vmem:[%s1 + $0x280] sm:$0xff]
  %v175 = vld [vmem:[%s1 + $0x288] sm:$0xff]
  %v176 = vld [vmem:[%s1 + $0x290] sm:$0xff]
  %v177 = vld [vmem:[%s1 + $0x298] sm:$0xff]
  %v178 = vld [vmem:[%s1 + $0x2a0] sm:$0xff]
  %v179 = vld [vmem:[%s1 + $0x2a8] sm:$0xff]
  %v180 = vld [vmem:[%s1 + $0x2b0] sm:$0xff]
  %v181 = vld [vmem:[%s1 + $0x2b8] sm:$0xff]
  %v182 = vld [vmem:[%s1 + $0x2c0] sm:$0xff]
  %v183 = vld [vmem:[%s1 + $0x2c8] sm:$0xff]
  %v184 = vld [vmem:[%s1 + $0x2d0] sm:$0xff]
  %v185 = vld [vmem:[%s1 + $0x2d8] sm:$0xff]
  %v186 = vld [vmem:[%s1 + $0x2e0] sm:$0xff]
  %v187 = vld [vmem:[%s1 + $0x2e8] sm:$0xff]
  %v188 = vld [vmem:[%s1 + $0x2f0] sm:$0xff]
  %v189 = vld [vmem:[%s1 + $0x2f8] sm:$0xff]
  %v190 = vld [vmem:[%s1 + $0x300] sm:$0xff]
  %v191 = vld [vmem:[%s1 + $0x308] sm:$0xff]
  %v192 = vld [vmem:[%s1 + $0x310] sm:$0xff]
  %v193 = vld [vmem:[%s1 + $0x318] sm:$0xff]
  %v194 = vld [vmem:[%s1 + $0x320] sm:$0xff]
  %v195 = vld [vmem:[%s1 + $0x328] sm:$0xff]
  %v196 = vld [vmem:[%s1 + $0x330] sm:$0xff]
  %v197 = vld [vmem:[%s1 + $0x338] sm:$0xff]
  %v198 = vld [vmem:[%s1 + $0x340] sm:$0xff]
  %v199 = vld [vmem:[%s1 + $0x348] sm:$0xff]
  %v200 = vld [vmem:[%s1 + $0x350] sm:$0xff]
  %v201 = vld [vmem:[%s1 + $0x358] sm:$0xff]
  %v202 = vld [vmem:[%s1 + $0x360] sm:$0xff]
  %v203 = vld [vmem:[%s1 + $0x368] sm:$0xff]
  %v204 = vld [vmem:[%s1 + $0x370] sm:$0xff]
  %v205 = vld [vmem:[%s1 + $0x378] sm:$0xff]
  %v206 = vld [vmem:[%s1 + $0x380] sm:$0xff]
  %v207 = vld [vmem:[%s1 + $0x388] sm:$0xff]
  %v208 = vld [vmem:[%s1 + $0x390] sm:$0xff]
  %v209 = vld [vmem:[%s1 + $0x398] sm:$0xff]
  %v210 = vld [vmem:[%s1 + $0x3a0] sm:$0xff]
  %v211 = vld [vmem:[%s1 + $0x3a8] sm:$0xff]
  %v212 = vld [vmem:[%s1 + $0x3b0] sm:$0xff]
  %v213 = vld [vmem:[%s1 + $0x3b8] sm:$0xff]
  %v214 = vld [vmem:[%s1 + $0x3c0] sm:$0xff]
  %v215 = vld [vmem:[%s1 + $0x3c8] sm:$0xff]
  %v216 = vld [vmem:[%s1 + $0x3d0] sm:$0xff]
  %v217 = vld [vmem:[%s1 + $0x3d8] sm:$0xff]
  %v218 = vld [vmem:[%s1 + $0x3e0] sm:$0xff]
  %v219 = vld [vmem:[%s1 + $0x3e8] sm:$0xff]
  %v220 = vld [vmem:[%s1 + $0x3f0] sm:$0xff]
  %v221 = vld [vmem:[%s1 + $0x3f8] sm:$0xff]
  %s222 = scalar_lea.vmem %s1, 1024
  %v223 = vld [vmem:[%s222] sm:$0xff]
  %v224 = vld [vmem:[%s222 + $0x8] sm:$0xff]
  %v225 = vld [vmem:[%s222 + $0x10] sm:$0xff]
  %v226 = vld [vmem:[%s222 + $0x18] sm:$0xff]
  %v227 = vld [vmem:[%s222 + $0x20] sm:$0xff]
  %v228 = vld [vmem:[%s222 + $0x28] sm:$0xff]
  %v229 = vld [vmem:[%s222 + $0x30] sm:$0xff]
  %v230 = vld [vmem:[%s222 + $0x38] sm:$0xff]
  %v231 = vld [vmem:[%s222 + $0x40] sm:$0xff]
  %v232 = vld [vmem:[%s222 + $0x48] sm:$0xff]
  %v233 = vld [vmem:[%s222 + $0x50] sm:$0xff]
  %v234 = vld [vmem:[%s222 + $0x58] sm:$0xff]
  %v235 = vld [vmem:[%s222 + $0x60] sm:$0xff]
  %v236 = vld [vmem:[%s222 + $0x68] sm:$0xff]
  %v237 = vld [vmem:[%s222 + $0x70] sm:$0xff]
  %v238 = vld [vmem:[%s222 + $0x78] sm:$0xff]
  %v239 = vld [vmem:[%s222 + $0x80] sm:$0xff]
  %v240 = vld [vmem:[%s222 + $0x88] sm:$0xff]
  %v241 = vld [vmem:[%s222 + $0x90] sm:$0xff]
  %v242 = vld [vmem:[%s222 + $0x98] sm:$0xff]
  %v243 = vld [vmem:[%s222 + $0xa0] sm:$0xff]
  %v244 = vld [vmem:[%s222 + $0xa8] sm:$0xff]
  %v245 = vld [vmem:[%s222 + $0xb0] sm:$0xff]
  %v246 = vld [vmem:[%s222 + $0xb8] sm:$0xff]
  %v247 = vld [vmem:[%s222 + $0xc0] sm:$0xff]
  %v248 = vld [vmem:[%s222 + $0xc8] sm:$0xff]
  %v249 = vld [vmem:[%s222 + $0xd0] sm:$0xff]
  %v250 = vld [vmem:[%s222 + $0xd8] sm:$0xff]
  %v251 = vld [vmem:[%s222 + $0xe0] sm:$0xff]
  %v252 = vld [vmem:[%s222 + $0xe8] sm:$0xff]
  %v253 = vld [vmem:[%s222 + $0xf0] sm:$0xff]
  %v254 = vld [vmem:[%s222 + $0xf8] sm:$0xff]
  %v255 = vld [vmem:[%s222 + $0x100] sm:$0xff]
  %v256 = vld [vmem:[%s222 + $0x108] sm:$0xff]
  %v257 = vld [vmem:[%s222 + $0x110] sm:$0xff]
  %v258 = vld [vmem:[%s222 + $0x118] sm:$0xff]
  %v259 = vld [vmem:[%s222 + $0x120] sm:$0xff]
  %v260 = vld [vmem:[%s222 + $0x128] sm:$0xff]
  %v261 = vld [vmem:[%s222 + $0x130] sm:$0xff]
  %v262 = vld [vmem:[%s222 + $0x138] sm:$0xff]
  %v263 = vld [vmem:[%s222 + $0x140] sm:$0xff]
  %v264 = vld [vmem:[%s222 + $0x148] sm:$0xff]
  %v265 = vld [vmem:[%s222 + $0x150] sm:$0xff]
  %v266 = vld [vmem:[%s222 + $0x158] sm:$0xff]
  %v267 = vld [vmem:[%s222 + $0x160] sm:$0xff]
  %v268 = vld [vmem:[%s222 + $0x168] sm:$0xff]
  %v269 = vld [vmem:[%s222 + $0x170] sm:$0xff]
  %v270 = vld [vmem:[%s222 + $0x178] sm:$0xff]
  %v271 = vld [vmem:[%s222 + $0x180] sm:$0xff]
  %v272 = vld [vmem:[%s222 + $0x188] sm:$0xff]
  %v273 = vld [vmem:[%s222 + $0x190] sm:$0xff]
  %v274 = vld [vmem:[%s222 + $0x198] sm:$0xff]
  %v275 = vld [vmem:[%s222 + $0x1a0] sm:$0xff]
  %v276 = vld [vmem:[%s222 + $0x1a8] sm:$0xff]
  %v277 = vld [vmem:[%s222 + $0x1b0] sm:$0xff]
  %v278 = vld [vmem:[%s222 + $0x1b8] sm:$0xff]
  %v279 = vld [vmem:[%s222 + $0x1c0] sm:$0xff]
  %v280 = vld [vmem:[%s222 + $0x1c8] sm:$0xff]
  %v281 = vld [vmem:[%s222 + $0x1d0] sm:$0xff]
  %v282 = vld [vmem:[%s222 + $0x1d8] sm:$0xff]
  %v283 = vld [vmem:[%s222 + $0x1e0] sm:$0xff]
  %v284 = vld [vmem:[%s222 + $0x1e8] sm:$0xff]
  %v285 = vld [vmem:[%s222 + $0x1f0] sm:$0xff]
  %v286 = vld [vmem:[%s222 + $0x1f8] sm:$0xff]
  %v287 = vld [vmem:[%s222 + $0x200] sm:$0xff]
  %v288 = vld [vmem:[%s222 + $0x208] sm:$0xff]
  %v289 = vld [vmem:[%s222 + $0x210] sm:$0xff]
  %v290 = vld [vmem:[%s222 + $0x218] sm:$0xff]
  %v291 = vld [vmem:[%s222 + $0x220] sm:$0xff]
  %v292 = vld [vmem:[%s222 + $0x228] sm:$0xff]
  %v293 = vld [vmem:[%s222 + $0x230] sm:$0xff]
  %v294 = vld [vmem:[%s222 + $0x238] sm:$0xff]
  %v295 = vld [vmem:[%s222 + $0x240] sm:$0xff]
  %v296 = vld [vmem:[%s222 + $0x248] sm:$0xff]
  %v297 = vld [vmem:[%s222 + $0x250] sm:$0xff]
  %v298 = vld [vmem:[%s222 + $0x258] sm:$0xff]
  %v299 = vld [vmem:[%s222 + $0x260] sm:$0xff]
  %v300 = vld [vmem:[%s222 + $0x268] sm:$0xff]
  %v301 = vld [vmem:[%s222 + $0x270] sm:$0xff]
  %v302 = vld [vmem:[%s222 + $0x278] sm:$0xff]
  %v303 = vld [vmem:[%s222 + $0x280] sm:$0xff]
  %v304 = vld [vmem:[%s222 + $0x288] sm:$0xff]
  %v305 = vld [vmem:[%s222 + $0x290] sm:$0xff]
  %v306 = vld [vmem:[%s222 + $0x298] sm:$0xff]
  %v307 = vld [vmem:[%s222 + $0x2a0] sm:$0xff]
  %v308 = vld [vmem:[%s222 + $0x2a8] sm:$0xff]
  %v309 = vld [vmem:[%s222 + $0x2b0] sm:$0xff]
  %v310 = vld [vmem:[%s222 + $0x2b8] sm:$0xff]
  %v311 = vld [vmem:[%s222 + $0x2c0] sm:$0xff]
  %v312 = vld [vmem:[%s222 + $0x2c8] sm:$0xff]
  %v313 = vld [vmem:[%s222 + $0x2d0] sm:$0xff]
  %v314 = vld [vmem:[%s222 + $0x2d8] sm:$0xff]
  %v315 = vld [vmem:[%s222 + $0x2e0] sm:$0xff]
  %v316 = vld [vmem:[%s222 + $0x2e8] sm:$0xff]
  %v317 = vld [vmem:[%s222 + $0x2f0] sm:$0xff]
  %v318 = vld [vmem:[%s222 + $0x2f8] sm:$0xff]
  %v319 = vld [vmem:[%s222 + $0x300] sm:$0xff]
  %v320 = vld [vmem:[%s222 + $0x308] sm:$0xff]
  %v321 = vld [vmem:[%s222 + $0x310] sm:$0xff]
  %v322 = vld [vmem:[%s222 + $0x318] sm:$0xff]
  %v323 = vld [vmem:[%s222 + $0x320] sm:$0xff]
  %v324 = vld [vmem:[%s222 + $0x328] sm:$0xff]
  %v325 = vld [vmem:[%s222 + $0x330] sm:$0xff]
  %v326 = vld [vmem:[%s222 + $0x338] sm:$0xff]
  %v327 = vld [vmem:[%s222 + $0x340] sm:$0xff]
  %v328 = vld [vmem:[%s222 + $0x348] sm:$0xff]
  %v329 = vld [vmem:[%s222 + $0x350] sm:$0xff]
  %v330 = vld [vmem:[%s222 + $0x358] sm:$0xff]
  %v331 = vld [vmem:[%s222 + $0x360] sm:$0xff]
  %v332 = vld [vmem:[%s222 + $0x368] sm:$0xff]
  %v333 = vld [vmem:[%s222 + $0x370] sm:$0xff]
  %v334 = vld [vmem:[%s222 + $0x378] sm:$0xff]
  %v335 = vld [vmem:[%s222 + $0x380] sm:$0xff]
  %v336 = vld [vmem:[%s222 + $0x388] sm:$0xff]
  %v337 = vld [vmem:[%s222 + $0x390] sm:$0xff]
  %v338 = vld [vmem:[%s222 + $0x398] sm:$0xff]
  %v339 = vld [vmem:[%s222 + $0x3a0] sm:$0xff]
  %v340 = vld [vmem:[%s222 + $0x3a8] sm:$0xff]
  %v341 = vld [vmem:[%s222 + $0x3b0] sm:$0xff]
  %v342 = vld [vmem:[%s222 + $0x3b8] sm:$0xff]
  %v343 = vld [vmem:[%s222 + $0x3c0] sm:$0xff]
  %v344 = vld [vmem:[%s222 + $0x3c8] sm:$0xff]
  %v345 = vld [vmem:[%s222 + $0x3d0] sm:$0xff]
  %v346 = vld [vmem:[%s222 + $0x3d8] sm:$0xff]
  %v347 = vld [vmem:[%s222 + $0x3e0] sm:$0xff]
  %v348 = vld [vmem:[%s222 + $0x3e8] sm:$0xff]
  %v349 = vld [vmem:[%s222 + $0x3f0] sm:$0xff]
  %v350 = vld [vmem:[%s222 + $0x3f8] sm:$0xff]
  %v431 = vunpack.c.l.b16 %v14
  %v432 = vunpack.c.h.b16 %v14
  %v433 = vunpack.c.l.b16 %v15
  %v434 = vunpack.c.h.b16 %v15
  %v435 = vunpack.c.l.b16 %v16
  %v436 = vunpack.c.h.b16 %v16
  %v437 = vunpack.c.l.b16 %v17
  %v438 = vunpack.c.h.b16 %v17
  %v439 = vunpack.c.l.b16 %v18
  %v440 = vunpack.c.h.b16 %v18
  %v441 = vunpack.c.l.b16 %v19
  %v442 = vunpack.c.h.b16 %v19
  %v443 = vunpack.c.l.b16 %v20
  %v444 = vunpack.c.h.b16 %v20
  %v445 = vunpack.c.l.b16 %v21
  %v446 = vunpack.c.h.b16 %v21
  %v447 = vunpack.c.l.b16 %v22
  %v448 = vunpack.c.h.b16 %v22
  %v449 = vunpack.c.l.b16 %v23
  %v450 = vunpack.c.h.b16 %v23
  %v451 = vunpack.c.l.b16 %v24
  %v452 = vunpack.c.h.b16 %v24
  %v453 = vunpack.c.l.b16 %v25
  %v454 = vunpack.c.h.b16 %v25
  %v455 = vunpack.c.l.b16 %v26
  %v456 = vunpack.c.h.b16 %v26
  %v457 = vunpack.c.l.b16 %v27
  %v458 = vunpack.c.h.b16 %v27
  %v459 = vunpack.c.l.b16 %v28
  %v460 = vunpack.c.h.b16 %v28
  %v461 = vunpack.c.l.b16 %v29
  %v462 = vunpack.c.h.b16 %v29
  %v463 = vunpack.c.l.b16 %v30
  %v464 = vunpack.c.h.b16 %v30
  %v465 = vunpack.c.l.b16 %v31
  %v466 = vunpack.c.h.b16 %v31
  %v467 = vunpack.c.l.b16 %v32
  %v468 = vunpack.c.h.b16 %v32
  %v469 = vunpack.c.l.b16 %v33
  %v470 = vunpack.c.h.b16 %v33
  %v471 = vunpack.c.l.b16 %v34
  %v472 = vunpack.c.h.b16 %v34
  %v473 = vunpack.c.l.b16 %v35
  %v474 = vunpack.c.h.b16 %v35
  %v475 = vunpack.c.l.b16 %v36
  %v476 = vunpack.c.h.b16 %v36
  %v477 = vunpack.c.l.b16 %v37
  %v478 = vunpack.c.h.b16 %v37
  %v479 = vunpack.c.l.b16 %v38
  %v480 = vunpack.c.h.b16 %v38
  %v481 = vunpack.c.l.b16 %v39
  %v482 = vunpack.c.h.b16 %v39
  %v483 = vunpack.c.l.b16 %v40
  %v484 = vunpack.c.h.b16 %v40
  %v485 = vunpack.c.l.b16 %v41
  %v486 = vunpack.c.h.b16 %v41
  %v487 = vunpack.c.l.b16 %v42
  %v488 = vunpack.c.h.b16 %v42
  %v489 = vunpack.c.l.b16 %v43
  %v490 = vunpack.c.h.b16 %v43
  %v491 = vunpack.c.l.b16 %v44
  %v492 = vunpack.c.h.b16 %v44
  %v493 = vunpack.c.l.b16 %v45
  %v494 = vunpack.c.h.b16 %v45
  %v495 = vunpack.c.l.b16 %v46
  %v496 = vunpack.c.h.b16 %v46
  %v497 = vunpack.c.l.b16 %v47
  %v498 = vunpack.c.h.b16 %v47
  %v499 = vunpack.c.l.b16 %v48
  %v500 = vunpack.c.h.b16 %v48
  %v501 = vunpack.c.l.b16 %v49
  %v502 = vunpack.c.h.b16 %v49
  %v503 = vunpack.c.l.b16 %v50
  %v504 = vunpack.c.h.b16 %v50
  %v505 = vunpack.c.l.b16 %v51
  %v506 = vunpack.c.h.b16 %v51
  %v507 = vunpack.c.l.b16 %v52
  %v508 = vunpack.c.h.b16 %v52
  %v509 = vunpack.c.l.b16 %v53
  %v510 = vunpack.c.h.b16 %v53
  %v511 = vunpack.c.l.b16 %v54
  %v512 = vunpack.c.h.b16 %v54
  %v513 = vunpack.c.l.b16 %v55
  %v514 = vunpack.c.h.b16 %v55
  %v515 = vunpack.c.l.b16 %v56
  %v516 = vunpack.c.h.b16 %v56
  %v517 = vunpack.c.l.b16 %v57
  %v518 = vunpack.c.h.b16 %v57
  %v519 = vunpack.c.l.b16 %v58
  %v520 = vunpack.c.h.b16 %v58
  %v521 = vunpack.c.l.b16 %v59
  %v522 = vunpack.c.h.b16 %v59
  %v523 = vunpack.c.l.b16 %v60
  %v524 = vunpack.c.h.b16 %v60
  %v525 = vunpack.c.l.b16 %v61
  %v526 = vunpack.c.h.b16 %v61
  %v527 = vunpack.c.l.b16 %v62
  %v528 = vunpack.c.h.b16 %v62
  %v529 = vunpack.c.l.b16 %v63
  %v530 = vunpack.c.h.b16 %v63
  %v531 = vunpack.c.l.b16 %v64
  %v532 = vunpack.c.h.b16 %v64
  %v533 = vunpack.c.l.b16 %v65
  %v534 = vunpack.c.h.b16 %v65
  %v535 = vunpack.c.l.b16 %v66
  %v536 = vunpack.c.h.b16 %v66
  %v537 = vunpack.c.l.b16 %v67
  %v538 = vunpack.c.h.b16 %v67
  %v539 = vunpack.c.l.b16 %v68
  %v540 = vunpack.c.h.b16 %v68
  %v541 = vunpack.c.l.b16 %v69
  %v542 = vunpack.c.h.b16 %v69
  %v543 = vunpack.c.l.b16 %v70
  %v544 = vunpack.c.h.b16 %v70
  %v545 = vunpack.c.l.b16 %v71
  %v546 = vunpack.c.h.b16 %v71
  %v547 = vunpack.c.l.b16 %v72
  %v548 = vunpack.c.h.b16 %v72
  %v549 = vunpack.c.l.b16 %v73
  %v550 = vunpack.c.h.b16 %v73
  %v551 = vunpack.c.l.b16 %v74
  %v552 = vunpack.c.h.b16 %v74
  %v553 = vunpack.c.l.b16 %v75
  %v554 = vunpack.c.h.b16 %v75
  %v555 = vunpack.c.l.b16 %v76
  %v556 = vunpack.c.h.b16 %v76
  %v557 = vunpack.c.l.b16 %v77
  %v558 = vunpack.c.h.b16 %v77
  %v559 = vunpack.c.l.b16 %v78
  %v560 = vunpack.c.h.b16 %v78
  %v561 = vunpack.c.l.b16 %v79
  %v562 = vunpack.c.h.b16 %v79
  %v563 = vunpack.c.l.b16 %v80
  %v564 = vunpack.c.h.b16 %v80
  %v565 = vunpack.c.l.b16 %v81
  %v566 = vunpack.c.h.b16 %v81
  %v567 = vunpack.c.l.b16 %v82
  %v568 = vunpack.c.h.b16 %v82
  %v569 = vunpack.c.l.b16 %v83
  %v570 = vunpack.c.h.b16 %v83
  %v571 = vunpack.c.l.b16 %v84
  %v572 = vunpack.c.h.b16 %v84
  %v573 = vunpack.c.l.b16 %v85
  %v574 = vunpack.c.h.b16 %v85
  %v575 = vunpack.c.l.b16 %v86
  %v576 = vunpack.c.h.b16 %v86
  %v577 = vunpack.c.l.b16 %v87
  %v578 = vunpack.c.h.b16 %v87
  %v579 = vunpack.c.l.b16 %v88
  %v580 = vunpack.c.h.b16 %v88
  %v581 = vunpack.c.l.b16 %v89
  %v582 = vunpack.c.h.b16 %v89
  %v583 = vunpack.c.l.b16 %v90
  %v584 = vunpack.c.h.b16 %v90
  %v585 = vunpack.c.l.b16 %v91
  %v586 = vunpack.c.h.b16 %v91
  %v587 = vunpack.c.l.b16 %v92
  %v588 = vunpack.c.h.b16 %v92
  %v589 = vunpack.c.l.b16 %v93
  %v590 = vunpack.c.h.b16 %v93
  %v591 = vpack.c.b16 %v439, %v431
  %v592 = vpack.c.b16 %v440, %v432
  %v593 = vpack.c.b16 %v441, %v433
  %v594 = vpack.c.b16 %v442, %v434
  %v595 = vpack.c.b16 %v443, %v435
  %v596 = vpack.c.b16 %v444, %v436
  %v597 = vpack.c.b16 %v445, %v437
  %v598 = vpack.c.b16 %v446, %v438
  %v599 = vpack.c.b16 %v455, %v447
  %v600 = vpack.c.b16 %v456, %v448
  %v601 = vpack.c.b16 %v457, %v449
  %v602 = vpack.c.b16 %v458, %v450
  %v603 = vpack.c.b16 %v459, %v451
  %v604 = vpack.c.b16 %v460, %v452
  %v605 = vpack.c.b16 %v461, %v453
  %v606 = vpack.c.b16 %v462, %v454
  %v607 = vpack.c.b16 %v471, %v463
  %v608 = vpack.c.b16 %v472, %v464
  %v609 = vpack.c.b16 %v473, %v465
  %v610 = vpack.c.b16 %v474, %v466
  %v611 = vpack.c.b16 %v475, %v467
  %v612 = vpack.c.b16 %v476, %v468
  %v613 = vpack.c.b16 %v477, %v469
  %v614 = vpack.c.b16 %v478, %v470
  %v615 = vpack.c.b16 %v487, %v479
  %v616 = vpack.c.b16 %v488, %v480
  %v617 = vpack.c.b16 %v489, %v481
  %v618 = vpack.c.b16 %v490, %v482
  %v619 = vpack.c.b16 %v491, %v483
  %v620 = vpack.c.b16 %v492, %v484
  %v621 = vpack.c.b16 %v493, %v485
  %v622 = vpack.c.b16 %v494, %v486
  %v623 = vpack.c.b16 %v503, %v495
  %v624 = vpack.c.b16 %v504, %v496
  %v625 = vpack.c.b16 %v505, %v497
  %v626 = vpack.c.b16 %v506, %v498
  %v627 = vpack.c.b16 %v507, %v499
  %v628 = vpack.c.b16 %v508, %v500
  %v629 = vpack.c.b16 %v509, %v501
  %v630 = vpack.c.b16 %v510, %v502
  %v631 = vpack.c.b16 %v519, %v511
  %v632 = vpack.c.b16 %v520, %v512
  %v633 = vpack.c.b16 %v521, %v513
  %v634 = vpack.c.b16 %v522, %v514
  %v635 = vpack.c.b16 %v523, %v515
  %v636 = vpack.c.b16 %v524, %v516
  %v637 = vpack.c.b16 %v525, %v517
  %v638 = vpack.c.b16 %v526, %v518
  %v639 = vpack.c.b16 %v535, %v527
  %v640 = vpack.c.b16 %v536, %v528
  %v641 = vpack.c.b16 %v537, %v529
  %v642 = vpack.c.b16 %v538, %v530
  %v643 = vpack.c.b16 %v539, %v531
  %v644 = vpack.c.b16 %v540, %v532
  %v645 = vpack.c.b16 %v541, %v533
  %v646 = vpack.c.b16 %v542, %v534
  %v647 = vpack.c.b16 %v551, %v543
  %v648 = vpack.c.b16 %v552, %v544
  %v649 = vpack.c.b16 %v553, %v545
  %v650 = vpack.c.b16 %v554, %v546
  %v651 = vpack.c.b16 %v555, %v547
  %v652 = vpack.c.b16 %v556, %v548
  %v653 = vpack.c.b16 %v557, %v549
  %v654 = vpack.c.b16 %v558, %v550
  %v655 = vpack.c.b16 %v567, %v559
  %v656 = vpack.c.b16 %v568, %v560
  %v657 = vpack.c.b16 %v569, %v561
  %v658 = vpack.c.b16 %v570, %v562
  %v659 = vpack.c.b16 %v571, %v563
  %v660 = vpack.c.b16 %v572, %v564
  %v661 = vpack.c.b16 %v573, %v565
  %v662 = vpack.c.b16 %v574, %v566
  %v663 = vpack.c.b16 %v583, %v575
  %v664 = vpack.c.b16 %v584, %v576
  %v665 = vpack.c.b16 %v585, %v577
  %v666 = vpack.c.b16 %v586, %v578
  %v667 = vpack.c.b16 %v587, %v579
  %v668 = vpack.c.b16 %v588, %v580
  %v669 = vpack.c.b16 %v589, %v581
  %v670 = vpack.c.b16 %v590, %v582
  %v879 = vunpack.c.l.b16 %v223
  %v880 = vunpack.c.h.b16 %v223
  %v881 = vunpack.c.l.b16 %v224
  %v882 = vunpack.c.h.b16 %v224
  %v883 = vunpack.c.l.b16 %v225
  %v884 = vunpack.c.h.b16 %v225
  %v885 = vunpack.c.l.b16 %v226
  %v886 = vunpack.c.h.b16 %v226
  %v887 = vunpack.c.l.b16 %v227
  %v888 = vunpack.c.h.b16 %v227
  %v889 = vunpack.c.l.b16 %v228
  %v890 = vunpack.c.h.b16 %v228
  %v891 = vunpack.c.l.b16 %v229
  %v892 = vunpack.c.h.b16 %v229
  %v893 = vunpack.c.l.b16 %v230
  %v894 = vunpack.c.h.b16 %v230
  %v895 = vunpack.c.l.b16 %v231
  %v896 = vunpack.c.h.b16 %v231
  %v897 = vunpack.c.l.b16 %v232
  %v898 = vunpack.c.h.b16 %v232
  %v899 = vunpack.c.l.b16 %v233
  %v900 = vunpack.c.h.b16 %v233
  %v901 = vunpack.c.l.b16 %v234
  %v902 = vunpack.c.h.b16 %v234
  %v903 = vunpack.c.l.b16 %v235
  %v904 = vunpack.c.h.b16 %v235
  %v905 = vunpack.c.l.b16 %v236
  %v906 = vunpack.c.h.b16 %v236
  %v907 = vunpack.c.l.b16 %v237
  %v908 = vunpack.c.h.b16 %v237
  %v909 = vunpack.c.l.b16 %v238
  %v910 = vunpack.c.h.b16 %v238
  %v911 = vunpack.c.l.b16 %v239
  %v912 = vunpack.c.h.b16 %v239
  %v913 = vunpack.c.l.b16 %v240
  %v914 = vunpack.c.h.b16 %v240
  %v915 = vunpack.c.l.b16 %v241
  %v916 = vunpack.c.h.b16 %v241
  %v917 = vunpack.c.l.b16 %v242
  %v918 = vunpack.c.h.b16 %v242
  %v919 = vunpack.c.l.b16 %v243
  %v920 = vunpack.c.h.b16 %v243
  %v921 = vunpack.c.l.b16 %v244
  %v922 = vunpack.c.h.b16 %v244
  %v923 = vunpack.c.l.b16 %v245
  %v924 = vunpack.c.h.b16 %v245
  %v925 = vunpack.c.l.b16 %v246
  %v926 = vunpack.c.h.b16 %v246
  %v927 = vunpack.c.l.b16 %v247
  %v928 = vunpack.c.h.b16 %v247
  %v929 = vunpack.c.l.b16 %v248
  %v930 = vunpack.c.h.b16 %v248
  %v931 = vunpack.c.l.b16 %v249
  %v932 = vunpack.c.h.b16 %v249
  %v933 = vunpack.c.l.b16 %v250
  %v934 = vunpack.c.h.b16 %v250
  %v935 = vunpack.c.l.b16 %v251
  %v936 = vunpack.c.h.b16 %v251
  %v937 = vunpack.c.l.b16 %v252
  %v938 = vunpack.c.h.b16 %v252
  %v939 = vunpack.c.l.b16 %v253
  %v940 = vunpack.c.h.b16 %v253
  %v941 = vunpack.c.l.b16 %v254
  %v942 = vunpack.c.h.b16 %v254
  %v943 = vunpack.c.l.b16 %v255
  %v944 = vunpack.c.h.b16 %v255
  %v945 = vunpack.c.l.b16 %v256
  %v946 = vunpack.c.h.b16 %v256
  %v947 = vunpack.c.l.b16 %v257
  %v948 = vunpack.c.h.b16 %v257
  %v949 = vunpack.c.l.b16 %v258
  %v950 = vunpack.c.h.b16 %v258
  %v951 = vunpack.c.l.b16 %v259
  %v952 = vunpack.c.h.b16 %v259
  %v953 = vunpack.c.l.b16 %v260
  %v954 = vunpack.c.h.b16 %v260
  %v955 = vunpack.c.l.b16 %v261
  %v956 = vunpack.c.h.b16 %v261
  %v957 = vunpack.c.l.b16 %v262
  %v958 = vunpack.c.h.b16 %v262
  %v959 = vunpack.c.l.b16 %v263
  %v960 = vunpack.c.h.b16 %v263
  %v961 = vunpack.c.l.b16 %v264
  %v962 = vunpack.c.h.b16 %v264
  %v963 = vunpack.c.l.b16 %v265
  %v964 = vunpack.c.h.b16 %v265
  %v965 = vunpack.c.l.b16 %v266
  %v966 = vunpack.c.h.b16 %v266
  %v967 = vunpack.c.l.b16 %v267
  %v968 = vunpack.c.h.b16 %v267
  %v969 = vunpack.c.l.b16 %v268
  %v970 = vunpack.c.h.b16 %v268
  %v971 = vunpack.c.l.b16 %v269
  %v972 = vunpack.c.h.b16 %v269
  %v973 = vunpack.c.l.b16 %v270
  %v974 = vunpack.c.h.b16 %v270
  %v975 = vunpack.c.l.b16 %v271
  %v976 = vunpack.c.h.b16 %v271
  %v977 = vunpack.c.l.b16 %v272
  %v978 = vunpack.c.h.b16 %v272
  %v979 = vunpack.c.l.b16 %v273
  %v980 = vunpack.c.h.b16 %v273
  %v981 = vunpack.c.l.b16 %v274
  %v982 = vunpack.c.h.b16 %v274
  %v983 = vunpack.c.l.b16 %v275
  %v984 = vunpack.c.h.b16 %v275
  %v985 = vunpack.c.l.b16 %v276
  %v986 = vunpack.c.h.b16 %v276
  %v987 = vunpack.c.l.b16 %v277
  %v988 = vunpack.c.h.b16 %v277
  %v989 = vunpack.c.l.b16 %v278
  %v990 = vunpack.c.h.b16 %v278
  %v991 = vunpack.c.l.b16 %v279
  %v992 = vunpack.c.h.b16 %v279
  %v993 = vunpack.c.l.b16 %v280
  %v994 = vunpack.c.h.b16 %v280
  %v995 = vunpack.c.l.b16 %v281
  %v996 = vunpack.c.h.b16 %v281
  %v997 = vunpack.c.l.b16 %v282
  %v998 = vunpack.c.h.b16 %v282
  %v999 = vunpack.c.l.b16 %v283
  %v1000 = vunpack.c.h.b16 %v283
  %v1001 = vunpack.c.l.b16 %v284
  %v1002 = vunpack.c.h.b16 %v284
  %v1003 = vunpack.c.l.b16 %v285
  %v1004 = vunpack.c.h.b16 %v285
  %v1005 = vunpack.c.l.b16 %v286
  %v1006 = vunpack.c.h.b16 %v286
  %v1007 = vunpack.c.l.b16 %v287
  %v1008 = vunpack.c.h.b16 %v287
  %v1009 = vunpack.c.l.b16 %v288
  %v1010 = vunpack.c.h.b16 %v288
  %v1011 = vunpack.c.l.b16 %v289
  %v1012 = vunpack.c.h.b16 %v289
  %v1013 = vunpack.c.l.b16 %v290
  %v1014 = vunpack.c.h.b16 %v290
  %v1015 = vunpack.c.l.b16 %v291
  %v1016 = vunpack.c.h.b16 %v291
  %v1017 = vunpack.c.l.b16 %v292
  %v1018 = vunpack.c.h.b16 %v292
  %v1019 = vunpack.c.l.b16 %v293
  %v1020 = vunpack.c.h.b16 %v293
  %v1021 = vunpack.c.l.b16 %v294
  %v1022 = vunpack.c.h.b16 %v294
  %v1023 = vunpack.c.l.b16 %v295
  %v1024 = vunpack.c.h.b16 %v295
  %v1025 = vunpack.c.l.b16 %v296
  %v1026 = vunpack.c.h.b16 %v296
  %v1027 = vunpack.c.l.b16 %v297
  %v1028 = vunpack.c.h.b16 %v297
  %v1029 = vunpack.c.l.b16 %v298
  %v1030 = vunpack.c.h.b16 %v298
  %v1031 = vunpack.c.l.b16 %v299
  %v1032 = vunpack.c.h.b16 %v299
  %v1033 = vunpack.c.l.b16 %v300
  %v1034 = vunpack.c.h.b16 %v300
  %v1035 = vunpack.c.l.b16 %v301
  %v1036 = vunpack.c.h.b16 %v301
  %v1037 = vunpack.c.l.b16 %v302
  %v1038 = vunpack.c.h.b16 %v302
  %v1039 = vunpack.c.l.b16 %v303
  %v1040 = vunpack.c.h.b16 %v303
  %v1041 = vunpack.c.l.b16 %v304
  %v1042 = vunpack.c.h.b16 %v304
  %v1043 = vunpack.c.l.b16 %v305
  %v1044 = vunpack.c.h.b16 %v305
  %v1045 = vunpack.c.l.b16 %v306
  %v1046 = vunpack.c.h.b16 %v306
  %v1047 = vunpack.c.l.b16 %v307
  %v1048 = vunpack.c.h.b16 %v307
  %v1049 = vunpack.c.l.b16 %v308
  %v1050 = vunpack.c.h.b16 %v308
  %v1051 = vunpack.c.l.b16 %v309
  %v1052 = vunpack.c.h.b16 %v309
  %v1053 = vunpack.c.l.b16 %v310
  %v1054 = vunpack.c.h.b16 %v310
  %v1055 = vunpack.c.l.b16 %v311
  %v1056 = vunpack.c.h.b16 %v311
  %v1057 = vunpack.c.l.b16 %v312
  %v1058 = vunpack.c.h.b16 %v312
  %v1059 = vunpack.c.l.b16 %v313
  %v1060 = vunpack.c.h.b16 %v313
  %v1061 = vunpack.c.l.b16 %v314
  %v1062 = vunpack.c.h.b16 %v314
  %v1063 = vunpack.c.l.b16 %v315
  %v1064 = vunpack.c.h.b16 %v315
  %v1065 = vunpack.c.l.b16 %v316
  %v1066 = vunpack.c.h.b16 %v316
  %v1067 = vunpack.c.l.b16 %v317
  %v1068 = vunpack.c.h.b16 %v317
  %v1069 = vunpack.c.l.b16 %v318
  %v1070 = vunpack.c.h.b16 %v318
  %v1071 = vunpack.c.l.b16 %v319
  %v1072 = vunpack.c.h.b16 %v319
  %v1073 = vunpack.c.l.b16 %v320
  %v1074 = vunpack.c.h.b16 %v320
  %v1075 = vunpack.c.l.b16 %v321
  %v1076 = vunpack.c.h.b16 %v321
  %v1077 = vunpack.c.l.b16 %v322
  %v1078 = vunpack.c.h.b16 %v322
  %v1079 = vunpack.c.l.b16 %v323
  %v1080 = vunpack.c.h.b16 %v323
  %v1081 = vunpack.c.l.b16 %v324
  %v1082 = vunpack.c.h.b16 %v324
  %v1083 = vunpack.c.l.b16 %v325
  %v1084 = vunpack.c.h.b16 %v325
  %v1085 = vunpack.c.l.b16 %v326
  %v1086 = vunpack.c.h.b16 %v326
  %v1087 = vunpack.c.l.b16 %v327
  %v1088 = vunpack.c.h.b16 %v327
  %v1089 = vunpack.c.l.b16 %v328
  %v1090 = vunpack.c.h.b16 %v328
  %v1091 = vunpack.c.l.b16 %v329
  %v1092 = vunpack.c.h.b16 %v329
  %v1093 = vunpack.c.l.b16 %v330
  %v1094 = vunpack.c.h.b16 %v330
  %v1095 = vunpack.c.l.b16 %v331
  %v1096 = vunpack.c.h.b16 %v331
  %v1097 = vunpack.c.l.b16 %v332
  %v1098 = vunpack.c.h.b16 %v332
  %v1099 = vunpack.c.l.b16 %v333
  %v1100 = vunpack.c.h.b16 %v333
  %v1101 = vunpack.c.l.b16 %v334
  %v1102 = vunpack.c.h.b16 %v334
  %v1103 = vunpack.c.l.b16 %v335
  %v1104 = vunpack.c.h.b16 %v335
  %v1105 = vunpack.c.l.b16 %v336
  %v1106 = vunpack.c.h.b16 %v336
  %v1107 = vunpack.c.l.b16 %v337
  %v1108 = vunpack.c.h.b16 %v337
  %v1109 = vunpack.c.l.b16 %v338
  %v1110 = vunpack.c.h.b16 %v338
  %v1111 = vunpack.c.l.b16 %v339
  %v1112 = vunpack.c.h.b16 %v339
  %v1113 = vunpack.c.l.b16 %v340
  %v1114 = vunpack.c.h.b16 %v340
  %v1115 = vunpack.c.l.b16 %v341
  %v1116 = vunpack.c.h.b16 %v341
  %v1117 = vunpack.c.l.b16 %v342
  %v1118 = vunpack.c.h.b16 %v342
  %v1119 = vunpack.c.l.b16 %v343
  %v1120 = vunpack.c.h.b16 %v343
  %v1121 = vunpack.c.l.b16 %v344
  %v1122 = vunpack.c.h.b16 %v344
  %v1123 = vunpack.c.l.b16 %v345
  %v1124 = vunpack.c.h.b16 %v345
  %v1125 = vunpack.c.l.b16 %v346
  %v1126 = vunpack.c.h.b16 %v346
  %v1127 = vunpack.c.l.b16 %v347
  %v1128 = vunpack.c.h.b16 %v347
  %v1129 = vunpack.c.l.b16 %v348
  %v1130 = vunpack.c.h.b16 %v348
  %v1131 = vunpack.c.l.b16 %v349
  %v1132 = vunpack.c.h.b16 %v349
  %v1133 = vunpack.c.l.b16 %v350
  %v1134 = vunpack.c.h.b16 %v350
  %v1135 = vpack.c.b16 %v881, %v879
  %v1136 = vpack.c.b16 %v882, %v880
  %v1137 = vpack.c.b16 %v885, %v883
  %v1138 = vpack.c.b16 %v886, %v884
  %v1139 = vpack.c.b16 %v889, %v887
  %v1140 = vpack.c.b16 %v890, %v888
  %v1141 = vpack.c.b16 %v893, %v891
  %v1142 = vpack.c.b16 %v894, %v892
  %v1143 = vpack.c.b16 %v897, %v895
  %v1144 = vpack.c.b16 %v898, %v896
  %v1145 = vpack.c.b16 %v901, %v899
  %v1146 = vpack.c.b16 %v902, %v900
  %v1147 = vpack.c.b16 %v905, %v903
  %v1148 = vpack.c.b16 %v906, %v904
  %v1149 = vpack.c.b16 %v909, %v907
  %v1150 = vpack.c.b16 %v910, %v908
  %v1151 = vpack.c.b16 %v913, %v911
  %v1152 = vpack.c.b16 %v914, %v912
  %v1153 = vpack.c.b16 %v917, %v915
  %v1154 = vpack.c.b16 %v918, %v916
  %v1155 = vpack.c.b16 %v921, %v919
  %v1156 = vpack.c.b16 %v922, %v920
  %v1157 = vpack.c.b16 %v925, %v923
  %v1158 = vpack.c.b16 %v926, %v924
  %v1159 = vpack.c.b16 %v929, %v927
  %v1160 = vpack.c.b16 %v930, %v928
  %v1161 = vpack.c.b16 %v933, %v931
  %v1162 = vpack.c.b16 %v934, %v932
  %v1163 = vpack.c.b16 %v937, %v935
  %v1164 = vpack.c.b16 %v938, %v936
  %v1165 = vpack.c.b16 %v941, %v939
  %v1166 = vpack.c.b16 %v942, %v940
  %v1167 = vpack.c.b16 %v945, %v943
  %v1168 = vpack.c.b16 %v946, %v944
  %v1169 = vpack.c.b16 %v949, %v947
  %v1170 = vpack.c.b16 %v950, %v948
  %v1171 = vpack.c.b16 %v953, %v951
  %v1172 = vpack.c.b16 %v954, %v952
  %v1173 = vpack.c.b16 %v957, %v955
  %v1174 = vpack.c.b16 %v958, %v956
  %v1175 = vpack.c.b16 %v961, %v959
  %v1176 = vpack.c.b16 %v962, %v960
  %v1177 = vpack.c.b16 %v965, %v963
  %v1178 = vpack.c.b16 %v966, %v964
  %v1179 = vpack.c.b16 %v969, %v967
  %v1180 = vpack.c.b16 %v970, %v968
  %v1181 = vpack.c.b16 %v973, %v971
  %v1182 = vpack.c.b16 %v974, %v972
  %v1183 = vpack.c.b16 %v977, %v975
  %v1184 = vpack.c.b16 %v978, %v976
  %v1185 = vpack.c.b16 %v981, %v979
  %v1186 = vpack.c.b16 %v982, %v980
  %v1187 = vpack.c.b16 %v985, %v983
  %v1188 = vpack.c.b16 %v986, %v984
  %v1189 = vpack.c.b16 %v989, %v987
  %v1190 = vpack.c.b16 %v990, %v988
  %v1191 = vpack.c.b16 %v993, %v991
  %v1192 = vpack.c.b16 %v994, %v992
  %v1193 = vpack.c.b16 %v997, %v995
  %v1194 = vpack.c.b16 %v998, %v996
  %v1195 = vpack.c.b16 %v1001, %v999
  %v1196 = vpack.c.b16 %v1002, %v1000
  %v1197 = vpack.c.b16 %v1005, %v1003
  %v1198 = vpack.c.b16 %v1006, %v1004
  %v1199 = vpack.c.b16 %v1009, %v1007
  %v1200 = vpack.c.b16 %v1010, %v1008
  %v1201 = vpack.c.b16 %v1013, %v1011
  %v1202 = vpack.c.b16 %v1014, %v1012
  %v1203 = vpack.c.b16 %v1017, %v1015
  %v1204 = vpack.c.b16 %v1018, %v1016
  %v1205 = vpack.c.b16 %v1021, %v1019
  %v1206 = vpack.c.b16 %v1022, %v1020
  %v1207 = vpack.c.b16 %v1025, %v1023
  %v1208 = vpack.c.b16 %v1026, %v1024
  %v1209 = vpack.c.b16 %v1029, %v1027
  %v1210 = vpack.c.b16 %v1030, %v1028
  %v1211 = vpack.c.b16 %v1033, %v1031
  %v1212 = vpack.c.b16 %v1034, %v1032
  %v1213 = vpack.c.b16 %v1037, %v1035
  %v1214 = vpack.c.b16 %v1038, %v1036
  %v1215 = vpack.c.b16 %v1041, %v1039
  %v1216 = vpack.c.b16 %v1042, %v1040
  %v1217 = vpack.c.b16 %v1045, %v1043
  %v1218 = vpack.c.b16 %v1046, %v1044
  %v1219 = vpack.c.b16 %v1049, %v1047
  %v1220 = vpack.c.b16 %v1050, %v1048
  %v1221 = vpack.c.b16 %v1053, %v1051
  %v1222 = vpack.c.b16 %v1054, %v1052
  %v1223 = vpack.c.b16 %v1057, %v1055
  %v1224 = vpack.c.b16 %v1058, %v1056
  %v1225 = vpack.c.b16 %v1061, %v1059
  %v1226 = vpack.c.b16 %v1062, %v1060
  %v1227 = vpack.c.b16 %v1065, %v1063
  %v1228 = vpack.c.b16 %v1066, %v1064
  %v1229 = vpack.c.b16 %v1069, %v1067
  %v1230 = vpack.c.b16 %v1070, %v1068
  %v1231 = vpack.c.b16 %v1073, %v1071
  %v1232 = vpack.c.b16 %v1074, %v1072
  %v1233 = vpack.c.b16 %v1077, %v1075
  %v1234 = vpack.c.b16 %v1078, %v1076
  %v1235 = vpack.c.b16 %v1081, %v1079
  %v1236 = vpack.c.b16 %v1082, %v1080
  %v1237 = vpack.c.b16 %v1085, %v1083
  %v1238 = vpack.c.b16 %v1086, %v1084
  %v1239 = vpack.c.b16 %v1089, %v1087
  %v1240 = vpack.c.b16 %v1090, %v1088
  %v1241 = vpack.c.b16 %v1093, %v1091
  %v1242 = vpack.c.b16 %v1094, %v1092
  %v1243 = vpack.c.b16 %v1097, %v1095
  %v1244 = vpack.c.b16 %v1098, %v1096
  %v1245 = vpack.c.b16 %v1101, %v1099
  %v1246 = vpack.c.b16 %v1102, %v1100
  %v1247 = vpack.c.b16 %v1105, %v1103
  %v1248 = vpack.c.b16 %v1106, %v1104
  %v1249 = vpack.c.b16 %v1109, %v1107
  %v1250 = vpack.c.b16 %v1110, %v1108
  %v1251 = vpack.c.b16 %v1113, %v1111
  %v1252 = vpack.c.b16 %v1114, %v1112
  %v1253 = vpack.c.b16 %v1117, %v1115
  %v1254 = vpack.c.b16 %v1118, %v1116
  %v1255 = vpack.c.b16 %v1121, %v1119
  %v1256 = vpack.c.b16 %v1122, %v1120
  %v1257 = vpack.c.b16 %v1125, %v1123
  %v1258 = vpack.c.b16 %v1126, %v1124
  %v1259 = vpack.c.b16 %v1129, %v1127
  %v1260 = vpack.c.b16 %v1130, %v1128
  %v1261 = vpack.c.b16 %v1133, %v1131
  %v1262 = vpack.c.b16 %v1134, %v1132
  %1391 = vmatprep.subr.bf16.mxu0 %v1136
  %1392 = vmatpush1.bf16.msra.mxu0 %v1135
  %1393 = vmatprep.subr.bf16.mxu0 %v1138
  %1394 = vmatpush1.bf16.msra.mxu0 %v1137
  %1395 = vmatprep.subr.bf16.mxu0 %v1140
  %1396 = vmatpush1.bf16.msra.mxu0 %v1139
  %1397 = vmatprep.subr.bf16.mxu0 %v1142
  %1398 = vmatpush1.bf16.msra.mxu0 %v1141
  %1399 = vmatprep.subr.bf16.mxu0 %v1144
  %1400 = vmatpush1.bf16.msra.mxu0 %v1143
  %1401 = vmatprep.subr.bf16.mxu0 %v1146
  %1402 = vmatpush1.bf16.msra.mxu0 %v1145
  %1403 = vmatprep.subr.bf16.mxu0 %v1148
  %1404 = vmatpush1.bf16.msra.mxu0 %v1147
  %1405 = vmatprep.subr.bf16.mxu0 %v1150
  %1406 = vmatpush1.bf16.msra.mxu0 %v1149
  %1407 = vmatprep.subr.bf16.mxu0 %v1152
  %1408 = vmatpush1.bf16.msra.mxu0 %v1151
  %1409 = vmatprep.subr.bf16.mxu0 %v1154
  %1410 = vmatpush1.bf16.msra.mxu0 %v1153
  %1411 = vmatprep.subr.bf16.mxu0 %v1156
  %1412 = vmatpush1.bf16.msra.mxu0 %v1155
  %1413 = vmatprep.subr.bf16.mxu0 %v1158
  %1414 = vmatpush1.bf16.msra.mxu0 %v1157
  %1415 = vmatprep.subr.bf16.mxu0 %v1160
  %1416 = vmatpush1.bf16.msra.mxu0 %v1159
  %1417 = vmatprep.subr.bf16.mxu0 %v1162
  %1418 = vmatpush1.bf16.msra.mxu0 %v1161
  %1419 = vmatprep.subr.bf16.mxu0 %v1164
  %1420 = vmatpush1.bf16.msra.mxu0 %v1163
  %1421 = vmatprep.subr.bf16.mxu0 %v1166
  %1422 = vmatpush1.bf16.msra.mxu0 %v1165
  %1423 = vmatprep.mubr.bf16.mxu0 %v592
  %1424 = vmatmul.mubr.bf16.gmra.mrb[0].mxu0 %v591
  %v1425 = vpop.f32.mrb[0].mxu0
  %v1426 = vadd.f32 0.0, %v1425
  %v1427 = vpop.f32.mrb[0].mxu0
  %v1428 = vadd.f32 0.0, %v1427
  %v1429 = vpop.f32.mrb[0].mxu0
  %v1430 = vadd.f32 0.0, %v1429
  %v1431 = vpop.f32.mrb[0].mxu0
  %v1432 = vadd.f32 0.0, %v1431
  %1433 = vmatprep.mubr.bf16.mxu0 %v600
  %1434 = vmatmul.mubr.bf16.gmra.mrb[0].mxu0 %v599
  %v1435 = vpop.f32.mrb[0].mxu0
  %v1436 = vadd.f32 0.0, %v1435
  %v1437 = vpop.f32.mrb[0].mxu0
  %v1438 = vadd.f32 0.0, %v1437
  %v1439 = vpop.f32.mrb[0].mxu0
  %v1440 = vadd.f32 0.0, %v1439
  %v1441 = vpop.f32.mrb[0].mxu0
  %v1442 = vadd.f32 0.0, %v1441
  %1443 = vmatprep.mubr.bf16.mxu0 %v608
  %1444 = vmatmul.mubr.bf16.gmra.mrb[0].mxu0 %v607
  %v1445 = vpop.f32.mrb[0].mxu0
  %v1446 = vadd.f32 0.0, %v1445
  %v1447 = vpop.f32.mrb[0].mxu0
  %v1448 = vadd.f32 0.0, %v1447
  %v1449 = vpop.f32.mrb[0].mxu0
  %v1450 = vadd.f32 0.0, %v1449
  %v1451 = vpop.f32.mrb[0].mxu0
  %v1452 = vadd.f32 0.0, %v1451
  %1453 = vmatprep.mubr.bf16.mxu0 %v616
  %1454 = vmatmul.mubr.bf16.gmra.mrb[0].mxu0 %v615
  %v1455 = vpop.f32.mrb[0].mxu0
  %v1456 = vadd.f32 0.0, %v1455
  %v1457 = vpop.f32.mrb[0].mxu0
  %v1458 = vadd.f32 0.0, %v1457
  %v1459 = vpop.f32.mrb[0].mxu0
  %v1460 = vadd.f32 0.0, %v1459
  %v1461 = vpop.f32.mrb[0].mxu0
  %v1462 = vadd.f32 0.0, %v1461
  %1463 = vmatprep.mubr.bf16.mxu0 %v624
  %1464 = vmatmul.mubr.bf16.gmra.mrb[0].mxu0 %v623
  %v1465 = vpop.f32.mrb[0].mxu0
  %v1466 = vadd.f32 0.0, %v1465
  %v1467 = vpop.f32.mrb[0].mxu0
  %v1468 = vadd.f32 0.0, %v1467
  %v1469 = vpop.f32.mrb[0].mxu0
  %v1470 = vadd.f32 0.0, %v1469
  %v1471 = vpop.f32.mrb[0].mxu0
  %v1472 = vadd.f32 0.0, %v1471
  %1473 = vmatprep.mubr.bf16.mxu0 %v632
  %1474 = vmatmul.mubr.bf16.gmra.mrb[0].mxu0 %v631
  %v1475 = vpop.f32.mrb[0].mxu0
  %v1476 = vadd.f32 0.0, %v1475
  %v1477 = vpop.f32.mrb[0].mxu0
  %v1478 = vadd.f32 0.0, %v1477
  %v1479 = vpop.f32.mrb[0].mxu0
  %v1480 = vadd.f32 0.0, %v1479
  %v1481 = vpop.f32.mrb[0].mxu0
  %v1482 = vadd.f32 0.0, %v1481
  %1483 = vmatprep.mubr.bf16.mxu0 %v640
  %1484 = vmatmul.mubr.bf16.gmra.mrb[0].mxu0 %v639
  %v1485 = vpop.f32.mrb[0].mxu0
  %v1486 = vadd.f32 0.0, %v1485
  %v1487 = vpop.f32.mrb[0].mxu0
  %v1488 = vadd.f32 0.0, %v1487
  %v1489 = vpop.f32.mrb[0].mxu0
  %v1490 = vadd.f32 0.0, %v1489
  %v1491 = vpop.f32.mrb[0].mxu0
  %v1492 = vadd.f32 0.0, %v1491
  %1493 = vmatprep.mubr.bf16.mxu0 %v648
  %1494 = vmatmul.mubr.bf16.gmra.mrb[0].mxu0 %v647
  %v1495 = vpop.f32.mrb[0].mxu0
  %v1496 = vadd.f32 0.0, %v1495
  %v1497 = vpop.f32.mrb[0].mxu0
  %v1498 = vadd.f32 0.0, %v1497
  %v1499 = vpop.f32.mrb[0].mxu0
  %v1500 = vadd.f32 0.0, %v1499
  %v1501 = vpop.f32.mrb[0].mxu0
  %v1502 = vadd.f32 0.0, %v1501
  %1503 = vmatprep.mubr.bf16.mxu0 %v656
  %1504 = vmatmul.mubr.bf16.gmra.mrb[0].mxu0 %v655
  %v1505 = vpop.f32.mrb[0].mxu0
  %v1506 = vadd.f32 0.0, %v1505
  %v1507 = vpop.f32.mrb[0].mxu0
  %v1508 = vadd.f32 0.0, %v1507
  %v1509 = vpop.f32.mrb[0].mxu0
  %v1510 = vadd.f32 0.0, %v1509
  %v1511 = vpop.f32.mrb[0].mxu0
  %v1512 = vadd.f32 0.0, %v1511
  %1513 = vmatprep.mubr.bf16.mxu0 %v664
  %1514 = vmatmul.mubr.bf16.gmra.mrb[0].mxu0 %v663
  %v1515 = vpop.f32.mrb[0].mxu0
  %v1516 = vadd.f32 0.0, %v1515
  %v1517 = vpop.f32.mrb[0].mxu0
  %v1518 = vadd.f32 0.0, %v1517
  %v1519 = vpop.f32.mrb[0].mxu0
  %v1520 = vadd.f32 0.0, %v1519
  %v1521 = vpop.f32.mrb[0].mxu0
  %v1522 = vadd.f32 0.0, %v1521
  %1523 = vdwg.mxu0
  %1524 = vmatprep.subr.bf16.mxu0 %v1168
  %1525 = vmatpush1.bf16.msra.mxu0 %v1167
  %1526 = vmatprep.subr.bf16.mxu0 %v1170
  %1527 = vmatpush1.bf16.msra.mxu0 %v1169
  %1528 = vmatprep.subr.bf16.mxu0 %v1172
  %1529 = vmatpush1.bf16.msra.mxu0 %v1171
  %1530 = vmatprep.subr.bf16.mxu0 %v1174
  %1531 = vmatpush1.bf16.msra.mxu0 %v1173
  %1532 = vmatprep.subr.bf16.mxu0 %v1176
  %1533 = vmatpush1.bf16.msra.mxu0 %v1175
  %1534 = vmatprep.subr.bf16.mxu0 %v1178
  %1535 = vmatpush1.bf16.msra.mxu0 %v1177
  %1536 = vmatprep.subr.bf16.mxu0 %v1180
  %1537 = vmatpush1.bf16.msra.mxu0 %v1179
  %1538 = vmatprep.subr.bf16.mxu0 %v1182
  %1539 = vmatpush1.bf16.msra.mxu0 %v1181
  %1540 = vmatprep.subr.bf16.mxu0 %v1184
  %1541 = vmatpush1.bf16.msra.mxu0 %v1183
  %1542 = vmatprep.subr.bf16.mxu0 %v1186
  %1543 = vmatpush1.bf16.msra.mxu0 %v1185
  %1544 = vmatprep.subr.bf16.mxu0 %v1188
  %1545 = vmatpush1.bf16.msra.mxu0 %v1187
  %1546 = vmatprep.subr.bf16.mxu0 %v1190
  %1547 = vmatpush1.bf16.msra.mxu0 %v1189
  %1548 = vmatprep.subr.bf16.mxu0 %v1192
  %1549 = vmatpush1.bf16.msra.mxu0 %v1191
  %1550 = vmatprep.subr.bf16.mxu0 %v1194
  %1551 = vmatpush1.bf16.msra.mxu0 %v1193
  %1552 = vmatprep.subr.bf16.mxu0 %v1196
  %1553 = vmatpush1.bf16.msra.mxu0 %v1195
  %1554 = vmatprep.subr.bf16.mxu0 %v1198
  %1555 = vmatpush1.bf16.msra.mxu0 %v1197
  %1556 = vmatprep.mubr.bf16.mxu0 %v594
  %1557 = vmatmul.mubr.bf16.gmra.mrb[0].mxu0 %v593
  %v1558 = vpop.f32.mrb[0].mxu0
  %v1559 = vadd.f32 %v1426, %v1558
  %v1560 = vpop.f32.mrb[0].mxu0
  %v1561 = vadd.f32 %v1428, %v1560
  %v1562 = vpop.f32.mrb[0].mxu0
  %v1563 = vadd.f32 %v1430, %v1562
  %v1564 = vpop.f32.mrb[0].mxu0
  %v1565 = vadd.f32 %v1432, %v1564
  %1566 = vmatprep.mubr.bf16.mxu0 %v602
  %1567 = vmatmul.mubr.bf16.gmra.mrb[0].mxu0 %v601
  %v1568 = vpop.f32.mrb[0].mxu0
  %v1569 = vadd.f32 %v1436, %v1568
  %v1570 = vpop.f32.mrb[0].mxu0
  %v1571 = vadd.f32 %v1438, %v1570
  %v1572 = vpop.f32.mrb[0].mxu0
  %v1573 = vadd.f32 %v1440, %v1572
  %v1574 = vpop.f32.mrb[0].mxu0
  %v1575 = vadd.f32 %v1442, %v1574
  %1576 = vmatprep.mubr.bf16.mxu0 %v610
  %1577 = vmatmul.mubr.bf16.gmra.mrb[0].mxu0 %v609
  %v1578 = vpop.f32.mrb[0].mxu0
  %v1579 = vadd.f32 %v1446, %v1578
  %v1580 = vpop.f32.mrb[0].mxu0
  %v1581 = vadd.f32 %v1448, %v1580
  %v1582 = vpop.f32.mrb[0].mxu0
  %v1583 = vadd.f32 %v1450, %v1582
  %v1584 = vpop.f32.mrb[0].mxu0
  %v1585 = vadd.f32 %v1452, %v1584
  %1586 = vmatprep.mubr.bf16.mxu0 %v618
  %1587 = vmatmul.mubr.bf16.gmra.mrb[0].mxu0 %v617
  %v1588 = vpop.f32.mrb[0].mxu0
  %v1589 = vadd.f32 %v1456, %v1588
  %v1590 = vpop.f32.mrb[0].mxu0
  %v1591 = vadd.f32 %v1458, %v1590
  %v1592 = vpop.f32.mrb[0].mxu0
  %v1593 = vadd.f32 %v1460, %v1592
  %v1594 = vpop.f32.mrb[0].mxu0
  %v1595 = vadd.f32 %v1462, %v1594
  %1596 = vmatprep.mubr.bf16.mxu0 %v626
  %1597 = vmatmul.mubr.bf16.gmra.mrb[0].mxu0 %v625
  %v1598 = vpop.f32.mrb[0].mxu0
  %v1599 = vadd.f32 %v1466, %v1598
  %v1600 = vpop.f32.mrb[0].mxu0
  %v1601 = vadd.f32 %v1468, %v1600
  %v1602 = vpop.f32.mrb[0].mxu0
  %v1603 = vadd.f32 %v1470, %v1602
  %v1604 = vpop.f32.mrb[0].mxu0
  %v1605 = vadd.f32 %v1472, %v1604
  %1606 = vmatprep.mubr.bf16.mxu0 %v634
  %1607 = vmatmul.mubr.bf16.gmra.mrb[0].mxu0 %v633
  %v1608 = vpop.f32.mrb[0].mxu0
  %v1609 = vadd.f32 %v1476, %v1608
  %v1610 = vpop.f32.mrb[0].mxu0
  %v1611 = vadd.f32 %v1478, %v1610
  %v1612 = vpop.f32.mrb[0].mxu0
  %v1613 = vadd.f32 %v1480, %v1612
  %v1614 = vpop.f32.mrb[0].mxu0
  %v1615 = vadd.f32 %v1482, %v1614
  %1616 = vmatprep.mubr.bf16.mxu0 %v642
  %1617 = vmatmul.mubr.bf16.gmra.mrb[0].mxu0 %v641
  %v1618 = vpop.f32.mrb[0].mxu0
  %v1619 = vadd.f32 %v1486, %v1618
  %v1620 = vpop.f32.mrb[0].mxu0
  %v1621 = vadd.f32 %v1488, %v1620
  %v1622 = vpop.f32.mrb[0].mxu0
  %v1623 = vadd.f32 %v1490, %v1622
  %v1624 = vpop.f32.mrb[0].mxu0
  %v1625 = vadd.f32 %v1492, %v1624
  %1626 = vmatprep.mubr.bf16.mxu0 %v650
  %1627 = vmatmul.mubr.bf16.gmra.mrb[0].mxu0 %v649
  %v1628 = vpop.f32.mrb[0].mxu0
  %v1629 = vadd.f32 %v1496, %v1628
  %v1630 = vpop.f32.mrb[0].mxu0
  %v1631 = vadd.f32 %v1498, %v1630
  %v1632 = vpop.f32.mrb[0].mxu0
  %v1633 = vadd.f32 %v1500, %v1632
  %v1634 = vpop.f32.mrb[0].mxu0
  %v1635 = vadd.f32 %v1502, %v1634
  %1636 = vmatprep.mubr.bf16.mxu0 %v658
  %1637 = vmatmul.mubr.bf16.gmra.mrb[0].mxu0 %v657
  %v1638 = vpop.f32.mrb[0].mxu0
  %v1639 = vadd.f32 %v1506, %v1638
  %v1640 = vpop.f32.mrb[0].mxu0
  %v1641 = vadd.f32 %v1508, %v1640
  %v1642 = vpop.f32.mrb[0].mxu0
  %v1643 = vadd.f32 %v1510, %v1642
  %v1644 = vpop.f32.mrb[0].mxu0
  %v1645 = vadd.f32 %v1512, %v1644
  %1646 = vmatprep.mubr.bf16.mxu0 %v666
  %1647 = vmatmul.mubr.bf16.gmra.mrb[0].mxu0 %v665
  %v1648 = vpop.f32.mrb[0].mxu0
  %v1649 = vadd.f32 %v1516, %v1648
  %v1650 = vpop.f32.mrb[0].mxu0
  %v1651 = vadd.f32 %v1518, %v1650
  %v1652 = vpop.f32.mrb[0].mxu0
  %v1653 = vadd.f32 %v1520, %v1652
  %v1654 = vpop.f32.mrb[0].mxu0
  %v1655 = vadd.f32 %v1522, %v1654
  %1656 = vdwg.mxu0
  %1657 = vmatprep.subr.bf16.mxu0 %v1200
  %1658 = vmatpush1.bf16.msra.mxu0 %v1199
  %1659 = vmatprep.subr.bf16.mxu0 %v1202
  %1660 = vmatpush1.bf16.msra.mxu0 %v1201
  %1661 = vmatprep.subr.bf16.mxu0 %v1204
  %1662 = vmatpush1.bf16.msra.mxu0 %v1203
  %1663 = vmatprep.subr.bf16.mxu0 %v1206
  %1664 = vmatpush1.bf16.msra.mxu0 %v1205
  %1665 = vmatprep.subr.bf16.mxu0 %v1208
  %1666 = vmatpush1.bf16.msra.mxu0 %v1207
  %1667 = vmatprep.subr.bf16.mxu0 %v1210
  %1668 = vmatpush1.bf16.msra.mxu0 %v1209
  %1669 = vmatprep.subr.bf16.mxu0 %v1212
  %1670 = vmatpush1.bf16.msra.mxu0 %v1211
  %1671 = vmatprep.subr.bf16.mxu0 %v1214
  %1672 = vmatpush1.bf16.msra.mxu0 %v1213
  %1673 = vmatprep.subr.bf16.mxu0 %v1216
  %1674 = vmatpush1.bf16.msra.mxu0 %v1215
  %1675 = vmatprep.subr.bf16.mxu0 %v1218
  %1676 = vmatpush1.bf16.msra.mxu0 %v1217
  %1677 = vmatprep.subr.bf16.mxu0 %v1220
  %1678 = vmatpush1.bf16.msra.mxu0 %v1219
  %1679 = vmatprep.subr.bf16.mxu0 %v1222
  %1680 = vmatpush1.bf16.msra.mxu0 %v1221
  %1681 = vmatprep.subr.bf16.mxu0 %v1224
  %1682 = vmatpush1.bf16.msra.mxu0 %v1223
  %1683 = vmatprep.subr.bf16.mxu0 %v1226
  %1684 = vmatpush1.bf16.msra.mxu0 %v1225
  %1685 = vmatprep.subr.bf16.mxu0 %v1228
  %1686 = vmatpush1.bf16.msra.mxu0 %v1227
  %1687 = vmatprep.subr.bf16.mxu0 %v1230
  %1688 = vmatpush1.bf16.msra.mxu0 %v1229
  %1689 = vmatprep.mubr.bf16.mxu0 %v596
  %1690 = vmatmul.mubr.bf16.gmra.mrb[0].mxu0 %v595
  %v1691 = vpop.f32.mrb[0].mxu0
  %v1692 = vadd.f32 %v1559, %v1691
  %v1693 = vpop.f32.mrb[0].mxu0
  %v1694 = vadd.f32 %v1561, %v1693
  %v1695 = vpop.f32.mrb[0].mxu0
  %v1696 = vadd.f32 %v1563, %v1695
  %v1697 = vpop.f32.mrb[0].mxu0
  %v1698 = vadd.f32 %v1565, %v1697
  %1699 = vmatprep.mubr.bf16.mxu0 %v604
  %1700 = vmatmul.mubr.bf16.gmra.mrb[0].mxu0 %v603
  %v1701 = vpop.f32.mrb[0].mxu0
  %v1702 = vadd.f32 %v1569, %v1701
  %v1703 = vpop.f32.mrb[0].mxu0
  %v1704 = vadd.f32 %v1571, %v1703
  %v1705 = vpop.f32.mrb[0].mxu0
  %v1706 = vadd.f32 %v1573, %v1705
  %v1707 = vpop.f32.mrb[0].mxu0
  %v1708 = vadd.f32 %v1575, %v1707
  %1709 = vmatprep.mubr.bf16.mxu0 %v612
  %1710 = vmatmul.mubr.bf16.gmra.mrb[0].mxu0 %v611
  %v1711 = vpop.f32.mrb[0].mxu0
  %v1712 = vadd.f32 %v1579, %v1711
  %v1713 = vpop.f32.mrb[0].mxu0
  %v1714 = vadd.f32 %v1581, %v1713
  %v1715 = vpop.f32.mrb[0].mxu0
  %v1716 = vadd.f32 %v1583, %v1715
  %v1717 = vpop.f32.mrb[0].mxu0
  %v1718 = vadd.f32 %v1585, %v1717
  %1719 = vmatprep.mubr.bf16.mxu0 %v620
  %1720 = vmatmul.mubr.bf16.gmra.mrb[0].mxu0 %v619
  %v1721 = vpop.f32.mrb[0].mxu0
  %v1722 = vadd.f32 %v1589, %v1721
  %v1723 = vpop.f32.mrb[0].mxu0
  %v1724 = vadd.f32 %v1591, %v1723
  %v1725 = vpop.f32.mrb[0].mxu0
  %v1726 = vadd.f32 %v1593, %v1725
  %v1727 = vpop.f32.mrb[0].mxu0
  %v1728 = vadd.f32 %v1595, %v1727
  %1729 = vmatprep.mubr.bf16.mxu0 %v628
  %1730 = vmatmul.mubr.bf16.gmra.mrb[0].mxu0 %v627
  %v1731 = vpop.f32.mrb[0].mxu0
  %v1732 = vadd.f32 %v1599, %v1731
  %v1733 = vpop.f32.mrb[0].mxu0
  %v1734 = vadd.f32 %v1601, %v1733
  %v1735 = vpop.f32.mrb[0].mxu0
  %v1736 = vadd.f32 %v1603, %v1735
  %v1737 = vpop.f32.mrb[0].mxu0
  %v1738 = vadd.f32 %v1605, %v1737
  %1739 = vmatprep.mubr.bf16.mxu0 %v636
  %1740 = vmatmul.mubr.bf16.gmra.mrb[0].mxu0 %v635
  %v1741 = vpop.f32.mrb[0].mxu0
  %v1742 = vadd.f32 %v1609, %v1741
  %v1743 = vpop.f32.mrb[0].mxu0
  %v1744 = vadd.f32 %v1611, %v1743
  %v1745 = vpop.f32.mrb[0].mxu0
  %v1746 = vadd.f32 %v1613, %v1745
  %v1747 = vpop.f32.mrb[0].mxu0
  %v1748 = vadd.f32 %v1615, %v1747
  %1749 = vmatprep.mubr.bf16.mxu0 %v644
  %1750 = vmatmul.mubr.bf16.gmra.mrb[0].mxu0 %v643
  %v1751 = vpop.f32.mrb[0].mxu0
  %v1752 = vadd.f32 %v1619, %v1751
  %v1753 = vpop.f32.mrb[0].mxu0
  %v1754 = vadd.f32 %v1621, %v1753
  %v1755 = vpop.f32.mrb[0].mxu0
  %v1756 = vadd.f32 %v1623, %v1755
  %v1757 = vpop.f32.mrb[0].mxu0
  %v1758 = vadd.f32 %v1625, %v1757
  %1759 = vmatprep.mubr.bf16.mxu0 %v652
  %1760 = vmatmul.mubr.bf16.gmra.mrb[0].mxu0 %v651
  %v1761 = vpop.f32.mrb[0].mxu0
  %v1762 = vadd.f32 %v1629, %v1761
  %v1763 = vpop.f32.mrb[0].mxu0
  %v1764 = vadd.f32 %v1631, %v1763
  %v1765 = vpop.f32.mrb[0].mxu0
  %v1766 = vadd.f32 %v1633, %v1765
  %v1767 = vpop.f32.mrb[0].mxu0
  %v1768 = vadd.f32 %v1635, %v1767
  %1769 = vmatprep.mubr.bf16.mxu0 %v660
  %1770 = vmatmul.mubr.bf16.gmra.mrb[0].mxu0 %v659
  %v1771 = vpop.f32.mrb[0].mxu0
  %v1772 = vadd.f32 %v1639, %v1771
  %v1773 = vpop.f32.mrb[0].mxu0
  %v1774 = vadd.f32 %v1641, %v1773
  %v1775 = vpop.f32.mrb[0].mxu0
  %v1776 = vadd.f32 %v1643, %v1775
  %v1777 = vpop.f32.mrb[0].mxu0
  %v1778 = vadd.f32 %v1645, %v1777
  %1779 = vmatprep.mubr.bf16.mxu0 %v668
  %1780 = vmatmul.mubr.bf16.gmra.mrb[0].mxu0 %v667
  %v1781 = vpop.f32.mrb[0].mxu0
  %v1782 = vadd.f32 %v1649, %v1781
  %v1783 = vpop.f32.mrb[0].mxu0
  %v1784 = vadd.f32 %v1651, %v1783
  %v1785 = vpop.f32.mrb[0].mxu0
  %v1786 = vadd.f32 %v1653, %v1785
  %v1787 = vpop.f32.mrb[0].mxu0
  %v1788 = vadd.f32 %v1655, %v1787
  %1789 = vdwg.mxu0
  %1790 = vmatprep.subr.bf16.mxu0 %v1232
  %1791 = vmatpush1.bf16.msra.mxu0 %v1231
  %1792 = vmatprep.subr.bf16.mxu0 %v1234
  %1793 = vmatpush1.bf16.msra.mxu0 %v1233
  %1794 = vmatprep.subr.bf16.mxu0 %v1236
  %1795 = vmatpush1.bf16.msra.mxu0 %v1235
  %1796 = vmatprep.subr.bf16.mxu0 %v1238
  %1797 = vmatpush1.bf16.msra.mxu0 %v1237
  %1798 = vmatprep.subr.bf16.mxu0 %v1240
  %1799 = vmatpush1.bf16.msra.mxu0 %v1239
  %1800 = vmatprep.subr.bf16.mxu0 %v1242
  %1801 = vmatpush1.bf16.msra.mxu0 %v1241
  %1802 = vmatprep.subr.bf16.mxu0 %v1244
  %1803 = vmatpush1.bf16.msra.mxu0 %v1243
  %1804 = vmatprep.subr.bf16.mxu0 %v1246
  %1805 = vmatpush1.bf16.msra.mxu0 %v1245
  %1806 = vmatprep.subr.bf16.mxu0 %v1248
  %1807 = vmatpush1.bf16.msra.mxu0 %v1247
  %1808 = vmatprep.subr.bf16.mxu0 %v1250
  %1809 = vmatpush1.bf16.msra.mxu0 %v1249
  %1810 = vmatprep.subr.bf16.mxu0 %v1252
  %1811 = vmatpush1.bf16.msra.mxu0 %v1251
  %1812 = vmatprep.subr.bf16.mxu0 %v1254
  %1813 = vmatpush1.bf16.msra.mxu0 %v1253
  %1814 = vmatprep.subr.bf16.mxu0 %v1256
  %1815 = vmatpush1.bf16.msra.mxu0 %v1255
  %1816 = vmatprep.subr.bf16.mxu0 %v1258
  %1817 = vmatpush1.bf16.msra.mxu0 %v1257
  %1818 = vmatprep.subr.bf16.mxu0 %v1260
  %1819 = vmatpush1.bf16.msra.mxu0 %v1259
  %1820 = vmatprep.subr.bf16.mxu0 %v1262
  %1821 = vmatpush1.bf16.msra.mxu0 %v1261
  %1822 = vmatprep.mubr.bf16.mxu0 %v598
  %1823 = vmatmul.mubr.bf16.gmra.mrb[0].mxu0 %v597
  %v1824 = vpop.f32.mrb[0].mxu0
  %v1825 = vadd.f32 %v1692, %v1824
  %v1826 = vpop.f32.mrb[0].mxu0
  %v1827 = vadd.f32 %v1694, %v1826
  %v1828 = vpop.f32.mrb[0].mxu0
  %v1829 = vadd.f32 %v1696, %v1828
  %v1830 = vpop.f32.mrb[0].mxu0
  %v1831 = vadd.f32 %v1698, %v1830
  %1832 = vmatprep.mubr.bf16.mxu0 %v606
  %1833 = vmatmul.mubr.bf16.gmra.mrb[0].mxu0 %v605
  %v1834 = vpop.f32.mrb[0].mxu0
  %v1835 = vadd.f32 %v1702, %v1834
  %v1836 = vpop.f32.mrb[0].mxu0
  %v1837 = vadd.f32 %v1704, %v1836
  %v1838 = vpop.f32.mrb[0].mxu0
  %v1839 = vadd.f32 %v1706, %v1838
  %v1840 = vpop.f32.mrb[0].mxu0
  %v1841 = vadd.f32 %v1708, %v1840
  %1842 = vmatprep.mubr.bf16.mxu0 %v614
  %1843 = vmatmul.mubr.bf16.gmra.mrb[0].mxu0 %v613
  %v1844 = vpop.f32.mrb[0].mxu0
  %v1845 = vadd.f32 %v1712, %v1844
  %v1846 = vpop.f32.mrb[0].mxu0
  %v1847 = vadd.f32 %v1714, %v1846
  %v1848 = vpop.f32.mrb[0].mxu0
  %v1849 = vadd.f32 %v1716, %v1848
  %v1850 = vpop.f32.mrb[0].mxu0
  %v1851 = vadd.f32 %v1718, %v1850
  %1852 = vmatprep.mubr.bf16.mxu0 %v622
  %1853 = vmatmul.mubr.bf16.gmra.mrb[0].mxu0 %v621
  %v1854 = vpop.f32.mrb[0].mxu0
  %v1855 = vadd.f32 %v1722, %v1854
  %v1856 = vpop.f32.mrb[0].mxu0
  %v1857 = vadd.f32 %v1724, %v1856
  %v1858 = vpop.f32.mrb[0].mxu0
  %v1859 = vadd.f32 %v1726, %v1858
  %v1860 = vpop.f32.mrb[0].mxu0
  %v1861 = vadd.f32 %v1728, %v1860
  %1862 = vmatprep.mubr.bf16.mxu0 %v630
  %1863 = vmatmul.mubr.bf16.gmra.mrb[0].mxu0 %v629
  %v1864 = vpop.f32.mrb[0].mxu0
  %v1865 = vadd.f32 %v1732, %v1864
  %v1866 = vpop.f32.mrb[0].mxu0
  %v1867 = vadd.f32 %v1734, %v1866
  %v1868 = vpop.f32.mrb[0].mxu0
  %v1869 = vadd.f32 %v1736, %v1868
  %v1870 = vpop.f32.mrb[0].mxu0
  %v1871 = vadd.f32 %v1738, %v1870
  %1872 = vmatprep.mubr.bf16.mxu0 %v638
  %1873 = vmatmul.mubr.bf16.gmra.mrb[0].mxu0 %v637
  %v1874 = vpop.f32.mrb[0].mxu0
  %v1875 = vadd.f32 %v1742, %v1874
  %v1876 = vpop.f32.mrb[0].mxu0
  %v1877 = vadd.f32 %v1744, %v1876
  %v1878 = vpop.f32.mrb[0].mxu0
  %v1879 = vadd.f32 %v1746, %v1878
  %v1880 = vpop.f32.mrb[0].mxu0
  %v1881 = vadd.f32 %v1748, %v1880
  %1882 = vmatprep.mubr.bf16.mxu0 %v646
  %1883 = vmatmul.mubr.bf16.gmra.mrb[0].mxu0 %v645
  %v1884 = vpop.f32.mrb[0].mxu0
  %v1885 = vadd.f32 %v1752, %v1884
  %v1886 = vpop.f32.mrb[0].mxu0
  %v1887 = vadd.f32 %v1754, %v1886
  %v1888 = vpop.f32.mrb[0].mxu0
  %v1889 = vadd.f32 %v1756, %v1888
  %v1890 = vpop.f32.mrb[0].mxu0
  %v1891 = vadd.f32 %v1758, %v1890
  %1892 = vmatprep.mubr.bf16.mxu0 %v654
  %1893 = vmatmul.mubr.bf16.gmra.mrb[0].mxu0 %v653
  %v1894 = vpop.f32.mrb[0].mxu0
  %v1895 = vadd.f32 %v1762, %v1894
  %v1896 = vpop.f32.mrb[0].mxu0
  %v1897 = vadd.f32 %v1764, %v1896
  %v1898 = vpop.f32.mrb[0].mxu0
  %v1899 = vadd.f32 %v1766, %v1898
  %v1900 = vpop.f32.mrb[0].mxu0
  %v1901 = vadd.f32 %v1768, %v1900
  %1902 = vmatprep.mubr.bf16.mxu0 %v662
  %1903 = vmatmul.mubr.bf16.gmra.mrb[0].mxu0 %v661
  %v1904 = vpop.f32.mrb[0].mxu0
  %v1905 = vadd.f32 %v1772, %v1904
  %v1906 = vpop.f32.mrb[0].mxu0
  %v1907 = vadd.f32 %v1774, %v1906
  %v1908 = vpop.f32.mrb[0].mxu0
  %v1909 = vadd.f32 %v1776, %v1908
  %v1910 = vpop.f32.mrb[0].mxu0
  %v1911 = vadd.f32 %v1778, %v1910
  %1912 = vmatprep.mubr.bf16.mxu0 %v670
  %1913 = vmatmul.mubr.bf16.gmra.mrb[0].mxu0 %v669
  %v1914 = vpop.f32.mrb[0].mxu0
  %v1915 = vadd.f32 %v1782, %v1914
  %v1916 = vpop.f32.mrb[0].mxu0
  %v1917 = vadd.f32 %v1784, %v1916
  %v1918 = vpop.f32.mrb[0].mxu0
  %v1919 = vadd.f32 %v1786, %v1918
  %v1920 = vpop.f32.mrb[0].mxu0
  %v1921 = vadd.f32 %v1788, %v1920
  %1922 = vdwg.mxu0
  %v1923 = vrot.slane %v1825, 1
  %v1924 = vrot.slane %v1827, 1
  %v1925 = vrot.slane %v1829, 1
  %v1926 = vrot.slane %v1831, 1
  %v1927 = vrot.slane %v1835, 1
  %v1928 = vrot.slane %v1837, 1
  %v1929 = vrot.slane %v1839, 1
  %v1930 = vrot.slane %v1841, 1
  %v1931 = vrot.slane %v1845, 1
  %v1932 = vrot.slane %v1847, 1
  %v1933 = vrot.slane %v1849, 1
  %v1934 = vrot.slane %v1851, 1
  %v1935 = vrot.slane %v1855, 1
  %v1936 = vrot.slane %v1857, 1
  %v1937 = vrot.slane %v1859, 1
  %v1938 = vrot.slane %v1861, 1
  %v1939 = vrot.slane %v1865, 1
  %v1940 = vrot.slane %v1867, 1
  %v1941 = vrot.slane %v1869, 1
  %v1942 = vrot.slane %v1871, 1
  %v1943 = vrot.slane %v1875, 1
  %v1944 = vrot.slane %v1877, 1
  %v1945 = vrot.slane %v1879, 1
  %v1946 = vrot.slane %v1881, 1
  %v1947 = vrot.slane %v1885, 1
  %v1948 = vrot.slane %v1887, 1
  %v1949 = vrot.slane %v1889, 1
  %v1950 = vrot.slane %v1891, 1
  %v1951 = vrot.slane %v1895, 1
  %v1952 = vrot.slane %v1897, 1
  %v1953 = vrot.slane %v1899, 1
  %v1954 = vrot.slane %v1901, 1
  %v1955 = vrot.slane %v1905, 1
  %v1956 = vrot.slane %v1907, 1
  %v1957 = vrot.slane %v1909, 1
  %v1958 = vrot.slane %v1911, 1
  %v1959 = vrot.slane %v1915, 1
  %v1960 = vrot.slane %v1917, 1
  %v1961 = vrot.slane %v1919, 1
  %v1962 = vrot.slane %v1921, 1
  %v1963 = vlaneseq
  %v1964 = vshrl.u32 %v1963, 7
  %vm1965 = vcmp.lt.s32.totalorder %v1964, 7
  %v1966 = vsel %vm1965, %v1959, %v1961
  %v1967 = vsel %vm1965, %v1960, %v1962
  %v1968 = vsel %vm1965, %v1957, %v1959
  %v1969 = vsel %vm1965, %v1958, %v1960
  %v1970 = vsel %vm1965, %v1955, %v1957
  %v1971 = vsel %vm1965, %v1956, %v1958
  %v1972 = vsel %vm1965, %v1953, %v1955
  %v1973 = vsel %vm1965, %v1954, %v1956
  %v1974 = vsel %vm1965, %v1951, %v1953
  %v1975 = vsel %vm1965, %v1952, %v1954
  %v1976 = vsel %vm1965, %v1949, %v1951
  %v1977 = vsel %vm1965, %v1950, %v1952
  %v1978 = vsel %vm1965, %v1947, %v1949
  %v1979 = vsel %vm1965, %v1948, %v1950
  %v1980 = vsel %vm1965, %v1945, %v1947
  %v1981 = vsel %vm1965, %v1946, %v1948
  %v1982 = vsel %vm1965, %v1943, %v1945
  %v1983 = vsel %vm1965, %v1944, %v1946
  %v1984 = vsel %vm1965, %v1941, %v1943
  %v1985 = vsel %vm1965, %v1942, %v1944
  %v1986 = vsel %vm1965, %v1939, %v1941
  %v1987 = vsel %vm1965, %v1940, %v1942
  %v1988 = vsel %vm1965, %v1937, %v1939
  %v1989 = vsel %vm1965, %v1938, %v1940
  %v1990 = vsel %vm1965, %v1935, %v1937
  %v1991 = vsel %vm1965, %v1936, %v1938
  %v1992 = vsel %vm1965, %v1933, %v1935
  %v1993 = vsel %vm1965, %v1934, %v1936
  %v1994 = vsel %vm1965, %v1931, %v1933
  %v1995 = vsel %vm1965, %v1932, %v1934
  %v1996 = vsel %vm1965, %v1929, %v1931
  %v1997 = vsel %vm1965, %v1930, %v1932
  %v1998 = vsel %vm1965, %v1927, %v1929
  %v1999 = vsel %vm1965, %v1928, %v1930
  %v2000 = vsel %vm1965, %v1925, %v1927
  %v2001 = vsel %vm1965, %v1926, %v1928
  %v2002 = vsel %vm1965, %v1923, %v1925
  %v2003 = vsel %vm1965, %v1924, %v1926
  %v2004 = vsel %vm1965, %v1961, %v1923
  %v2005 = vsel %vm1965, %v1962, %v1924
  %v2134 = vunpack.c.l.b16 %v94
  %v2135 = vunpack.c.h.b16 %v94
  %v2136 = vunpack.c.l.b16 %v95
  %v2137 = vunpack.c.h.b16 %v95
  %v2138 = vunpack.c.l.b16 %v96
  %v2139 = vunpack.c.h.b16 %v96
  %v2140 = vunpack.c.l.b16 %v97
  %v2141 = vunpack.c.h.b16 %v97
  %v2142 = vunpack.c.l.b16 %v98
  %v2143 = vunpack.c.h.b16 %v98
  %v2144 = vunpack.c.l.b16 %v99
  %v2145 = vunpack.c.h.b16 %v99
  %v2146 = vunpack.c.l.b16 %v100
  %v2147 = vunpack.c.h.b16 %v100
  %v2148 = vunpack.c.l.b16 %v101
  %v2149 = vunpack.c.h.b16 %v101
  %v2150 = vunpack.c.l.b16 %v102
  %v2151 = vunpack.c.h.b16 %v102
  %v2152 = vunpack.c.l.b16 %v103
  %v2153 = vunpack.c.h.b16 %v103
  %v2154 = vunpack.c.l.b16 %v104
  %v2155 = vunpack.c.h.b16 %v104
  %v2156 = vunpack.c.l.b16 %v105
  %v2157 = vunpack.c.h.b16 %v105
  %v2158 = vunpack.c.l.b16 %v106
  %v2159 = vunpack.c.h.b16 %v106
  %v2160 = vunpack.c.l.b16 %v107
  %v2161 = vunpack.c.h.b16 %v107
  %v2162 = vunpack.c.l.b16 %v108
  %v2163 = vunpack.c.h.b16 %v108
  %v2164 = vunpack.c.l.b16 %v109
  %v2165 = vunpack.c.h.b16 %v109
  %v2166 = vunpack.c.l.b16 %v110
  %v2167 = vunpack.c.h.b16 %v110
  %v2168 = vunpack.c.l.b16 %v111
  %v2169 = vunpack.c.h.b16 %v111
  %v2170 = vunpack.c.l.b16 %v112
  %v2171 = vunpack.c.h.b16 %v112
  %v2172 = vunpack.c.l.b16 %v113
  %v2173 = vunpack.c.h.b16 %v113
  %v2174 = vunpack.c.l.b16 %v114
  %v2175 = vunpack.c.h.b16 %v114
  %v2176 = vunpack.c.l.b16 %v115
  %v2177 = vunpack.c.h.b16 %v115
  %v2178 = vunpack.c.l.b16 %v116
  %v2179 = vunpack.c.h.b16 %v116
  %v2180 = vunpack.c.l.b16 %v117
  %v2181 = vunpack.c.h.b16 %v117
  %v2182 = vunpack.c.l.b16 %v118
  %v2183 = vunpack.c.h.b16 %v118
  %v2184 = vunpack.c.l.b16 %v119
  %v2185 = vunpack.c.h.b16 %v119
  %v2186 = vunpack.c.l.b16 %v120
  %v2187 = vunpack.c.h.b16 %v120
  %v2188 = vunpack.c.l.b16 %v121
  %v2189 = vunpack.c.h.b16 %v121
  %v2190 = vunpack.c.l.b16 %v122
  %v2191 = vunpack.c.h.b16 %v122
  %v2192 = vunpack.c.l.b16 %v123
  %v2193 = vunpack.c.h.b16 %v123
  %v2194 = vunpack.c.l.b16 %v124
  %v2195 = vunpack.c.h.b16 %v124
  %v2196 = vunpack.c.l.b16 %v125
  %v2197 = vunpack.c.h.b16 %v125
  %v2198 = vunpack.c.l.b16 %v126
  %v2199 = vunpack.c.h.b16 %v126
  %v2200 = vunpack.c.l.b16 %v127
  %v2201 = vunpack.c.h.b16 %v127
  %v2202 = vunpack.c.l.b16 %v128
  %v2203 = vunpack.c.h.b16 %v128
  %v2204 = vunpack.c.l.b16 %v129
  %v2205 = vunpack.c.h.b16 %v129
  %v2206 = vunpack.c.l.b16 %v130
  %v2207 = vunpack.c.h.b16 %v130
  %v2208 = vunpack.c.l.b16 %v131
  %v2209 = vunpack.c.h.b16 %v131
  %v2210 = vunpack.c.l.b16 %v132
  %v2211 = vunpack.c.h.b16 %v132
  %v2212 = vunpack.c.l.b16 %v133
  %v2213 = vunpack.c.h.b16 %v133
  %v2214 = vunpack.c.l.b16 %v134
  %v2215 = vunpack.c.h.b16 %v134
  %v2216 = vunpack.c.l.b16 %v135
  %v2217 = vunpack.c.h.b16 %v135
  %v2218 = vunpack.c.l.b16 %v136
  %v2219 = vunpack.c.h.b16 %v136
  %v2220 = vunpack.c.l.b16 %v137
  %v2221 = vunpack.c.h.b16 %v137
  %v2222 = vunpack.c.l.b16 %v138
  %v2223 = vunpack.c.h.b16 %v138
  %v2224 = vunpack.c.l.b16 %v139
  %v2225 = vunpack.c.h.b16 %v139
  %v2226 = vunpack.c.l.b16 %v140
  %v2227 = vunpack.c.h.b16 %v140
  %v2228 = vunpack.c.l.b16 %v141
  %v2229 = vunpack.c.h.b16 %v141
  %v2230 = vunpack.c.l.b16 %v142
  %v2231 = vunpack.c.h.b16 %v142
  %v2232 = vunpack.c.l.b16 %v143
  %v2233 = vunpack.c.h.b16 %v143
  %v2234 = vunpack.c.l.b16 %v144
  %v2235 = vunpack.c.h.b16 %v144
  %v2236 = vunpack.c.l.b16 %v145
  %v2237 = vunpack.c.h.b16 %v145
  %v2238 = vunpack.c.l.b16 %v146
  %v2239 = vunpack.c.h.b16 %v146
  %v2240 = vunpack.c.l.b16 %v147
  %v2241 = vunpack.c.h.b16 %v147
  %v2242 = vunpack.c.l.b16 %v148
  %v2243 = vunpack.c.h.b16 %v148
  %v2244 = vunpack.c.l.b16 %v149
  %v2245 = vunpack.c.h.b16 %v149
  %v2246 = vunpack.c.l.b16 %v150
  %v2247 = vunpack.c.h.b16 %v150
  %v2248 = vunpack.c.l.b16 %v151
  %v2249 = vunpack.c.h.b16 %v151
  %v2250 = vunpack.c.l.b16 %v152
  %v2251 = vunpack.c.h.b16 %v152
  %v2252 = vunpack.c.l.b16 %v153
  %v2253 = vunpack.c.h.b16 %v153
  %v2254 = vunpack.c.l.b16 %v154
  %v2255 = vunpack.c.h.b16 %v154
  %v2256 = vunpack.c.l.b16 %v155
  %v2257 = vunpack.c.h.b16 %v155
  %v2258 = vunpack.c.l.b16 %v156
  %v2259 = vunpack.c.h.b16 %v156
  %v2260 = vunpack.c.l.b16 %v157
  %v2261 = vunpack.c.h.b16 %v157
  %v2262 = vunpack.c.l.b16 %v158
  %v2263 = vunpack.c.h.b16 %v158
  %v2264 = vunpack.c.l.b16 %v159
  %v2265 = vunpack.c.h.b16 %v159
  %v2266 = vunpack.c.l.b16 %v160
  %v2267 = vunpack.c.h.b16 %v160
  %v2268 = vunpack.c.l.b16 %v161
  %v2269 = vunpack.c.h.b16 %v161
  %v2270 = vunpack.c.l.b16 %v162
  %v2271 = vunpack.c.h.b16 %v162
  %v2272 = vunpack.c.l.b16 %v163
  %v2273 = vunpack.c.h.b16 %v163
  %v2274 = vunpack.c.l.b16 %v164
  %v2275 = vunpack.c.h.b16 %v164
  %v2276 = vunpack.c.l.b16 %v165
  %v2277 = vunpack.c.h.b16 %v165
  %v2278 = vunpack.c.l.b16 %v166
  %v2279 = vunpack.c.h.b16 %v166
  %v2280 = vunpack.c.l.b16 %v167
  %v2281 = vunpack.c.h.b16 %v167
  %v2282 = vunpack.c.l.b16 %v168
  %v2283 = vunpack.c.h.b16 %v168
  %v2284 = vunpack.c.l.b16 %v169
  %v2285 = vunpack.c.h.b16 %v169
  %v2286 = vunpack.c.l.b16 %v170
  %v2287 = vunpack.c.h.b16 %v170
  %v2288 = vunpack.c.l.b16 %v171
  %v2289 = vunpack.c.h.b16 %v171
  %v2290 = vunpack.c.l.b16 %v172
  %v2291 = vunpack.c.h.b16 %v172
  %v2292 = vunpack.c.l.b16 %v173
  %v2293 = vunpack.c.h.b16 %v173
  %v2294 = vunpack.c.l.b16 %v174
  %v2295 = vunpack.c.h.b16 %v174
  %v2296 = vunpack.c.l.b16 %v175
  %v2297 = vunpack.c.h.b16 %v175
  %v2298 = vunpack.c.l.b16 %v176
  %v2299 = vunpack.c.h.b16 %v176
  %v2300 = vunpack.c.l.b16 %v177
  %v2301 = vunpack.c.h.b16 %v177
  %v2302 = vunpack.c.l.b16 %v178
  %v2303 = vunpack.c.h.b16 %v178
  %v2304 = vunpack.c.l.b16 %v179
  %v2305 = vunpack.c.h.b16 %v179
  %v2306 = vunpack.c.l.b16 %v180
  %v2307 = vunpack.c.h.b16 %v180
  %v2308 = vunpack.c.l.b16 %v181
  %v2309 = vunpack.c.h.b16 %v181
  %v2310 = vunpack.c.l.b16 %v182
  %v2311 = vunpack.c.h.b16 %v182
  %v2312 = vunpack.c.l.b16 %v183
  %v2313 = vunpack.c.h.b16 %v183
  %v2314 = vunpack.c.l.b16 %v184
  %v2315 = vunpack.c.h.b16 %v184
  %v2316 = vunpack.c.l.b16 %v185
  %v2317 = vunpack.c.h.b16 %v185
  %v2318 = vunpack.c.l.b16 %v186
  %v2319 = vunpack.c.h.b16 %v186
  %v2320 = vunpack.c.l.b16 %v187
  %v2321 = vunpack.c.h.b16 %v187
  %v2322 = vunpack.c.l.b16 %v188
  %v2323 = vunpack.c.h.b16 %v188
  %v2324 = vunpack.c.l.b16 %v189
  %v2325 = vunpack.c.h.b16 %v189
  %v2326 = vunpack.c.l.b16 %v190
  %v2327 = vunpack.c.h.b16 %v190
  %v2328 = vunpack.c.l.b16 %v191
  %v2329 = vunpack.c.h.b16 %v191
  %v2330 = vunpack.c.l.b16 %v192
  %v2331 = vunpack.c.h.b16 %v192
  %v2332 = vunpack.c.l.b16 %v193
  %v2333 = vunpack.c.h.b16 %v193
  %v2334 = vunpack.c.l.b16 %v194
  %v2335 = vunpack.c.h.b16 %v194
  %v2336 = vunpack.c.l.b16 %v195
  %v2337 = vunpack.c.h.b16 %v195
  %v2338 = vunpack.c.l.b16 %v196
  %v2339 = vunpack.c.h.b16 %v196
  %v2340 = vunpack.c.l.b16 %v197
  %v2341 = vunpack.c.h.b16 %v197
  %v2342 = vunpack.c.l.b16 %v198
  %v2343 = vunpack.c.h.b16 %v198
  %v2344 = vunpack.c.l.b16 %v199
  %v2345 = vunpack.c.h.b16 %v199
  %v2346 = vunpack.c.l.b16 %v200
  %v2347 = vunpack.c.h.b16 %v200
  %v2348 = vunpack.c.l.b16 %v201
  %v2349 = vunpack.c.h.b16 %v201
  %v2350 = vunpack.c.l.b16 %v202
  %v2351 = vunpack.c.h.b16 %v202
  %v2352 = vunpack.c.l.b16 %v203
  %v2353 = vunpack.c.h.b16 %v203
  %v2354 = vunpack.c.l.b16 %v204
  %v2355 = vunpack.c.h.b16 %v204
  %v2356 = vunpack.c.l.b16 %v205
  %v2357 = vunpack.c.h.b16 %v205
  %v2358 = vunpack.c.l.b16 %v206
  %v2359 = vunpack.c.h.b16 %v206
  %v2360 = vunpack.c.l.b16 %v207
  %v2361 = vunpack.c.h.b16 %v207
  %v2362 = vunpack.c.l.b16 %v208
  %v2363 = vunpack.c.h.b16 %v208
  %v2364 = vunpack.c.l.b16 %v209
  %v2365 = vunpack.c.h.b16 %v209
  %v2366 = vunpack.c.l.b16 %v210
  %v2367 = vunpack.c.h.b16 %v210
  %v2368 = vunpack.c.l.b16 %v211
  %v2369 = vunpack.c.h.b16 %v211
  %v2370 = vunpack.c.l.b16 %v212
  %v2371 = vunpack.c.h.b16 %v212
  %v2372 = vunpack.c.l.b16 %v213
  %v2373 = vunpack.c.h.b16 %v213
  %v2374 = vunpack.c.l.b16 %v214
  %v2375 = vunpack.c.h.b16 %v214
  %v2376 = vunpack.c.l.b16 %v215
  %v2377 = vunpack.c.h.b16 %v215
  %v2378 = vunpack.c.l.b16 %v216
  %v2379 = vunpack.c.h.b16 %v216
  %v2380 = vunpack.c.l.b16 %v217
  %v2381 = vunpack.c.h.b16 %v217
  %v2382 = vunpack.c.l.b16 %v218
  %v2383 = vunpack.c.h.b16 %v218
  %v2384 = vunpack.c.l.b16 %v219
  %v2385 = vunpack.c.h.b16 %v219
  %v2386 = vunpack.c.l.b16 %v220
  %v2387 = vunpack.c.h.b16 %v220
  %v2388 = vunpack.c.l.b16 %v221
  %v2389 = vunpack.c.h.b16 %v221
  %v2390 = vpack.c.b16 %v2136, %v2134
  %v2391 = vpack.c.b16 %v2137, %v2135
  %v2392 = vpack.c.b16 %v2140, %v2138
  %v2393 = vpack.c.b16 %v2141, %v2139
  %v2394 = vpack.c.b16 %v2144, %v2142
  %v2395 = vpack.c.b16 %v2145, %v2143
  %v2396 = vpack.c.b16 %v2148, %v2146
  %v2397 = vpack.c.b16 %v2149, %v2147
  %v2398 = vpack.c.b16 %v2152, %v2150
  %v2399 = vpack.c.b16 %v2153, %v2151
  %v2400 = vpack.c.b16 %v2156, %v2154
  %v2401 = vpack.c.b16 %v2157, %v2155
  %v2402 = vpack.c.b16 %v2160, %v2158
  %v2403 = vpack.c.b16 %v2161, %v2159
  %v2404 = vpack.c.b16 %v2164, %v2162
  %v2405 = vpack.c.b16 %v2165, %v2163
  %v2406 = vpack.c.b16 %v2168, %v2166
  %v2407 = vpack.c.b16 %v2169, %v2167
  %v2408 = vpack.c.b16 %v2172, %v2170
  %v2409 = vpack.c.b16 %v2173, %v2171
  %v2410 = vpack.c.b16 %v2176, %v2174
  %v2411 = vpack.c.b16 %v2177, %v2175
  %v2412 = vpack.c.b16 %v2180, %v2178
  %v2413 = vpack.c.b16 %v2181, %v2179
  %v2414 = vpack.c.b16 %v2184, %v2182
  %v2415 = vpack.c.b16 %v2185, %v2183
  %v2416 = vpack.c.b16 %v2188, %v2186
  %v2417 = vpack.c.b16 %v2189, %v2187
  %v2418 = vpack.c.b16 %v2192, %v2190
  %v2419 = vpack.c.b16 %v2193, %v2191
  %v2420 = vpack.c.b16 %v2196, %v2194
  %v2421 = vpack.c.b16 %v2197, %v2195
  %v2422 = vpack.c.b16 %v2200, %v2198
  %v2423 = vpack.c.b16 %v2201, %v2199
  %v2424 = vpack.c.b16 %v2204, %v2202
  %v2425 = vpack.c.b16 %v2205, %v2203
  %v2426 = vpack.c.b16 %v2208, %v2206
  %v2427 = vpack.c.b16 %v2209, %v2207
  %v2428 = vpack.c.b16 %v2212, %v2210
  %v2429 = vpack.c.b16 %v2213, %v2211
  %v2430 = vpack.c.b16 %v2216, %v2214
  %v2431 = vpack.c.b16 %v2217, %v2215
  %v2432 = vpack.c.b16 %v2220, %v2218
  %v2433 = vpack.c.b16 %v2221, %v2219
  %v2434 = vpack.c.b16 %v2224, %v2222
  %v2435 = vpack.c.b16 %v2225, %v2223
  %v2436 = vpack.c.b16 %v2228, %v2226
  %v2437 = vpack.c.b16 %v2229, %v2227
  %v2438 = vpack.c.b16 %v2232, %v2230
  %v2439 = vpack.c.b16 %v2233, %v2231
  %v2440 = vpack.c.b16 %v2236, %v2234
  %v2441 = vpack.c.b16 %v2237, %v2235
  %v2442 = vpack.c.b16 %v2240, %v2238
  %v2443 = vpack.c.b16 %v2241, %v2239
  %v2444 = vpack.c.b16 %v2244, %v2242
  %v2445 = vpack.c.b16 %v2245, %v2243
  %v2446 = vpack.c.b16 %v2248, %v2246
  %v2447 = vpack.c.b16 %v2249, %v2247
  %v2448 = vpack.c.b16 %v2252, %v2250
  %v2449 = vpack.c.b16 %v2253, %v2251
  %v2450 = vpack.c.b16 %v2256, %v2254
  %v2451 = vpack.c.b16 %v2257, %v2255
  %v2452 = vpack.c.b16 %v2260, %v2258
  %v2453 = vpack.c.b16 %v2261, %v2259
  %v2454 = vpack.c.b16 %v2264, %v2262
  %v2455 = vpack.c.b16 %v2265, %v2263
  %v2456 = vpack.c.b16 %v2268, %v2266
  %v2457 = vpack.c.b16 %v2269, %v2267
  %v2458 = vpack.c.b16 %v2272, %v2270
  %v2459 = vpack.c.b16 %v2273, %v2271
  %v2460 = vpack.c.b16 %v2276, %v2274
  %v2461 = vpack.c.b16 %v2277, %v2275
  %v2462 = vpack.c.b16 %v2280, %v2278
  %v2463 = vpack.c.b16 %v2281, %v2279
  %v2464 = vpack.c.b16 %v2284, %v2282
  %v2465 = vpack.c.b16 %v2285, %v2283
  %v2466 = vpack.c.b16 %v2288, %v2286
  %v2467 = vpack.c.b16 %v2289, %v2287
  %v2468 = vpack.c.b16 %v2292, %v2290
  %v2469 = vpack.c.b16 %v2293, %v2291
  %v2470 = vpack.c.b16 %v2296, %v2294
  %v2471 = vpack.c.b16 %v2297, %v2295
  %v2472 = vpack.c.b16 %v2300, %v2298
  %v2473 = vpack.c.b16 %v2301, %v2299
  %v2474 = vpack.c.b16 %v2304, %v2302
  %v2475 = vpack.c.b16 %v2305, %v2303
  %v2476 = vpack.c.b16 %v2308, %v2306
  %v2477 = vpack.c.b16 %v2309, %v2307
  %v2478 = vpack.c.b16 %v2312, %v2310
  %v2479 = vpack.c.b16 %v2313, %v2311
  %v2480 = vpack.c.b16 %v2316, %v2314
  %v2481 = vpack.c.b16 %v2317, %v2315
  %v2482 = vpack.c.b16 %v2320, %v2318
  %v2483 = vpack.c.b16 %v2321, %v2319
  %v2484 = vpack.c.b16 %v2324, %v2322
  %v2485 = vpack.c.b16 %v2325, %v2323
  %v2486 = vpack.c.b16 %v2328, %v2326
  %v2487 = vpack.c.b16 %v2329, %v2327
  %v2488 = vpack.c.b16 %v2332, %v2330
  %v2489 = vpack.c.b16 %v2333, %v2331
  %v2490 = vpack.c.b16 %v2336, %v2334
  %v2491 = vpack.c.b16 %v2337, %v2335
  %v2492 = vpack.c.b16 %v2340, %v2338
  %v2493 = vpack.c.b16 %v2341, %v2339
  %v2494 = vpack.c.b16 %v2344, %v2342
  %v2495 = vpack.c.b16 %v2345, %v2343
  %v2496 = vpack.c.b16 %v2348, %v2346
  %v2497 = vpack.c.b16 %v2349, %v2347
  %v2498 = vpack.c.b16 %v2352, %v2350
  %v2499 = vpack.c.b16 %v2353, %v2351
  %v2500 = vpack.c.b16 %v2356, %v2354
  %v2501 = vpack.c.b16 %v2357, %v2355
  %v2502 = vpack.c.b16 %v2360, %v2358
  %v2503 = vpack.c.b16 %v2361, %v2359
  %v2504 = vpack.c.b16 %v2364, %v2362
  %v2505 = vpack.c.b16 %v2365, %v2363
  %v2506 = vpack.c.b16 %v2368, %v2366
  %v2507 = vpack.c.b16 %v2369, %v2367
  %v2508 = vpack.c.b16 %v2372, %v2370
  %v2509 = vpack.c.b16 %v2373, %v2371
  %v2510 = vpack.c.b16 %v2376, %v2374
  %v2511 = vpack.c.b16 %v2377, %v2375
  %v2512 = vpack.c.b16 %v2380, %v2378
  %v2513 = vpack.c.b16 %v2381, %v2379
  %v2514 = vpack.c.b16 %v2384, %v2382
  %v2515 = vpack.c.b16 %v2385, %v2383
  %v2516 = vpack.c.b16 %v2388, %v2386
  %v2517 = vpack.c.b16 %v2389, %v2387
  %2646 = vmatprep.subr.bf16.mxu0 %v2391
  %2647 = vmatpush1.bf16.msra.mxu0 %v2390
  %2648 = vmatprep.subr.bf16.mxu0 %v2393
  %2649 = vmatpush1.bf16.msra.mxu0 %v2392
  %2650 = vmatprep.subr.bf16.mxu0 %v2395
  %2651 = vmatpush1.bf16.msra.mxu0 %v2394
  %2652 = vmatprep.subr.bf16.mxu0 %v2397
  %2653 = vmatpush1.bf16.msra.mxu0 %v2396
  %2654 = vmatprep.subr.bf16.mxu0 %v2399
  %2655 = vmatpush1.bf16.msra.mxu0 %v2398
  %2656 = vmatprep.subr.bf16.mxu0 %v2401
  %2657 = vmatpush1.bf16.msra.mxu0 %v2400
  %2658 = vmatprep.subr.bf16.mxu0 %v2403
  %2659 = vmatpush1.bf16.msra.mxu0 %v2402
  %2660 = vmatprep.subr.bf16.mxu0 %v2405
  %2661 = vmatpush1.bf16.msra.mxu0 %v2404
  %2662 = vmatprep.subr.bf16.mxu0 %v2407
  %2663 = vmatpush1.bf16.msra.mxu0 %v2406
  %2664 = vmatprep.subr.bf16.mxu0 %v2409
  %2665 = vmatpush1.bf16.msra.mxu0 %v2408
  %2666 = vmatprep.subr.bf16.mxu0 %v2411
  %2667 = vmatpush1.bf16.msra.mxu0 %v2410
  %2668 = vmatprep.subr.bf16.mxu0 %v2413
  %2669 = vmatpush1.bf16.msra.mxu0 %v2412
  %2670 = vmatprep.subr.bf16.mxu0 %v2415
  %2671 = vmatpush1.bf16.msra.mxu0 %v2414
  %2672 = vmatprep.subr.bf16.mxu0 %v2417
  %2673 = vmatpush1.bf16.msra.mxu0 %v2416
  %2674 = vmatprep.subr.bf16.mxu0 %v2419
  %2675 = vmatpush1.bf16.msra.mxu0 %v2418
  %2676 = vmatprep.subr.bf16.mxu0 %v2421
  %2677 = vmatpush1.bf16.msra.mxu0 %v2420
  %2678 = vmatprep.mubr.bf16.mxu0 %v592
  %2679 = vmatmul.mubr.bf16.gmra.mrb[0].mxu0 %v591
  %v2680 = vpop.f32.mrb[0].mxu0
  %v2681 = vadd.f32 %v2002, %v2680
  %v2682 = vpop.f32.mrb[0].mxu0
  %v2683 = vadd.f32 %v2003, %v2682
  %v2684 = vpop.f32.mrb[0].mxu0
  %v2685 = vadd.f32 %v2000, %v2684
  %v2686 = vpop.f32.mrb[0].mxu0
  %v2687 = vadd.f32 %v2001, %v2686
  %2688 = vmatprep.mubr.bf16.mxu0 %v600
  %2689 = vmatmul.mubr.bf16.gmra.mrb[0].mxu0 %v599
  %v2690 = vpop.f32.mrb[0].mxu0
  %v2691 = vadd.f32 %v1998, %v2690
  %v2692 = vpop.f32.mrb[0].mxu0
  %v2693 = vadd.f32 %v1999, %v2692
  %v2694 = vpop.f32.mrb[0].mxu0
  %v2695 = vadd.f32 %v1996, %v2694
  %v2696 = vpop.f32.mrb[0].mxu0
  %v2697 = vadd.f32 %v1997, %v2696
  %2698 = vmatprep.mubr.bf16.mxu0 %v608
  %2699 = vmatmul.mubr.bf16.gmra.mrb[0].mxu0 %v607
  %v2700 = vpop.f32.mrb[0].mxu0
  %v2701 = vadd.f32 %v1994, %v2700
  %v2702 = vpop.f32.mrb[0].mxu0
  %v2703 = vadd.f32 %v1995, %v2702
  %v2704 = vpop.f32.mrb[0].mxu0
  %v2705 = vadd.f32 %v1992, %v2704
  %v2706 = vpop.f32.mrb[0].mxu0
  %v2707 = vadd.f32 %v1993, %v2706
  %2708 = vmatprep.mubr.bf16.mxu0 %v616
  %2709 = vmatmul.mubr.bf16.gmra.mrb[0].mxu0 %v615
  %v2710 = vpop.f32.mrb[0].mxu0
  %v2711 = vadd.f32 %v1990, %v2710
  %v2712 = vpop.f32.mrb[0].mxu0
  %v2713 = vadd.f32 %v1991, %v2712
  %v2714 = vpop.f32.mrb[0].mxu0
  %v2715 = vadd.f32 %v1988, %v2714
  %v2716 = vpop.f32.mrb[0].mxu0
  %v2717 = vadd.f32 %v1989, %v2716
  %2718 = vmatprep.mubr.bf16.mxu0 %v624
  %2719 = vmatmul.mubr.bf16.gmra.mrb[0].mxu0 %v623
  %v2720 = vpop.f32.mrb[0].mxu0
  %v2721 = vadd.f32 %v1986, %v2720
  %v2722 = vpop.f32.mrb[0].mxu0
  %v2723 = vadd.f32 %v1987, %v2722
  %v2724 = vpop.f32.mrb[0].mxu0
  %v2725 = vadd.f32 %v1984, %v2724
  %v2726 = vpop.f32.mrb[0].mxu0
  %v2727 = vadd.f32 %v1985, %v2726
  %2728 = vmatprep.mubr.bf16.mxu0 %v632
  %2729 = vmatmul.mubr.bf16.gmra.mrb[0].mxu0 %v631
  %v2730 = vpop.f32.mrb[0].mxu0
  %v2731 = vadd.f32 %v1982, %v2730
  %v2732 = vpop.f32.mrb[0].mxu0
  %v2733 = vadd.f32 %v1983, %v2732
  %v2734 = vpop.f32.mrb[0].mxu0
  %v2735 = vadd.f32 %v1980, %v2734
  %v2736 = vpop.f32.mrb[0].mxu0
  %v2737 = vadd.f32 %v1981, %v2736
  %2738 = vmatprep.mubr.bf16.mxu0 %v640
  %2739 = vmatmul.mubr.bf16.gmra.mrb[0].mxu0 %v639
  %v2740 = vpop.f32.mrb[0].mxu0
  %v2741 = vadd.f32 %v1978, %v2740
  %v2742 = vpop.f32.mrb[0].mxu0
  %v2743 = vadd.f32 %v1979, %v2742
  %v2744 = vpop.f32.mrb[0].mxu0
  %v2745 = vadd.f32 %v1976, %v2744
  %v2746 = vpop.f32.mrb[0].mxu0
  %v2747 = vadd.f32 %v1977, %v2746
  %2748 = vmatprep.mubr.bf16.mxu0 %v648
  %2749 = vmatmul.mubr.bf16.gmra.mrb[0].mxu0 %v647
  %v2750 = vpop.f32.mrb[0].mxu0
  %v2751 = vadd.f32 %v1974, %v2750
  %v2752 = vpop.f32.mrb[0].mxu0
  %v2753 = vadd.f32 %v1975, %v2752
  %v2754 = vpop.f32.mrb[0].mxu0
  %v2755 = vadd.f32 %v1972, %v2754
  %v2756 = vpop.f32.mrb[0].mxu0
  %v2757 = vadd.f32 %v1973, %v2756
  %2758 = vmatprep.mubr.bf16.mxu0 %v656
  %2759 = vmatmul.mubr.bf16.gmra.mrb[0].mxu0 %v655
  %v2760 = vpop.f32.mrb[0].mxu0
  %v2761 = vadd.f32 %v1970, %v2760
  %v2762 = vpop.f32.mrb[0].mxu0
  %v2763 = vadd.f32 %v1971, %v2762
  %v2764 = vpop.f32.mrb[0].mxu0
  %v2765 = vadd.f32 %v1968, %v2764
  %v2766 = vpop.f32.mrb[0].mxu0
  %v2767 = vadd.f32 %v1969, %v2766
  %2768 = vmatprep.mubr.bf16.mxu0 %v664
  %2769 = vmatmul.mubr.bf16.gmra.mrb[0].mxu0 %v663
  %v2770 = vpop.f32.mrb[0].mxu0
  %v2771 = vadd.f32 %v1966, %v2770
  %v2772 = vpop.f32.mrb[0].mxu0
  %v2773 = vadd.f32 %v1967, %v2772
  %v2774 = vpop.f32.mrb[0].mxu0
  %v2775 = vadd.f32 %v2004, %v2774
  %v2776 = vpop.f32.mrb[0].mxu0
  %v2777 = vadd.f32 %v2005, %v2776
  %2778 = vdwg.mxu0
  %2779 = vmatprep.subr.bf16.mxu0 %v2423
  %2780 = vmatpush1.bf16.msra.mxu0 %v2422
  %2781 = vmatprep.subr.bf16.mxu0 %v2425
  %2782 = vmatpush1.bf16.msra.mxu0 %v2424
  %2783 = vmatprep.subr.bf16.mxu0 %v2427
  %2784 = vmatpush1.bf16.msra.mxu0 %v2426
  %2785 = vmatprep.subr.bf16.mxu0 %v2429
  %2786 = vmatpush1.bf16.msra.mxu0 %v2428
  %2787 = vmatprep.subr.bf16.mxu0 %v2431
  %2788 = vmatpush1.bf16.msra.mxu0 %v2430
  %2789 = vmatprep.subr.bf16.mxu0 %v2433
  %2790 = vmatpush1.bf16.msra.mxu0 %v2432
  %2791 = vmatprep.subr.bf16.mxu0 %v2435
  %2792 = vmatpush1.bf16.msra.mxu0 %v2434
  %2793 = vmatprep.subr.bf16.mxu0 %v2437
  %2794 = vmatpush1.bf16.msra.mxu0 %v2436
  %2795 = vmatprep.subr.bf16.mxu0 %v2439
  %2796 = vmatpush1.bf16.msra.mxu0 %v2438
  %2797 = vmatprep.subr.bf16.mxu0 %v2441
  %2798 = vmatpush1.bf16.msra.mxu0 %v2440
  %2799 = vmatprep.subr.bf16.mxu0 %v2443
  %2800 = vmatpush1.bf16.msra.mxu0 %v2442
  %2801 = vmatprep.subr.bf16.mxu0 %v2445
  %2802 = vmatpush1.bf16.msra.mxu0 %v2444
  %2803 = vmatprep.subr.bf16.mxu0 %v2447
  %2804 = vmatpush1.bf16.msra.mxu0 %v2446
  %2805 = vmatprep.subr.bf16.mxu0 %v2449
  %2806 = vmatpush1.bf16.msra.mxu0 %v2448
  %2807 = vmatprep.subr.bf16.mxu0 %v2451
  %2808 = vmatpush1.bf16.msra.mxu0 %v2450
  %2809 = vmatprep.subr.bf16.mxu0 %v2453
  %2810 = vmatpush1.bf16.msra.mxu0 %v2452
  %2811 = vmatprep.mubr.bf16.mxu0 %v594
  %2812 = vmatmul.mubr.bf16.gmra.mrb[0].mxu0 %v593
  %v2813 = vpop.f32.mrb[0].mxu0
  %v2814 = vadd.f32 %v2681, %v2813
  %v2815 = vpop.f32.mrb[0].mxu0
  %v2816 = vadd.f32 %v2683, %v2815
  %v2817 = vpop.f32.mrb[0].mxu0
  %v2818 = vadd.f32 %v2685, %v2817
  %v2819 = vpop.f32.mrb[0].mxu0
  %v2820 = vadd.f32 %v2687, %v2819
  %2821 = vmatprep.mubr.bf16.mxu0 %v602
  %2822 = vmatmul.mubr.bf16.gmra.mrb[0].mxu0 %v601
  %v2823 = vpop.f32.mrb[0].mxu0
  %v2824 = vadd.f32 %v2691, %v2823
  %v2825 = vpop.f32.mrb[0].mxu0
  %v2826 = vadd.f32 %v2693, %v2825
  %v2827 = vpop.f32.mrb[0].mxu0
  %v2828 = vadd.f32 %v2695, %v2827
  %v2829 = vpop.f32.mrb[0].mxu0
  %v2830 = vadd.f32 %v2697, %v2829
  %2831 = vmatprep.mubr.bf16.mxu0 %v610
  %2832 = vmatmul.mubr.bf16.gmra.mrb[0].mxu0 %v609
  %v2833 = vpop.f32.mrb[0].mxu0
  %v2834 = vadd.f32 %v2701, %v2833
  %v2835 = vpop.f32.mrb[0].mxu0
  %v2836 = vadd.f32 %v2703, %v2835
  %v2837 = vpop.f32.mrb[0].mxu0
  %v2838 = vadd.f32 %v2705, %v2837
  %v2839 = vpop.f32.mrb[0].mxu0
  %v2840 = vadd.f32 %v2707, %v2839
  %2841 = vmatprep.mubr.bf16.mxu0 %v618
  %2842 = vmatmul.mubr.bf16.gmra.mrb[0].mxu0 %v617
  %v2843 = vpop.f32.mrb[0].mxu0
  %v2844 = vadd.f32 %v2711, %v2843
  %v2845 = vpop.f32.mrb[0].mxu0
  %v2846 = vadd.f32 %v2713, %v2845
  %v2847 = vpop.f32.mrb[0].mxu0
  %v2848 = vadd.f32 %v2715, %v2847
  %v2849 = vpop.f32.mrb[0].mxu0
  %v2850 = vadd.f32 %v2717, %v2849
  %2851 = vmatprep.mubr.bf16.mxu0 %v626
  %2852 = vmatmul.mubr.bf16.gmra.mrb[0].mxu0 %v625
  %v2853 = vpop.f32.mrb[0].mxu0
  %v2854 = vadd.f32 %v2721, %v2853
  %v2855 = vpop.f32.mrb[0].mxu0
  %v2856 = vadd.f32 %v2723, %v2855
  %v2857 = vpop.f32.mrb[0].mxu0
  %v2858 = vadd.f32 %v2725, %v2857
  %v2859 = vpop.f32.mrb[0].mxu0
  %v2860 = vadd.f32 %v2727, %v2859
  %2861 = vmatprep.mubr.bf16.mxu0 %v634
  %2862 = vmatmul.mubr.bf16.gmra.mrb[0].mxu0 %v633
  %v2863 = vpop.f32.mrb[0].mxu0
  %v2864 = vadd.f32 %v2731, %v2863
  %v2865 = vpop.f32.mrb[0].mxu0
  %v2866 = vadd.f32 %v2733, %v2865
  %v2867 = vpop.f32.mrb[0].mxu0
  %v2868 = vadd.f32 %v2735, %v2867
  %v2869 = vpop.f32.mrb[0].mxu0
  %v2870 = vadd.f32 %v2737, %v2869
  %2871 = vmatprep.mubr.bf16.mxu0 %v642
  %2872 = vmatmul.mubr.bf16.gmra.mrb[0].mxu0 %v641
  %v2873 = vpop.f32.mrb[0].mxu0
  %v2874 = vadd.f32 %v2741, %v2873
  %v2875 = vpop.f32.mrb[0].mxu0
  %v2876 = vadd.f32 %v2743, %v2875
  %v2877 = vpop.f32.mrb[0].mxu0
  %v2878 = vadd.f32 %v2745, %v2877
  %v2879 = vpop.f32.mrb[0].mxu0
  %v2880 = vadd.f32 %v2747, %v2879
  %2881 = vmatprep.mubr.bf16.mxu0 %v650
  %2882 = vmatmul.mubr.bf16.gmra.mrb[0].mxu0 %v649
  %v2883 = vpop.f32.mrb[0].mxu0
  %v2884 = vadd.f32 %v2751, %v2883
  %v2885 = vpop.f32.mrb[0].mxu0
  %v2886 = vadd.f32 %v2753, %v2885
  %v2887 = vpop.f32.mrb[0].mxu0
  %v2888 = vadd.f32 %v2755, %v2887
  %v2889 = vpop.f32.mrb[0].mxu0
  %v2890 = vadd.f32 %v2757, %v2889
  %2891 = vmatprep.mubr.bf16.mxu0 %v658
  %2892 = vmatmul.mubr.bf16.gmra.mrb[0].mxu0 %v657
  %v2893 = vpop.f32.mrb[0].mxu0
  %v2894 = vadd.f32 %v2761, %v2893
  %v2895 = vpop.f32.mrb[0].mxu0
  %v2896 = vadd.f32 %v2763, %v2895
  %v2897 = vpop.f32.mrb[0].mxu0
  %v2898 = vadd.f32 %v2765, %v2897
  %v2899 = vpop.f32.mrb[0].mxu0
  %v2900 = vadd.f32 %v2767, %v2899
  %2901 = vmatprep.mubr.bf16.mxu0 %v666
  %2902 = vmatmul.mubr.bf16.gmra.mrb[0].mxu0 %v665
  %v2903 = vpop.f32.mrb[0].mxu0
  %v2904 = vadd.f32 %v2771, %v2903
  %v2905 = vpop.f32.mrb[0].mxu0
  %v2906 = vadd.f32 %v2773, %v2905
  %v2907 = vpop.f32.mrb[0].mxu0
  %v2908 = vadd.f32 %v2775, %v2907
  %v2909 = vpop.f32.mrb[0].mxu0
  %v2910 = vadd.f32 %v2777, %v2909
  %2911 = vdwg.mxu0
  %2912 = vmatprep.subr.bf16.mxu0 %v2455
  %2913 = vmatpush1.bf16.msra.mxu0 %v2454
  %2914 = vmatprep.subr.bf16.mxu0 %v2457
  %2915 = vmatpush1.bf16.msra.mxu0 %v2456
  %2916 = vmatprep.subr.bf16.mxu0 %v2459
  %2917 = vmatpush1.bf16.msra.mxu0 %v2458
  %2918 = vmatprep.subr.bf16.mxu0 %v2461
  %2919 = vmatpush1.bf16.msra.mxu0 %v2460
  %2920 = vmatprep.subr.bf16.mxu0 %v2463
  %2921 = vmatpush1.bf16.msra.mxu0 %v2462
  %2922 = vmatprep.subr.bf16.mxu0 %v2465
  %2923 = vmatpush1.bf16.msra.mxu0 %v2464
  %2924 = vmatprep.subr.bf16.mxu0 %v2467
  %2925 = vmatpush1.bf16.msra.mxu0 %v2466
  %2926 = vmatprep.subr.bf16.mxu0 %v2469
  %2927 = vmatpush1.bf16.msra.mxu0 %v2468
  %2928 = vmatprep.subr.bf16.mxu0 %v2471
  %2929 = vmatpush1.bf16.msra.mxu0 %v2470
  %2930 = vmatprep.subr.bf16.mxu0 %v2473
  %2931 = vmatpush1.bf16.msra.mxu0 %v2472
  %2932 = vmatprep.subr.bf16.mxu0 %v2475
  %2933 = vmatpush1.bf16.msra.mxu0 %v2474
  %2934 = vmatprep.subr.bf16.mxu0 %v2477
  %2935 = vmatpush1.bf16.msra.mxu0 %v2476
  %2936 = vmatprep.subr.bf16.mxu0 %v2479
  %2937 = vmatpush1.bf16.msra.mxu0 %v2478
  %2938 = vmatprep.subr.bf16.mxu0 %v2481
  %2939 = vmatpush1.bf16.msra.mxu0 %v2480
  %2940 = vmatprep.subr.bf16.mxu0 %v2483
  %2941 = vmatpush1.bf16.msra.mxu0 %v2482
  %2942 = vmatprep.subr.bf16.mxu0 %v2485
  %2943 = vmatpush1.bf16.msra.mxu0 %v2484
  %2944 = vmatprep.mubr.bf16.mxu0 %v596
  %2945 = vmatmul.mubr.bf16.gmra.mrb[0].mxu0 %v595
  %v2946 = vpop.f32.mrb[0].mxu0
  %v2947 = vadd.f32 %v2814, %v2946
  %v2948 = vpop.f32.mrb[0].mxu0
  %v2949 = vadd.f32 %v2816, %v2948
  %v2950 = vpop.f32.mrb[0].mxu0
  %v2951 = vadd.f32 %v2818, %v2950
  %v2952 = vpop.f32.mrb[0].mxu0
  %v2953 = vadd.f32 %v2820, %v2952
  %2954 = vmatprep.mubr.bf16.mxu0 %v604
  %2955 = vmatmul.mubr.bf16.gmra.mrb[0].mxu0 %v603
  %v2956 = vpop.f32.mrb[0].mxu0
  %v2957 = vadd.f32 %v2824, %v2956
  %v2958 = vpop.f32.mrb[0].mxu0
  %v2959 = vadd.f32 %v2826, %v2958
  %v2960 = vpop.f32.mrb[0].mxu0
  %v2961 = vadd.f32 %v2828, %v2960
  %v2962 = vpop.f32.mrb[0].mxu0
  %v2963 = vadd.f32 %v2830, %v2962
  %2964 = vmatprep.mubr.bf16.mxu0 %v612
  %2965 = vmatmul.mubr.bf16.gmra.mrb[0].mxu0 %v611
  %v2966 = vpop.f32.mrb[0].mxu0
  %v2967 = vadd.f32 %v2834, %v2966
  %v2968 = vpop.f32.mrb[0].mxu0
  %v2969 = vadd.f32 %v2836, %v2968
  %v2970 = vpop.f32.mrb[0].mxu0
  %v2971 = vadd.f32 %v2838, %v2970
  %v2972 = vpop.f32.mrb[0].mxu0
  %v2973 = vadd.f32 %v2840, %v2972
  %2974 = vmatprep.mubr.bf16.mxu0 %v620
  %2975 = vmatmul.mubr.bf16.gmra.mrb[0].mxu0 %v619
  %v2976 = vpop.f32.mrb[0].mxu0
  %v2977 = vadd.f32 %v2844, %v2976
  %v2978 = vpop.f32.mrb[0].mxu0
  %v2979 = vadd.f32 %v2846, %v2978
  %v2980 = vpop.f32.mrb[0].mxu0
  %v2981 = vadd.f32 %v2848, %v2980
  %v2982 = vpop.f32.mrb[0].mxu0
  %v2983 = vadd.f32 %v2850, %v2982
  %2984 = vmatprep.mubr.bf16.mxu0 %v628
  %2985 = vmatmul.mubr.bf16.gmra.mrb[0].mxu0 %v627
  %v2986 = vpop.f32.mrb[0].mxu0
  %v2987 = vadd.f32 %v2854, %v2986
  %v2988 = vpop.f32.mrb[0].mxu0
  %v2989 = vadd.f32 %v2856, %v2988
  %v2990 = vpop.f32.mrb[0].mxu0
  %v2991 = vadd.f32 %v2858, %v2990
  %v2992 = vpop.f32.mrb[0].mxu0
  %v2993 = vadd.f32 %v2860, %v2992
  %2994 = vmatprep.mubr.bf16.mxu0 %v636
  %2995 = vmatmul.mubr.bf16.gmra.mrb[0].mxu0 %v635
  %v2996 = vpop.f32.mrb[0].mxu0
  %v2997 = vadd.f32 %v2864, %v2996
  %v2998 = vpop.f32.mrb[0].mxu0
  %v2999 = vadd.f32 %v2866, %v2998
  %v3000 = vpop.f32.mrb[0].mxu0
  %v3001 = vadd.f32 %v2868, %v3000
  %v3002 = vpop.f32.mrb[0].mxu0
  %v3003 = vadd.f32 %v2870, %v3002
  %3004 = vmatprep.mubr.bf16.mxu0 %v644
  %3005 = vmatmul.mubr.bf16.gmra.mrb[0].mxu0 %v643
  %v3006 = vpop.f32.mrb[0].mxu0
  %v3007 = vadd.f32 %v2874, %v3006
  %v3008 = vpop.f32.mrb[0].mxu0
  %v3009 = vadd.f32 %v2876, %v3008
  %v3010 = vpop.f32.mrb[0].mxu0
  %v3011 = vadd.f32 %v2878, %v3010
  %v3012 = vpop.f32.mrb[0].mxu0
  %v3013 = vadd.f32 %v2880, %v3012
  %3014 = vmatprep.mubr.bf16.mxu0 %v652
  %3015 = vmatmul.mubr.bf16.gmra.mrb[0].mxu0 %v651
  %v3016 = vpop.f32.mrb[0].mxu0
  %v3017 = vadd.f32 %v2884, %v3016
  %v3018 = vpop.f32.mrb[0].mxu0
  %v3019 = vadd.f32 %v2886, %v3018
  %v3020 = vpop.f32.mrb[0].mxu0
  %v3021 = vadd.f32 %v2888, %v3020
  %v3022 = vpop.f32.mrb[0].mxu0
  %v3023 = vadd.f32 %v2890, %v3022
  %3024 = vmatprep.mubr.bf16.mxu0 %v660
  %3025 = vmatmul.mubr.bf16.gmra.mrb[0].mxu0 %v659
  %v3026 = vpop.f32.mrb[0].mxu0
  %v3027 = vadd.f32 %v2894, %v3026
  %v3028 = vpop.f32.mrb[0].mxu0
  %v3029 = vadd.f32 %v2896, %v3028
  %v3030 = vpop.f32.mrb[0].mxu0
  %v3031 = vadd.f32 %v2898, %v3030
  %v3032 = vpop.f32.mrb[0].mxu0
  %v3033 = vadd.f32 %v2900, %v3032
  %3034 = vmatprep.mubr.bf16.mxu0 %v668
  %3035 = vmatmul.mubr.bf16.gmra.mrb[0].mxu0 %v667
  %v3036 = vpop.f32.mrb[0].mxu0
  %v3037 = vadd.f32 %v2904, %v3036
  %v3038 = vpop.f32.mrb[0].mxu0
  %v3039 = vadd.f32 %v2906, %v3038
  %v3040 = vpop.f32.mrb[0].mxu0
  %v3041 = vadd.f32 %v2908, %v3040
  %v3042 = vpop.f32.mrb[0].mxu0
  %v3043 = vadd.f32 %v2910, %v3042
  %3044 = vdwg.mxu0
  %3045 = vmatprep.subr.bf16.mxu0 %v2487
  %3046 = vmatpush1.bf16.msra.mxu0 %v2486
  %3047 = vmatprep.subr.bf16.mxu0 %v2489
  %3048 = vmatpush1.bf16.msra.mxu0 %v2488
  %3049 = vmatprep.subr.bf16.mxu0 %v2491
  %3050 = vmatpush1.bf16.msra.mxu0 %v2490
  %3051 = vmatprep.subr.bf16.mxu0 %v2493
  %3052 = vmatpush1.bf16.msra.mxu0 %v2492
  %3053 = vmatprep.subr.bf16.mxu0 %v2495
  %3054 = vmatpush1.bf16.msra.mxu0 %v2494
  %3055 = vmatprep.subr.bf16.mxu0 %v2497
  %3056 = vmatpush1.bf16.msra.mxu0 %v2496
  %3057 = vmatprep.subr.bf16.mxu0 %v2499
  %3058 = vmatpush1.bf16.msra.mxu0 %v2498
  %3059 = vmatprep.subr.bf16.mxu0 %v2501
  %3060 = vmatpush1.bf16.msra.mxu0 %v2500
  %3061 = vmatprep.subr.bf16.mxu0 %v2503
  %3062 = vmatpush1.bf16.msra.mxu0 %v2502
  %3063 = vmatprep.subr.bf16.mxu0 %v2505
  %3064 = vmatpush1.bf16.msra.mxu0 %v2504
  %3065 = vmatprep.subr.bf16.mxu0 %v2507
  %3066 = vmatpush1.bf16.msra.mxu0 %v2506
  %3067 = vmatprep.subr.bf16.mxu0 %v2509
  %3068 = vmatpush1.bf16.msra.mxu0 %v2508
  %3069 = vmatprep.subr.bf16.mxu0 %v2511
  %3070 = vmatpush1.bf16.msra.mxu0 %v2510
  %3071 = vmatprep.subr.bf16.mxu0 %v2513
  %3072 = vmatpush1.bf16.msra.mxu0 %v2512
  %3073 = vmatprep.subr.bf16.mxu0 %v2515
  %3074 = vmatpush1.bf16.msra.mxu0 %v2514
  %3075 = vmatprep.subr.bf16.mxu0 %v2517
  %3076 = vmatpush1.bf16.msra.mxu0 %v2516
  %3077 = vmatprep.mubr.bf16.mxu0 %v598
  %3078 = vmatmul.mubr.bf16.gmra.mrb[0].mxu0 %v597
  %v3079 = vpop.f32.mrb[0].mxu0
  %v3080 = vadd.f32 %v2947, %v3079
  %v3081 = vpop.f32.mrb[0].mxu0
  %v3082 = vadd.f32 %v2949, %v3081
  %v3083 = vpop.f32.mrb[0].mxu0
  %v3084 = vadd.f32 %v2951, %v3083
  %v3085 = vpop.f32.mrb[0].mxu0
  %v3086 = vadd.f32 %v2953, %v3085
  %3087 = vmatprep.mubr.bf16.mxu0 %v606
  %3088 = vmatmul.mubr.bf16.gmra.mrb[0].mxu0 %v605
  %v3089 = vpop.f32.mrb[0].mxu0
  %v3090 = vadd.f32 %v2957, %v3089
  %v3091 = vpop.f32.mrb[0].mxu0
  %v3092 = vadd.f32 %v2959, %v3091
  %v3093 = vpop.f32.mrb[0].mxu0
  %v3094 = vadd.f32 %v2961, %v3093
  %v3095 = vpop.f32.mrb[0].mxu0
  %v3096 = vadd.f32 %v2963, %v3095
  %3097 = vmatprep.mubr.bf16.mxu0 %v614
  %3098 = vmatmul.mubr.bf16.gmra.mrb[0].mxu0 %v613
  %v3099 = vpop.f32.mrb[0].mxu0
  %v3100 = vadd.f32 %v2967, %v3099
  %v3101 = vpop.f32.mrb[0].mxu0
  %v3102 = vadd.f32 %v2969, %v3101
  %v3103 = vpop.f32.mrb[0].mxu0
  %v3104 = vadd.f32 %v2971, %v3103
  %v3105 = vpop.f32.mrb[0].mxu0
  %v3106 = vadd.f32 %v2973, %v3105
  %3107 = vmatprep.mubr.bf16.mxu0 %v622
  %3108 = vmatmul.mubr.bf16.gmra.mrb[0].mxu0 %v621
  %v3109 = vpop.f32.mrb[0].mxu0
  %v3110 = vadd.f32 %v2977, %v3109
  %v3111 = vpop.f32.mrb[0].mxu0
  %v3112 = vadd.f32 %v2979, %v3111
  %v3113 = vpop.f32.mrb[0].mxu0
  %v3114 = vadd.f32 %v2981, %v3113
  %v3115 = vpop.f32.mrb[0].mxu0
  %v3116 = vadd.f32 %v2983, %v3115
  %3117 = vmatprep.mubr.bf16.mxu0 %v630
  %3118 = vmatmul.mubr.bf16.gmra.mrb[0].mxu0 %v629
  %v3119 = vpop.f32.mrb[0].mxu0
  %v3120 = vadd.f32 %v2987, %v3119
  %v3121 = vpop.f32.mrb[0].mxu0
  %v3122 = vadd.f32 %v2989, %v3121
  %v3123 = vpop.f32.mrb[0].mxu0
  %v3124 = vadd.f32 %v2991, %v3123
  %v3125 = vpop.f32.mrb[0].mxu0
  %v3126 = vadd.f32 %v2993, %v3125
  %3127 = vmatprep.mubr.bf16.mxu0 %v638
  %3128 = vmatmul.mubr.bf16.gmra.mrb[0].mxu0 %v637
  %v3129 = vpop.f32.mrb[0].mxu0
  %v3130 = vadd.f32 %v2997, %v3129
  %v3131 = vpop.f32.mrb[0].mxu0
  %v3132 = vadd.f32 %v2999, %v3131
  %v3133 = vpop.f32.mrb[0].mxu0
  %v3134 = vadd.f32 %v3001, %v3133
  %v3135 = vpop.f32.mrb[0].mxu0
  %v3136 = vadd.f32 %v3003, %v3135
  %3137 = vmatprep.mubr.bf16.mxu0 %v646
  %3138 = vmatmul.mubr.bf16.gmra.mrb[0].mxu0 %v645
  %v3139 = vpop.f32.mrb[0].mxu0
  %v3140 = vadd.f32 %v3007, %v3139
  %v3141 = vpop.f32.mrb[0].mxu0
  %v3142 = vadd.f32 %v3009, %v3141
  %v3143 = vpop.f32.mrb[0].mxu0
  %v3144 = vadd.f32 %v3011, %v3143
  %v3145 = vpop.f32.mrb[0].mxu0
  %v3146 = vadd.f32 %v3013, %v3145
  %3147 = vmatprep.mubr.bf16.mxu0 %v654
  %3148 = vmatmul.mubr.bf16.gmra.mrb[0].mxu0 %v653
  %v3149 = vpop.f32.mrb[0].mxu0
  %v3150 = vadd.f32 %v3017, %v3149
  %v3151 = vpop.f32.mrb[0].mxu0
  %v3152 = vadd.f32 %v3019, %v3151
  %v3153 = vpop.f32.mrb[0].mxu0
  %v3154 = vadd.f32 %v3021, %v3153
  %v3155 = vpop.f32.mrb[0].mxu0
  %v3156 = vadd.f32 %v3023, %v3155
  %3157 = vmatprep.mubr.bf16.mxu0 %v662
  %3158 = vmatmul.mubr.bf16.gmra.mrb[0].mxu0 %v661
  %v3159 = vpop.f32.mrb[0].mxu0
  %v3160 = vadd.f32 %v3027, %v3159
  %v3161 = vpop.f32.mrb[0].mxu0
  %v3162 = vadd.f32 %v3029, %v3161
  %v3163 = vpop.f32.mrb[0].mxu0
  %v3164 = vadd.f32 %v3031, %v3163
  %v3165 = vpop.f32.mrb[0].mxu0
  %v3166 = vadd.f32 %v3033, %v3165
  %3167 = vmatprep.mubr.bf16.mxu0 %v670
  %3168 = vmatmul.mubr.bf16.gmra.mrb[0].mxu0 %v669
  %v3169 = vpop.f32.mrb[0].mxu0
  %v3170 = vadd.f32 %v3037, %v3169
  %v3171 = vpop.f32.mrb[0].mxu0
  %v3172 = vadd.f32 %v3039, %v3171
  %v3173 = vpop.f32.mrb[0].mxu0
  %v3174 = vadd.f32 %v3041, %v3173
  %v3175 = vpop.f32.mrb[0].mxu0
  %v3176 = vadd.f32 %v3043, %v3175
  %3177 = vdwg.mxu0
  %s3178 = scalar_lea.vmem %s1, 2048
  %v3179 = vld [vmem:[%s3178] sm:$0xff]
  %v3180 = vld [vmem:[%s3178 + $0x8] sm:$0xff]
  %v3181 = vld [vmem:[%s3178 + $0x10] sm:$0xff]
  %v3182 = vld [vmem:[%s3178 + $0x18] sm:$0xff]
  %v3183 = vld [vmem:[%s3178 + $0x20] sm:$0xff]
  %v3184 = vld [vmem:[%s3178 + $0x28] sm:$0xff]
  %v3185 = vld [vmem:[%s3178 + $0x30] sm:$0xff]
  %v3186 = vld [vmem:[%s3178 + $0x38] sm:$0xff]
  %v3187 = vld [vmem:[%s3178 + $0x40] sm:$0xff]
  %v3188 = vld [vmem:[%s3178 + $0x48] sm:$0xff]
  %v3189 = vld [vmem:[%s3178 + $0x50] sm:$0xff]
  %v3190 = vld [vmem:[%s3178 + $0x58] sm:$0xff]
  %v3191 = vld [vmem:[%s3178 + $0x60] sm:$0xff]
  %v3192 = vld [vmem:[%s3178 + $0x68] sm:$0xff]
  %v3193 = vld [vmem:[%s3178 + $0x70] sm:$0xff]
  %v3194 = vld [vmem:[%s3178 + $0x78] sm:$0xff]
  %v3195 = vld [vmem:[%s3178 + $0x80] sm:$0xff]
  %v3196 = vld [vmem:[%s3178 + $0x88] sm:$0xff]
  %v3197 = vld [vmem:[%s3178 + $0x90] sm:$0xff]
  %v3198 = vld [vmem:[%s3178 + $0x98] sm:$0xff]
  %v3199 = vld [vmem:[%s3178 + $0xa0] sm:$0xff]
  %v3200 = vld [vmem:[%s3178 + $0xa8] sm:$0xff]
  %v3201 = vld [vmem:[%s3178 + $0xb0] sm:$0xff]
  %v3202 = vld [vmem:[%s3178 + $0xb8] sm:$0xff]
  %v3203 = vld [vmem:[%s3178 + $0xc0] sm:$0xff]
  %v3204 = vld [vmem:[%s3178 + $0xc8] sm:$0xff]
  %v3205 = vld [vmem:[%s3178 + $0xd0] sm:$0xff]
  %v3206 = vld [vmem:[%s3178 + $0xd8] sm:$0xff]
  %v3207 = vld [vmem:[%s3178 + $0xe0] sm:$0xff]
  %v3208 = vld [vmem:[%s3178 + $0xe8] sm:$0xff]
  %v3209 = vld [vmem:[%s3178 + $0xf0] sm:$0xff]
  %v3210 = vld [vmem:[%s3178 + $0xf8] sm:$0xff]
  %v3211 = vld [vmem:[%s3178 + $0x100] sm:$0xff]
  %v3212 = vld [vmem:[%s3178 + $0x108] sm:$0xff]
  %v3213 = vld [vmem:[%s3178 + $0x110] sm:$0xff]
  %v3214 = vld [vmem:[%s3178 + $0x118] sm:$0xff]
  %v3215 = vld [vmem:[%s3178 + $0x120] sm:$0xff]
  %v3216 = vld [vmem:[%s3178 + $0x128] sm:$0xff]
  %v3217 = vld [vmem:[%s3178 + $0x130] sm:$0xff]
  %v3218 = vld [vmem:[%s3178 + $0x138] sm:$0xff]
  %v3219 = vld [vmem:[%s3178 + $0x140] sm:$0xff]
  %v3220 = vld [vmem:[%s3178 + $0x148] sm:$0xff]
  %v3221 = vld [vmem:[%s3178 + $0x150] sm:$0xff]
  %v3222 = vld [vmem:[%s3178 + $0x158] sm:$0xff]
  %v3223 = vld [vmem:[%s3178 + $0x160] sm:$0xff]
  %v3224 = vld [vmem:[%s3178 + $0x168] sm:$0xff]
  %v3225 = vld [vmem:[%s3178 + $0x170] sm:$0xff]
  %v3226 = vld [vmem:[%s3178 + $0x178] sm:$0xff]
  %v3227 = vld [vmem:[%s3178 + $0x180] sm:$0xff]
  %v3228 = vld [vmem:[%s3178 + $0x188] sm:$0xff]
  %v3229 = vld [vmem:[%s3178 + $0x190] sm:$0xff]
  %v3230 = vld [vmem:[%s3178 + $0x198] sm:$0xff]
  %v3231 = vld [vmem:[%s3178 + $0x1a0] sm:$0xff]
  %v3232 = vld [vmem:[%s3178 + $0x1a8] sm:$0xff]
  %v3233 = vld [vmem:[%s3178 + $0x1b0] sm:$0xff]
  %v3234 = vld [vmem:[%s3178 + $0x1b8] sm:$0xff]
  %v3235 = vld [vmem:[%s3178 + $0x1c0] sm:$0xff]
  %v3236 = vld [vmem:[%s3178 + $0x1c8] sm:$0xff]
  %v3237 = vld [vmem:[%s3178 + $0x1d0] sm:$0xff]
  %v3238 = vld [vmem:[%s3178 + $0x1d8] sm:$0xff]
  %v3239 = vld [vmem:[%s3178 + $0x1e0] sm:$0xff]
  %v3240 = vld [vmem:[%s3178 + $0x1e8] sm:$0xff]
  %v3241 = vld [vmem:[%s3178 + $0x1f0] sm:$0xff]
  %v3242 = vld [vmem:[%s3178 + $0x1f8] sm:$0xff]
  %v3243 = vld [vmem:[%s3178 + $0x200] sm:$0xff]
  %v3244 = vld [vmem:[%s3178 + $0x208] sm:$0xff]
  %v3245 = vld [vmem:[%s3178 + $0x210] sm:$0xff]
  %v3246 = vld [vmem:[%s3178 + $0x218] sm:$0xff]
  %v3247 = vld [vmem:[%s3178 + $0x220] sm:$0xff]
  %v3248 = vld [vmem:[%s3178 + $0x228] sm:$0xff]
  %v3249 = vld [vmem:[%s3178 + $0x230] sm:$0xff]
  %v3250 = vld [vmem:[%s3178 + $0x238] sm:$0xff]
  %v3251 = vld [vmem:[%s3178 + $0x240] sm:$0xff]
  %v3252 = vld [vmem:[%s3178 + $0x248] sm:$0xff]
  %v3253 = vld [vmem:[%s3178 + $0x250] sm:$0xff]
  %v3254 = vld [vmem:[%s3178 + $0x258] sm:$0xff]
  %v3255 = vld [vmem:[%s3178 + $0x260] sm:$0xff]
  %v3256 = vld [vmem:[%s3178 + $0x268] sm:$0xff]
  %v3257 = vld [vmem:[%s3178 + $0x270] sm:$0xff]
  %v3258 = vld [vmem:[%s3178 + $0x278] sm:$0xff]
  %v3259 = vld [vmem:[%s3178 + $0x280] sm:$0xff]
  %v3260 = vld [vmem:[%s3178 + $0x288] sm:$0xff]
  %v3261 = vld [vmem:[%s3178 + $0x290] sm:$0xff]
  %v3262 = vld [vmem:[%s3178 + $0x298] sm:$0xff]
  %v3263 = vld [vmem:[%s3178 + $0x2a0] sm:$0xff]
  %v3264 = vld [vmem:[%s3178 + $0x2a8] sm:$0xff]
  %v3265 = vld [vmem:[%s3178 + $0x2b0] sm:$0xff]
  %v3266 = vld [vmem:[%s3178 + $0x2b8] sm:$0xff]
  %v3267 = vld [vmem:[%s3178 + $0x2c0] sm:$0xff]
  %v3268 = vld [vmem:[%s3178 + $0x2c8] sm:$0xff]
  %v3269 = vld [vmem:[%s3178 + $0x2d0] sm:$0xff]
  %v3270 = vld [vmem:[%s3178 + $0x2d8] sm:$0xff]
  %v3271 = vld [vmem:[%s3178 + $0x2e0] sm:$0xff]
  %v3272 = vld [vmem:[%s3178 + $0x2e8] sm:$0xff]
  %v3273 = vld [vmem:[%s3178 + $0x2f0] sm:$0xff]
  %v3274 = vld [vmem:[%s3178 + $0x2f8] sm:$0xff]
  %v3275 = vld [vmem:[%s3178 + $0x300] sm:$0xff]
  %v3276 = vld [vmem:[%s3178 + $0x308] sm:$0xff]
  %v3277 = vld [vmem:[%s3178 + $0x310] sm:$0xff]
  %v3278 = vld [vmem:[%s3178 + $0x318] sm:$0xff]
  %v3279 = vld [vmem:[%s3178 + $0x320] sm:$0xff]
  %v3280 = vld [vmem:[%s3178 + $0x328] sm:$0xff]
  %v3281 = vld [vmem:[%s3178 + $0x330] sm:$0xff]
  %v3282 = vld [vmem:[%s3178 + $0x338] sm:$0xff]
  %v3283 = vld [vmem:[%s3178 + $0x340] sm:$0xff]
  %v3284 = vld [vmem:[%s3178 + $0x348] sm:$0xff]
  %v3285 = vld [vmem:[%s3178 + $0x350] sm:$0xff]
  %v3286 = vld [vmem:[%s3178 + $0x358] sm:$0xff]
  %v3287 = vld [vmem:[%s3178 + $0x360] sm:$0xff]
  %v3288 = vld [vmem:[%s3178 + $0x368] sm:$0xff]
  %v3289 = vld [vmem:[%s3178 + $0x370] sm:$0xff]
  %v3290 = vld [vmem:[%s3178 + $0x378] sm:$0xff]
  %v3291 = vld [vmem:[%s3178 + $0x380] sm:$0xff]
  %v3292 = vld [vmem:[%s3178 + $0x388] sm:$0xff]
  %v3293 = vld [vmem:[%s3178 + $0x390] sm:$0xff]
  %v3294 = vld [vmem:[%s3178 + $0x398] sm:$0xff]
  %v3295 = vld [vmem:[%s3178 + $0x3a0] sm:$0xff]
  %v3296 = vld [vmem:[%s3178 + $0x3a8] sm:$0xff]
  %v3297 = vld [vmem:[%s3178 + $0x3b0] sm:$0xff]
  %v3298 = vld [vmem:[%s3178 + $0x3b8] sm:$0xff]
  %v3299 = vld [vmem:[%s3178 + $0x3c0] sm:$0xff]
  %v3300 = vld [vmem:[%s3178 + $0x3c8] sm:$0xff]
  %v3301 = vld [vmem:[%s3178 + $0x3d0] sm:$0xff]
  %v3302 = vld [vmem:[%s3178 + $0x3d8] sm:$0xff]
  %v3303 = vld [vmem:[%s3178 + $0x3e0] sm:$0xff]
  %v3304 = vld [vmem:[%s3178 + $0x3e8] sm:$0xff]
  %v3305 = vld [vmem:[%s3178 + $0x3f0] sm:$0xff]
  %v3306 = vld [vmem:[%s3178 + $0x3f8] sm:$0xff]
  %v3435 = vunpack.c.l.b16 %v3179
  %v3436 = vunpack.c.h.b16 %v3179
  %v3437 = vunpack.c.l.b16 %v3180
  %v3438 = vunpack.c.h.b16 %v3180
  %v3439 = vunpack.c.l.b16 %v3181
  %v3440 = vunpack.c.h.b16 %v3181
  %v3441 = vunpack.c.l.b16 %v3182
  %v3442 = vunpack.c.h.b16 %v3182
  %v3443 = vunpack.c.l.b16 %v3183
  %v3444 = vunpack.c.h.b16 %v3183
  %v3445 = vunpack.c.l.b16 %v3184
  %v3446 = vunpack.c.h.b16 %v3184
  %v3447 = vunpack.c.l.b16 %v3185
  %v3448 = vunpack.c.h.b16 %v3185
  %v3449 = vunpack.c.l.b16 %v3186
  %v3450 = vunpack.c.h.b16 %v3186
  %v3451 = vunpack.c.l.b16 %v3187
  %v3452 = vunpack.c.h.b16 %v3187
  %v3453 = vunpack.c.l.b16 %v3188
  %v3454 = vunpack.c.h.b16 %v3188
  %v3455 = vunpack.c.l.b16 %v3189
  %v3456 = vunpack.c.h.b16 %v3189
  %v3457 = vunpack.c.l.b16 %v3190
  %v3458 = vunpack.c.h.b16 %v3190
  %v3459 = vunpack.c.l.b16 %v3191
  %v3460 = vunpack.c.h.b16 %v3191
  %v3461 = vunpack.c.l.b16 %v3192
  %v3462 = vunpack.c.h.b16 %v3192
  %v3463 = vunpack.c.l.b16 %v3193
  %v3464 = vunpack.c.h.b16 %v3193
  %v3465 = vunpack.c.l.b16 %v3194
  %v3466 = vunpack.c.h.b16 %v3194
  %v3467 = vunpack.c.l.b16 %v3195
  %v3468 = vunpack.c.h.b16 %v3195
  %v3469 = vunpack.c.l.b16 %v3196
  %v3470 = vunpack.c.h.b16 %v3196
  %v3471 = vunpack.c.l.b16 %v3197
  %v3472 = vunpack.c.h.b16 %v3197
  %v3473 = vunpack.c.l.b16 %v3198
  %v3474 = vunpack.c.h.b16 %v3198
  %v3475 = vunpack.c.l.b16 %v3199
  %v3476 = vunpack.c.h.b16 %v3199
  %v3477 = vunpack.c.l.b16 %v3200
  %v3478 = vunpack.c.h.b16 %v3200
  %v3479 = vunpack.c.l.b16 %v3201
  %v3480 = vunpack.c.h.b16 %v3201
  %v3481 = vunpack.c.l.b16 %v3202
  %v3482 = vunpack.c.h.b16 %v3202
  %v3483 = vunpack.c.l.b16 %v3203
  %v3484 = vunpack.c.h.b16 %v3203
  %v3485 = vunpack.c.l.b16 %v3204
  %v3486 = vunpack.c.h.b16 %v3204
  %v3487 = vunpack.c.l.b16 %v3205
  %v3488 = vunpack.c.h.b16 %v3205
  %v3489 = vunpack.c.l.b16 %v3206
  %v3490 = vunpack.c.h.b16 %v3206
  %v3491 = vunpack.c.l.b16 %v3207
  %v3492 = vunpack.c.h.b16 %v3207
  %v3493 = vunpack.c.l.b16 %v3208
  %v3494 = vunpack.c.h.b16 %v3208
  %v3495 = vunpack.c.l.b16 %v3209
  %v3496 = vunpack.c.h.b16 %v3209
  %v3497 = vunpack.c.l.b16 %v3210
  %v3498 = vunpack.c.h.b16 %v3210
  %v3499 = vunpack.c.l.b16 %v3211
  %v3500 = vunpack.c.h.b16 %v3211
  %v3501 = vunpack.c.l.b16 %v3212
  %v3502 = vunpack.c.h.b16 %v3212
  %v3503 = vunpack.c.l.b16 %v3213
  %v3504 = vunpack.c.h.b16 %v3213
  %v3505 = vunpack.c.l.b16 %v3214
  %v3506 = vunpack.c.h.b16 %v3214
  %v3507 = vunpack.c.l.b16 %v3215
  %v3508 = vunpack.c.h.b16 %v3215
  %v3509 = vunpack.c.l.b16 %v3216
  %v3510 = vunpack.c.h.b16 %v3216
  %v3511 = vunpack.c.l.b16 %v3217
  %v3512 = vunpack.c.h.b16 %v3217
  %v3513 = vunpack.c.l.b16 %v3218
  %v3514 = vunpack.c.h.b16 %v3218
  %v3515 = vunpack.c.l.b16 %v3219
  %v3516 = vunpack.c.h.b16 %v3219
  %v3517 = vunpack.c.l.b16 %v3220
  %v3518 = vunpack.c.h.b16 %v3220
  %v3519 = vunpack.c.l.b16 %v3221
  %v3520 = vunpack.c.h.b16 %v3221
  %v3521 = vunpack.c.l.b16 %v3222
  %v3522 = vunpack.c.h.b16 %v3222
  %v3523 = vunpack.c.l.b16 %v3223
  %v3524 = vunpack.c.h.b16 %v3223
  %v3525 = vunpack.c.l.b16 %v3224
  %v3526 = vunpack.c.h.b16 %v3224
  %v3527 = vunpack.c.l.b16 %v3225
  %v3528 = vunpack.c.h.b16 %v3225
  %v3529 = vunpack.c.l.b16 %v3226
  %v3530 = vunpack.c.h.b16 %v3226
  %v3531 = vunpack.c.l.b16 %v3227
  %v3532 = vunpack.c.h.b16 %v3227
  %v3533 = vunpack.c.l.b16 %v3228
  %v3534 = vunpack.c.h.b16 %v3228
  %v3535 = vunpack.c.l.b16 %v3229
  %v3536 = vunpack.c.h.b16 %v3229
  %v3537 = vunpack.c.l.b16 %v3230
  %v3538 = vunpack.c.h.b16 %v3230
  %v3539 = vunpack.c.l.b16 %v3231
  %v3540 = vunpack.c.h.b16 %v3231
  %v3541 = vunpack.c.l.b16 %v3232
  %v3542 = vunpack.c.h.b16 %v3232
  %v3543 = vunpack.c.l.b16 %v3233
  %v3544 = vunpack.c.h.b16 %v3233
  %v3545 = vunpack.c.l.b16 %v3234
  %v3546 = vunpack.c.h.b16 %v3234
  %v3547 = vunpack.c.l.b16 %v3235
  %v3548 = vunpack.c.h.b16 %v3235
  %v3549 = vunpack.c.l.b16 %v3236
  %v3550 = vunpack.c.h.b16 %v3236
  %v3551 = vunpack.c.l.b16 %v3237
  %v3552 = vunpack.c.h.b16 %v3237
  %v3553 = vunpack.c.l.b16 %v3238
  %v3554 = vunpack.c.h.b16 %v3238
  %v3555 = vunpack.c.l.b16 %v3239
  %v3556 = vunpack.c.h.b16 %v3239
  %v3557 = vunpack.c.l.b16 %v3240
  %v3558 = vunpack.c.h.b16 %v3240
  %v3559 = vunpack.c.l.b16 %v3241
  %v3560 = vunpack.c.h.b16 %v3241
  %v3561 = vunpack.c.l.b16 %v3242
  %v3562 = vunpack.c.h.b16 %v3242
  %v3563 = vunpack.c.l.b16 %v3243
  %v3564 = vunpack.c.h.b16 %v3243
  %v3565 = vunpack.c.l.b16 %v3244
  %v3566 = vunpack.c.h.b16 %v3244
  %v3567 = vunpack.c.l.b16 %v3245
  %v3568 = vunpack.c.h.b16 %v3245
  %v3569 = vunpack.c.l.b16 %v3246
  %v3570 = vunpack.c.h.b16 %v3246
  %v3571 = vunpack.c.l.b16 %v3247
  %v3572 = vunpack.c.h.b16 %v3247
  %v3573 = vunpack.c.l.b16 %v3248
  %v3574 = vunpack.c.h.b16 %v3248
  %v3575 = vunpack.c.l.b16 %v3249
  %v3576 = vunpack.c.h.b16 %v3249
  %v3577 = vunpack.c.l.b16 %v3250
  %v3578 = vunpack.c.h.b16 %v3250
  %v3579 = vunpack.c.l.b16 %v3251
  %v3580 = vunpack.c.h.b16 %v3251
  %v3581 = vunpack.c.l.b16 %v3252
  %v3582 = vunpack.c.h.b16 %v3252
  %v3583 = vunpack.c.l.b16 %v3253
  %v3584 = vunpack.c.h.b16 %v3253
  %v3585 = vunpack.c.l.b16 %v3254
  %v3586 = vunpack.c.h.b16 %v3254
  %v3587 = vunpack.c.l.b16 %v3255
  %v3588 = vunpack.c.h.b16 %v3255
  %v3589 = vunpack.c.l.b16 %v3256
  %v3590 = vunpack.c.h.b16 %v3256
  %v3591 = vunpack.c.l.b16 %v3257
  %v3592 = vunpack.c.h.b16 %v3257
  %v3593 = vunpack.c.l.b16 %v3258
  %v3594 = vunpack.c.h.b16 %v3258
  %v3595 = vunpack.c.l.b16 %v3259
  %v3596 = vunpack.c.h.b16 %v3259
  %v3597 = vunpack.c.l.b16 %v3260
  %v3598 = vunpack.c.h.b16 %v3260
  %v3599 = vunpack.c.l.b16 %v3261
  %v3600 = vunpack.c.h.b16 %v3261
  %v3601 = vunpack.c.l.b16 %v3262
  %v3602 = vunpack.c.h.b16 %v3262
  %v3603 = vunpack.c.l.b16 %v3263
  %v3604 = vunpack.c.h.b16 %v3263
  %v3605 = vunpack.c.l.b16 %v3264
  %v3606 = vunpack.c.h.b16 %v3264
  %v3607 = vunpack.c.l.b16 %v3265
  %v3608 = vunpack.c.h.b16 %v3265
  %v3609 = vunpack.c.l.b16 %v3266
  %v3610 = vunpack.c.h.b16 %v3266
  %v3611 = vunpack.c.l.b16 %v3267
  %v3612 = vunpack.c.h.b16 %v3267
  %v3613 = vunpack.c.l.b16 %v3268
  %v3614 = vunpack.c.h.b16 %v3268
  %v3615 = vunpack.c.l.b16 %v3269
  %v3616 = vunpack.c.h.b16 %v3269
  %v3617 = vunpack.c.l.b16 %v3270
  %v3618 = vunpack.c.h.b16 %v3270
  %v3619 = vunpack.c.l.b16 %v3271
  %v3620 = vunpack.c.h.b16 %v3271
  %v3621 = vunpack.c.l.b16 %v3272
  %v3622 = vunpack.c.h.b16 %v3272
  %v3623 = vunpack.c.l.b16 %v3273
  %v3624 = vunpack.c.h.b16 %v3273
  %v3625 = vunpack.c.l.b16 %v3274
  %v3626 = vunpack.c.h.b16 %v3274
  %v3627 = vunpack.c.l.b16 %v3275
  %v3628 = vunpack.c.h.b16 %v3275
  %v3629 = vunpack.c.l.b16 %v3276
  %v3630 = vunpack.c.h.b16 %v3276
  %v3631 = vunpack.c.l.b16 %v3277
  %v3632 = vunpack.c.h.b16 %v3277
  %v3633 = vunpack.c.l.b16 %v3278
  %v3634 = vunpack.c.h.b16 %v3278
  %v3635 = vunpack.c.l.b16 %v3279
  %v3636 = vunpack.c.h.b16 %v3279
  %v3637 = vunpack.c.l.b16 %v3280
  %v3638 = vunpack.c.h.b16 %v3280
  %v3639 = vunpack.c.l.b16 %v3281
  %v3640 = vunpack.c.h.b16 %v3281
  %v3641 = vunpack.c.l.b16 %v3282
  %v3642 = vunpack.c.h.b16 %v3282
  %v3643 = vunpack.c.l.b16 %v3283
  %v3644 = vunpack.c.h.b16 %v3283
  %v3645 = vunpack.c.l.b16 %v3284
  %v3646 = vunpack.c.h.b16 %v3284
  %v3647 = vunpack.c.l.b16 %v3285
  %v3648 = vunpack.c.h.b16 %v3285
  %v3649 = vunpack.c.l.b16 %v3286
  %v3650 = vunpack.c.h.b16 %v3286
  %v3651 = vunpack.c.l.b16 %v3287
  %v3652 = vunpack.c.h.b16 %v3287
  %v3653 = vunpack.c.l.b16 %v3288
  %v3654 = vunpack.c.h.b16 %v3288
  %v3655 = vunpack.c.l.b16 %v3289
  %v3656 = vunpack.c.h.b16 %v3289
  %v3657 = vunpack.c.l.b16 %v3290
  %v3658 = vunpack.c.h.b16 %v3290
  %v3659 = vunpack.c.l.b16 %v3291
  %v3660 = vunpack.c.h.b16 %v3291
  %v3661 = vunpack.c.l.b16 %v3292
  %v3662 = vunpack.c.h.b16 %v3292
  %v3663 = vunpack.c.l.b16 %v3293
  %v3664 = vunpack.c.h.b16 %v3293
  %v3665 = vunpack.c.l.b16 %v3294
  %v3666 = vunpack.c.h.b16 %v3294
  %v3667 = vunpack.c.l.b16 %v3295
  %v3668 = vunpack.c.h.b16 %v3295
  %v3669 = vunpack.c.l.b16 %v3296
  %v3670 = vunpack.c.h.b16 %v3296
  %v3671 = vunpack.c.l.b16 %v3297
  %v3672 = vunpack.c.h.b16 %v3297
  %v3673 = vunpack.c.l.b16 %v3298
  %v3674 = vunpack.c.h.b16 %v3298
  %v3675 = vunpack.c.l.b16 %v3299
  %v3676 = vunpack.c.h.b16 %v3299
  %v3677 = vunpack.c.l.b16 %v3300
  %v3678 = vunpack.c.h.b16 %v3300
  %v3679 = vunpack.c.l.b16 %v3301
  %v3680 = vunpack.c.h.b16 %v3301
  %v3681 = vunpack.c.l.b16 %v3302
  %v3682 = vunpack.c.h.b16 %v3302
  %v3683 = vunpack.c.l.b16 %v3303
  %v3684 = vunpack.c.h.b16 %v3303
  %v3685 = vunpack.c.l.b16 %v3304
  %v3686 = vunpack.c.h.b16 %v3304
  %v3687 = vunpack.c.l.b16 %v3305
  %v3688 = vunpack.c.h.b16 %v3305
  %v3689 = vunpack.c.l.b16 %v3306
  %v3690 = vunpack.c.h.b16 %v3306
  %v3691 = vpack.c.b16 %v3437, %v3435
  %v3692 = vpack.c.b16 %v3438, %v3436
  %v3693 = vpack.c.b16 %v3441, %v3439
  %v3694 = vpack.c.b16 %v3442, %v3440
  %v3695 = vpack.c.b16 %v3445, %v3443
  %v3696 = vpack.c.b16 %v3446, %v3444
  %v3697 = vpack.c.b16 %v3449, %v3447
  %v3698 = vpack.c.b16 %v3450, %v3448
  %v3699 = vpack.c.b16 %v3453, %v3451
  %v3700 = vpack.c.b16 %v3454, %v3452
  %v3701 = vpack.c.b16 %v3457, %v3455
  %v3702 = vpack.c.b16 %v3458, %v3456
  %v3703 = vpack.c.b16 %v3461, %v3459
  %v3704 = vpack.c.b16 %v3462, %v3460
  %v3705 = vpack.c.b16 %v3465, %v3463
  %v3706 = vpack.c.b16 %v3466, %v3464
  %v3707 = vpack.c.b16 %v3469, %v3467
  %v3708 = vpack.c.b16 %v3470, %v3468
  %v3709 = vpack.c.b16 %v3473, %v3471
  %v3710 = vpack.c.b16 %v3474, %v3472
  %v3711 = vpack.c.b16 %v3477, %v3475
  %v3712 = vpack.c.b16 %v3478, %v3476
  %v3713 = vpack.c.b16 %v3481, %v3479
  %v3714 = vpack.c.b16 %v3482, %v3480
  %v3715 = vpack.c.b16 %v3485, %v3483
  %v3716 = vpack.c.b16 %v3486, %v3484
  %v3717 = vpack.c.b16 %v3489, %v3487
  %v3718 = vpack.c.b16 %v3490, %v3488
  %v3719 = vpack.c.b16 %v3493, %v3491
  %v3720 = vpack.c.b16 %v3494, %v3492
  %v3721 = vpack.c.b16 %v3497, %v3495
  %v3722 = vpack.c.b16 %v3498, %v3496
  %v3723 = vpack.c.b16 %v3501, %v3499
  %v3724 = vpack.c.b16 %v3502, %v3500
  %v3725 = vpack.c.b16 %v3505, %v3503
  %v3726 = vpack.c.b16 %v3506, %v3504
  %v3727 = vpack.c.b16 %v3509, %v3507
  %v3728 = vpack.c.b16 %v3510, %v3508
  %v3729 = vpack.c.b16 %v3513, %v3511
  %v3730 = vpack.c.b16 %v3514, %v3512
  %v3731 = vpack.c.b16 %v3517, %v3515
  %v3732 = vpack.c.b16 %v3518, %v3516
  %v3733 = vpack.c.b16 %v3521, %v3519
  %v3734 = vpack.c.b16 %v3522, %v3520
  %v3735 = vpack.c.b16 %v3525, %v3523
  %v3736 = vpack.c.b16 %v3526, %v3524
  %v3737 = vpack.c.b16 %v3529, %v3527
  %v3738 = vpack.c.b16 %v3530, %v3528
  %v3739 = vpack.c.b16 %v3533, %v3531
  %v3740 = vpack.c.b16 %v3534, %v3532
  %v3741 = vpack.c.b16 %v3537, %v3535
  %v3742 = vpack.c.b16 %v3538, %v3536
  %v3743 = vpack.c.b16 %v3541, %v3539
  %v3744 = vpack.c.b16 %v3542, %v3540
  %v3745 = vpack.c.b16 %v3545, %v3543
  %v3746 = vpack.c.b16 %v3546, %v3544
  %v3747 = vpack.c.b16 %v3549, %v3547
  %v3748 = vpack.c.b16 %v3550, %v3548
  %v3749 = vpack.c.b16 %v3553, %v3551
  %v3750 = vpack.c.b16 %v3554, %v3552
  %v3751 = vpack.c.b16 %v3557, %v3555
  %v3752 = vpack.c.b16 %v3558, %v3556
  %v3753 = vpack.c.b16 %v3561, %v3559
  %v3754 = vpack.c.b16 %v3562, %v3560
  %v3755 = vpack.c.b16 %v3565, %v3563
  %v3756 = vpack.c.b16 %v3566, %v3564
  %v3757 = vpack.c.b16 %v3569, %v3567
  %v3758 = vpack.c.b16 %v3570, %v3568
  %v3759 = vpack.c.b16 %v3573, %v3571
  %v3760 = vpack.c.b16 %v3574, %v3572
  %v3761 = vpack.c.b16 %v3577, %v3575
  %v3762 = vpack.c.b16 %v3578, %v3576
  %v3763 = vpack.c.b16 %v3581, %v3579
  %v3764 = vpack.c.b16 %v3582, %v3580
  %v3765 = vpack.c.b16 %v3585, %v3583
  %v3766 = vpack.c.b16 %v3586, %v3584
  %v3767 = vpack.c.b16 %v3589, %v3587
  %v3768 = vpack.c.b16 %v3590, %v3588
  %v3769 = vpack.c.b16 %v3593, %v3591
  %v3770 = vpack.c.b16 %v3594, %v3592
  %v3771 = vpack.c.b16 %v3597, %v3595
  %v3772 = vpack.c.b16 %v3598, %v3596
  %v3773 = vpack.c.b16 %v3601, %v3599
  %v3774 = vpack.c.b16 %v3602, %v3600
  %v3775 = vpack.c.b16 %v3605, %v3603
  %v3776 = vpack.c.b16 %v3606, %v3604
  %v3777 = vpack.c.b16 %v3609, %v3607
  %v3778 = vpack.c.b16 %v3610, %v3608
  %v3779 = vpack.c.b16 %v3613, %v3611
  %v3780 = vpack.c.b16 %v3614, %v3612
  %v3781 = vpack.c.b16 %v3617, %v3615
  %v3782 = vpack.c.b16 %v3618, %v3616
  %v3783 = vpack.c.b16 %v3621, %v3619
  %v3784 = vpack.c.b16 %v3622, %v3620
  %v3785 = vpack.c.b16 %v3625, %v3623
  %v3786 = vpack.c.b16 %v3626, %v3624
  %v3787 = vpack.c.b16 %v3629, %v3627
  %v3788 = vpack.c.b16 %v3630, %v3628
  %v3789 = vpack.c.b16 %v3633, %v3631
  %v3790 = vpack.c.b16 %v3634, %v3632
  %v3791 = vpack.c.b16 %v3637, %v3635
  %v3792 = vpack.c.b16 %v3638, %v3636
  %v3793 = vpack.c.b16 %v3641, %v3639
  %v3794 = vpack.c.b16 %v3642, %v3640
  %v3795 = vpack.c.b16 %v3645, %v3643
  %v3796 = vpack.c.b16 %v3646, %v3644
  %v3797 = vpack.c.b16 %v3649, %v3647
  %v3798 = vpack.c.b16 %v3650, %v3648
  %v3799 = vpack.c.b16 %v3653, %v3651
  %v3800 = vpack.c.b16 %v3654, %v3652
  %v3801 = vpack.c.b16 %v3657, %v3655
  %v3802 = vpack.c.b16 %v3658, %v3656
  %v3803 = vpack.c.b16 %v3661, %v3659
  %v3804 = vpack.c.b16 %v3662, %v3660
  %v3805 = vpack.c.b16 %v3665, %v3663
  %v3806 = vpack.c.b16 %v3666, %v3664
  %v3807 = vpack.c.b16 %v3669, %v3667
  %v3808 = vpack.c.b16 %v3670, %v3668
  %v3809 = vpack.c.b16 %v3673, %v3671
  %v3810 = vpack.c.b16 %v3674, %v3672
  %v3811 = vpack.c.b16 %v3677, %v3675
  %v3812 = vpack.c.b16 %v3678, %v3676
  %v3813 = vpack.c.b16 %v3681, %v3679
  %v3814 = vpack.c.b16 %v3682, %v3680
  %v3815 = vpack.c.b16 %v3685, %v3683
  %v3816 = vpack.c.b16 %v3686, %v3684
  %v3817 = vpack.c.b16 %v3689, %v3687
  %v3818 = vpack.c.b16 %v3690, %v3688
  %3947 = vmatprep.subr.bf16.mxu0 %v3692
  %3948 = vmatpush1.bf16.msra.mxu0 %v3691
  %3949 = vmatprep.subr.bf16.mxu0 %v3694
  %3950 = vmatpush1.bf16.msra.mxu0 %v3693
  %3951 = vmatprep.subr.bf16.mxu0 %v3696
  %3952 = vmatpush1.bf16.msra.mxu0 %v3695
  %3953 = vmatprep.subr.bf16.mxu0 %v3698
  %3954 = vmatpush1.bf16.msra.mxu0 %v3697
  %3955 = vmatprep.subr.bf16.mxu0 %v3700
  %3956 = vmatpush1.bf16.msra.mxu0 %v3699
  %3957 = vmatprep.subr.bf16.mxu0 %v3702
  %3958 = vmatpush1.bf16.msra.mxu0 %v3701
  %3959 = vmatprep.subr.bf16.mxu0 %v3704
  %3960 = vmatpush1.bf16.msra.mxu0 %v3703
  %3961 = vmatprep.subr.bf16.mxu0 %v3706
  %3962 = vmatpush1.bf16.msra.mxu0 %v3705
  %3963 = vmatprep.subr.bf16.mxu0 %v3708
  %3964 = vmatpush1.bf16.msra.mxu0 %v3707
  %3965 = vmatprep.subr.bf16.mxu0 %v3710
  %3966 = vmatpush1.bf16.msra.mxu0 %v3709
  %3967 = vmatprep.subr.bf16.mxu0 %v3712
  %3968 = vmatpush1.bf16.msra.mxu0 %v3711
  %3969 = vmatprep.subr.bf16.mxu0 %v3714
  %3970 = vmatpush1.bf16.msra.mxu0 %v3713
  %3971 = vmatprep.subr.bf16.mxu0 %v3716
  %3972 = vmatpush1.bf16.msra.mxu0 %v3715
  %3973 = vmatprep.subr.bf16.mxu0 %v3718
  %3974 = vmatpush1.bf16.msra.mxu0 %v3717
  %3975 = vmatprep.subr.bf16.mxu0 %v3720
  %3976 = vmatpush1.bf16.msra.mxu0 %v3719
  %3977 = vmatprep.subr.bf16.mxu0 %v3722
  %3978 = vmatpush1.bf16.msra.mxu0 %v3721
  %3979 = vmatprep.mubr.bf16.mxu0 %v592
  %3980 = vmatmul.mubr.bf16.gmra.mrb[0].mxu0 %v591
  %v3981 = vpop.f32.mrb[0].mxu0
  %v3982 = vadd.f32 0.0, %v3981
  %v3983 = vpop.f32.mrb[0].mxu0
  %v3984 = vadd.f32 0.0, %v3983
  %v3985 = vpop.f32.mrb[0].mxu0
  %v3986 = vadd.f32 0.0, %v3985
  %v3987 = vpop.f32.mrb[0].mxu0
  %v3988 = vadd.f32 0.0, %v3987
  %3989 = vmatprep.mubr.bf16.mxu0 %v600
  %3990 = vmatmul.mubr.bf16.gmra.mrb[0].mxu0 %v599
  %v3991 = vpop.f32.mrb[0].mxu0
  %v3992 = vadd.f32 0.0, %v3991
  %v3993 = vpop.f32.mrb[0].mxu0
  %v3994 = vadd.f32 0.0, %v3993
  %v3995 = vpop.f32.mrb[0].mxu0
  %v3996 = vadd.f32 0.0, %v3995
  %v3997 = vpop.f32.mrb[0].mxu0
  %v3998 = vadd.f32 0.0, %v3997
  %3999 = vmatprep.mubr.bf16.mxu0 %v608
  %4000 = vmatmul.mubr.bf16.gmra.mrb[0].mxu0 %v607
  %v4001 = vpop.f32.mrb[0].mxu0
  %v4002 = vadd.f32 0.0, %v4001
  %v4003 = vpop.f32.mrb[0].mxu0
  %v4004 = vadd.f32 0.0, %v4003
  %v4005 = vpop.f32.mrb[0].mxu0
  %v4006 = vadd.f32 0.0, %v4005
  %v4007 = vpop.f32.mrb[0].mxu0
  %v4008 = vadd.f32 0.0, %v4007
  %4009 = vmatprep.mubr.bf16.mxu0 %v616
  %4010 = vmatmul.mubr.bf16.gmra.mrb[0].mxu0 %v615
  %v4011 = vpop.f32.mrb[0].mxu0
  %v4012 = vadd.f32 0.0, %v4011
  %v4013 = vpop.f32.mrb[0].mxu0
  %v4014 = vadd.f32 0.0, %v4013
  %v4015 = vpop.f32.mrb[0].mxu0
  %v4016 = vadd.f32 0.0, %v4015
  %v4017 = vpop.f32.mrb[0].mxu0
  %v4018 = vadd.f32 0.0, %v4017
  %4019 = vmatprep.mubr.bf16.mxu0 %v624
  %4020 = vmatmul.mubr.bf16.gmra.mrb[0].mxu0 %v623
  %v4021 = vpop.f32.mrb[0].mxu0
  %v4022 = vadd.f32 0.0, %v4021
  %v4023 = vpop.f32.mrb[0].mxu0
  %v4024 = vadd.f32 0.0, %v4023
  %v4025 = vpop.f32.mrb[0].mxu0
  %v4026 = vadd.f32 0.0, %v4025
  %v4027 = vpop.f32.mrb[0].mxu0
  %v4028 = vadd.f32 0.0, %v4027
  %4029 = vmatprep.mubr.bf16.mxu0 %v632
  %4030 = vmatmul.mubr.bf16.gmra.mrb[0].mxu0 %v631
  %v4031 = vpop.f32.mrb[0].mxu0
  %v4032 = vadd.f32 0.0, %v4031
  %v4033 = vpop.f32.mrb[0].mxu0
  %v4034 = vadd.f32 0.0, %v4033
  %v4035 = vpop.f32.mrb[0].mxu0
  %v4036 = vadd.f32 0.0, %v4035
  %v4037 = vpop.f32.mrb[0].mxu0
  %v4038 = vadd.f32 0.0, %v4037
  %4039 = vmatprep.mubr.bf16.mxu0 %v640
  %4040 = vmatmul.mubr.bf16.gmra.mrb[0].mxu0 %v639
  %v4041 = vpop.f32.mrb[0].mxu0
  %v4042 = vadd.f32 0.0, %v4041
  %v4043 = vpop.f32.mrb[0].mxu0
  %v4044 = vadd.f32 0.0, %v4043
  %v4045 = vpop.f32.mrb[0].mxu0
  %v4046 = vadd.f32 0.0, %v4045
  %v4047 = vpop.f32.mrb[0].mxu0
  %v4048 = vadd.f32 0.0, %v4047
  %4049 = vmatprep.mubr.bf16.mxu0 %v648
  %4050 = vmatmul.mubr.bf16.gmra.mrb[0].mxu0 %v647
  %v4051 = vpop.f32.mrb[0].mxu0
  %v4052 = vadd.f32 0.0, %v4051
  %v4053 = vpop.f32.mrb[0].mxu0
  %v4054 = vadd.f32 0.0, %v4053
  %v4055 = vpop.f32.mrb[0].mxu0
  %v4056 = vadd.f32 0.0, %v4055
  %v4057 = vpop.f32.mrb[0].mxu0
  %v4058 = vadd.f32 0.0, %v4057
  %4059 = vmatprep.mubr.bf16.mxu0 %v656
  %4060 = vmatmul.mubr.bf16.gmra.mrb[0].mxu0 %v655
  %v4061 = vpop.f32.mrb[0].mxu0
  %v4062 = vadd.f32 0.0, %v4061
  %v4063 = vpop.f32.mrb[0].mxu0
  %v4064 = vadd.f32 0.0, %v4063
  %v4065 = vpop.f32.mrb[0].mxu0
  %v4066 = vadd.f32 0.0, %v4065
  %v4067 = vpop.f32.mrb[0].mxu0
  %v4068 = vadd.f32 0.0, %v4067
  %4069 = vmatprep.mubr.bf16.mxu0 %v664
  %4070 = vmatmul.mubr.bf16.gmra.mrb[0].mxu0 %v663
  %v4071 = vpop.f32.mrb[0].mxu0
  %v4072 = vadd.f32 0.0, %v4071
  %v4073 = vpop.f32.mrb[0].mxu0
  %v4074 = vadd.f32 0.0, %v4073
  %v4075 = vpop.f32.mrb[0].mxu0
  %v4076 = vadd.f32 0.0, %v4075
  %v4077 = vpop.f32.mrb[0].mxu0
  %v4078 = vadd.f32 0.0, %v4077
  %4079 = vdwg.mxu0
  %4080 = vmatprep.subr.bf16.mxu0 %v3724
  %4081 = vmatpush1.bf16.msra.mxu0 %v3723
  %4082 = vmatprep.subr.bf16.mxu0 %v3726
  %4083 = vmatpush1.bf16.msra.mxu0 %v3725
  %4084 = vmatprep.subr.bf16.mxu0 %v3728
  %4085 = vmatpush1.bf16.msra.mxu0 %v3727
  %4086 = vmatprep.subr.bf16.mxu0 %v3730
  %4087 = vmatpush1.bf16.msra.mxu0 %v3729
  %4088 = vmatprep.subr.bf16.mxu0 %v3732
  %4089 = vmatpush1.bf16.msra.mxu0 %v3731
  %4090 = vmatprep.subr.bf16.mxu0 %v3734
  %4091 = vmatpush1.bf16.msra.mxu0 %v3733
  %4092 = vmatprep.subr.bf16.mxu0 %v3736
  %4093 = vmatpush1.bf16.msra.mxu0 %v3735
  %4094 = vmatprep.subr.bf16.mxu0 %v3738
  %4095 = vmatpush1.bf16.msra.mxu0 %v3737
  %4096 = vmatprep.subr.bf16.mxu0 %v3740
  %4097 = vmatpush1.bf16.msra.mxu0 %v3739
  %4098 = vmatprep.subr.bf16.mxu0 %v3742
  %4099 = vmatpush1.bf16.msra.mxu0 %v3741
  %4100 = vmatprep.subr.bf16.mxu0 %v3744
  %4101 = vmatpush1.bf16.msra.mxu0 %v3743
  %4102 = vmatprep.subr.bf16.mxu0 %v3746
  %4103 = vmatpush1.bf16.msra.mxu0 %v3745
  %4104 = vmatprep.subr.bf16.mxu0 %v3748
  %4105 = vmatpush1.bf16.msra.mxu0 %v3747
  %4106 = vmatprep.subr.bf16.mxu0 %v3750
  %4107 = vmatpush1.bf16.msra.mxu0 %v3749
  %4108 = vmatprep.subr.bf16.mxu0 %v3752
  %4109 = vmatpush1.bf16.msra.mxu0 %v3751
  %4110 = vmatprep.subr.bf16.mxu0 %v3754
  %4111 = vmatpush1.bf16.msra.mxu0 %v3753
  %4112 = vmatprep.mubr.bf16.mxu0 %v594
  %4113 = vmatmul.mubr.bf16.gmra.mrb[0].mxu0 %v593
  %v4114 = vpop.f32.mrb[0].mxu0
  %v4115 = vadd.f32 %v3982, %v4114
  %v4116 = vpop.f32.mrb[0].mxu0
  %v4117 = vadd.f32 %v3984, %v4116
  %v4118 = vpop.f32.mrb[0].mxu0
  %v4119 = vadd.f32 %v3986, %v4118
  %v4120 = vpop.f32.mrb[0].mxu0
  %v4121 = vadd.f32 %v3988, %v4120
  %4122 = vmatprep.mubr.bf16.mxu0 %v602
  %4123 = vmatmul.mubr.bf16.gmra.mrb[0].mxu0 %v601
  %v4124 = vpop.f32.mrb[0].mxu0
  %v4125 = vadd.f32 %v3992, %v4124
  %v4126 = vpop.f32.mrb[0].mxu0
  %v4127 = vadd.f32 %v3994, %v4126
  %v4128 = vpop.f32.mrb[0].mxu0
  %v4129 = vadd.f32 %v3996, %v4128
  %v4130 = vpop.f32.mrb[0].mxu0
  %v4131 = vadd.f32 %v3998, %v4130
  %4132 = vmatprep.mubr.bf16.mxu0 %v610
  %4133 = vmatmul.mubr.bf16.gmra.mrb[0].mxu0 %v609
  %v4134 = vpop.f32.mrb[0].mxu0
  %v4135 = vadd.f32 %v4002, %v4134
  %v4136 = vpop.f32.mrb[0].mxu0
  %v4137 = vadd.f32 %v4004, %v4136
  %v4138 = vpop.f32.mrb[0].mxu0
  %v4139 = vadd.f32 %v4006, %v4138
  %v4140 = vpop.f32.mrb[0].mxu0
  %v4141 = vadd.f32 %v4008, %v4140
  %4142 = vmatprep.mubr.bf16.mxu0 %v618
  %4143 = vmatmul.mubr.bf16.gmra.mrb[0].mxu0 %v617
  %v4144 = vpop.f32.mrb[0].mxu0
  %v4145 = vadd.f32 %v4012, %v4144
  %v4146 = vpop.f32.mrb[0].mxu0
  %v4147 = vadd.f32 %v4014, %v4146
  %v4148 = vpop.f32.mrb[0].mxu0
  %v4149 = vadd.f32 %v4016, %v4148
  %v4150 = vpop.f32.mrb[0].mxu0
  %v4151 = vadd.f32 %v4018, %v4150
  %4152 = vmatprep.mubr.bf16.mxu0 %v626
  %4153 = vmatmul.mubr.bf16.gmra.mrb[0].mxu0 %v625
  %v4154 = vpop.f32.mrb[0].mxu0
  %v4155 = vadd.f32 %v4022, %v4154
  %v4156 = vpop.f32.mrb[0].mxu0
  %v4157 = vadd.f32 %v4024, %v4156
  %v4158 = vpop.f32.mrb[0].mxu0
  %v4159 = vadd.f32 %v4026, %v4158
  %v4160 = vpop.f32.mrb[0].mxu0
  %v4161 = vadd.f32 %v4028, %v4160
  %4162 = vmatprep.mubr.bf16.mxu0 %v634
  %4163 = vmatmul.mubr.bf16.gmra.mrb[0].mxu0 %v633
  %v4164 = vpop.f32.mrb[0].mxu0
  %v4165 = vadd.f32 %v4032, %v4164
  %v4166 = vpop.f32.mrb[0].mxu0
  %v4167 = vadd.f32 %v4034, %v4166
  %v4168 = vpop.f32.mrb[0].mxu0
  %v4169 = vadd.f32 %v4036, %v4168
  %v4170 = vpop.f32.mrb[0].mxu0
  %v4171 = vadd.f32 %v4038, %v4170
  %4172 = vmatprep.mubr.bf16.mxu0 %v642
  %4173 = vmatmul.mubr.bf16.gmra.mrb[0].mxu0 %v641
  %v4174 = vpop.f32.mrb[0].mxu0
  %v4175 = vadd.f32 %v4042, %v4174
  %v4176 = vpop.f32.mrb[0].mxu0
  %v4177 = vadd.f32 %v4044, %v4176
  %v4178 = vpop.f32.mrb[0].mxu0
  %v4179 = vadd.f32 %v4046, %v4178
  %v4180 = vpop.f32.mrb[0].mxu0
  %v4181 = vadd.f32 %v4048, %v4180
  %4182 = vmatprep.mubr.bf16.mxu0 %v650
  %4183 = vmatmul.mubr.bf16.gmra.mrb[0].mxu0 %v649
  %v4184 = vpop.f32.mrb[0].mxu0
  %v4185 = vadd.f32 %v4052, %v4184
  %v4186 = vpop.f32.mrb[0].mxu0
  %v4187 = vadd.f32 %v4054, %v4186
  %v4188 = vpop.f32.mrb[0].mxu0
  %v4189 = vadd.f32 %v4056, %v4188
  %v4190 = vpop.f32.mrb[0].mxu0
  %v4191 = vadd.f32 %v4058, %v4190
  %4192 = vmatprep.mubr.bf16.mxu0 %v658
  %4193 = vmatmul.mubr.bf16.gmra.mrb[0].mxu0 %v657
  %v4194 = vpop.f32.mrb[0].mxu0
  %v4195 = vadd.f32 %v4062, %v4194
  %v4196 = vpop.f32.mrb[0].mxu0
  %v4197 = vadd.f32 %v4064, %v4196
  %v4198 = vpop.f32.mrb[0].mxu0
  %v4199 = vadd.f32 %v4066, %v4198
  %v4200 = vpop.f32.mrb[0].mxu0
  %v4201 = vadd.f32 %v4068, %v4200
  %4202 = vmatprep.mubr.bf16.mxu0 %v666
  %4203 = vmatmul.mubr.bf16.gmra.mrb[0].mxu0 %v665
  %v4204 = vpop.f32.mrb[0].mxu0
  %v4205 = vadd.f32 %v4072, %v4204
  %v4206 = vpop.f32.mrb[0].mxu0
  %v4207 = vadd.f32 %v4074, %v4206
  %v4208 = vpop.f32.mrb[0].mxu0
  %v4209 = vadd.f32 %v4076, %v4208
  %v4210 = vpop.f32.mrb[0].mxu0
  %v4211 = vadd.f32 %v4078, %v4210
  %4212 = vdwg.mxu0
  %4213 = vmatprep.subr.bf16.mxu0 %v3756
  %4214 = vmatpush1.bf16.msra.mxu0 %v3755
  %4215 = vmatprep.subr.bf16.mxu0 %v3758
  %4216 = vmatpush1.bf16.msra.mxu0 %v3757
  %4217 = vmatprep.subr.bf16.mxu0 %v3760
  %4218 = vmatpush1.bf16.msra.mxu0 %v3759
  %4219 = vmatprep.subr.bf16.mxu0 %v3762
  %4220 = vmatpush1.bf16.msra.mxu0 %v3761
  %4221 = vmatprep.subr.bf16.mxu0 %v3764
  %4222 = vmatpush1.bf16.msra.mxu0 %v3763
  %4223 = vmatprep.subr.bf16.mxu0 %v3766
  %4224 = vmatpush1.bf16.msra.mxu0 %v3765
  %4225 = vmatprep.subr.bf16.mxu0 %v3768
  %4226 = vmatpush1.bf16.msra.mxu0 %v3767
  %4227 = vmatprep.subr.bf16.mxu0 %v3770
  %4228 = vmatpush1.bf16.msra.mxu0 %v3769
  %4229 = vmatprep.subr.bf16.mxu0 %v3772
  %4230 = vmatpush1.bf16.msra.mxu0 %v3771
  %4231 = vmatprep.subr.bf16.mxu0 %v3774
  %4232 = vmatpush1.bf16.msra.mxu0 %v3773
  %4233 = vmatprep.subr.bf16.mxu0 %v3776
  %4234 = vmatpush1.bf16.msra.mxu0 %v3775
  %4235 = vmatprep.subr.bf16.mxu0 %v3778
  %4236 = vmatpush1.bf16.msra.mxu0 %v3777
  %4237 = vmatprep.subr.bf16.mxu0 %v3780
  %4238 = vmatpush1.bf16.msra.mxu0 %v3779
  %4239 = vmatprep.subr.bf16.mxu0 %v3782
  %4240 = vmatpush1.bf16.msra.mxu0 %v3781
  %4241 = vmatprep.subr.bf16.mxu0 %v3784
  %4242 = vmatpush1.bf16.msra.mxu0 %v3783
  %4243 = vmatprep.subr.bf16.mxu0 %v3786
  %4244 = vmatpush1.bf16.msra.mxu0 %v3785
  %4245 = vmatprep.mubr.bf16.mxu0 %v596
  %4246 = vmatmul.mubr.bf16.gmra.mrb[0].mxu0 %v595
  %v4247 = vpop.f32.mrb[0].mxu0
  %v4248 = vadd.f32 %v4115, %v4247
  %v4249 = vpop.f32.mrb[0].mxu0
  %v4250 = vadd.f32 %v4117, %v4249
  %v4251 = vpop.f32.mrb[0].mxu0
  %v4252 = vadd.f32 %v4119, %v4251
  %v4253 = vpop.f32.mrb[0].mxu0
  %v4254 = vadd.f32 %v4121, %v4253
  %4255 = vmatprep.mubr.bf16.mxu0 %v604
  %4256 = vmatmul.mubr.bf16.gmra.mrb[0].mxu0 %v603
  %v4257 = vpop.f32.mrb[0].mxu0
  %v4258 = vadd.f32 %v4125, %v4257
  %v4259 = vpop.f32.mrb[0].mxu0
  %v4260 = vadd.f32 %v4127, %v4259
  %v4261 = vpop.f32.mrb[0].mxu0
  %v4262 = vadd.f32 %v4129, %v4261
  %v4263 = vpop.f32.mrb[0].mxu0
  %v4264 = vadd.f32 %v4131, %v4263
  %4265 = vmatprep.mubr.bf16.mxu0 %v612
  %4266 = vmatmul.mubr.bf16.gmra.mrb[0].mxu0 %v611
  %v4267 = vpop.f32.mrb[0].mxu0
  %v4268 = vadd.f32 %v4135, %v4267
  %v4269 = vpop.f32.mrb[0].mxu0
  %v4270 = vadd.f32 %v4137, %v4269
  %v4271 = vpop.f32.mrb[0].mxu0
  %v4272 = vadd.f32 %v4139, %v4271
  %v4273 = vpop.f32.mrb[0].mxu0
  %v4274 = vadd.f32 %v4141, %v4273
  %4275 = vmatprep.mubr.bf16.mxu0 %v620
  %4276 = vmatmul.mubr.bf16.gmra.mrb[0].mxu0 %v619
  %v4277 = vpop.f32.mrb[0].mxu0
  %v4278 = vadd.f32 %v4145, %v4277
  %v4279 = vpop.f32.mrb[0].mxu0
  %v4280 = vadd.f32 %v4147, %v4279
  %v4281 = vpop.f32.mrb[0].mxu0
  %v4282 = vadd.f32 %v4149, %v4281
  %v4283 = vpop.f32.mrb[0].mxu0
  %v4284 = vadd.f32 %v4151, %v4283
  %4285 = vmatprep.mubr.bf16.mxu0 %v628
  %4286 = vmatmul.mubr.bf16.gmra.mrb[0].mxu0 %v627
  %v4287 = vpop.f32.mrb[0].mxu0
  %v4288 = vadd.f32 %v4155, %v4287
  %v4289 = vpop.f32.mrb[0].mxu0
  %v4290 = vadd.f32 %v4157, %v4289
  %v4291 = vpop.f32.mrb[0].mxu0
  %v4292 = vadd.f32 %v4159, %v4291
  %v4293 = vpop.f32.mrb[0].mxu0
  %v4294 = vadd.f32 %v4161, %v4293
  %4295 = vmatprep.mubr.bf16.mxu0 %v636
  %4296 = vmatmul.mubr.bf16.gmra.mrb[0].mxu0 %v635
  %v4297 = vpop.f32.mrb[0].mxu0
  %v4298 = vadd.f32 %v4165, %v4297
  %v4299 = vpop.f32.mrb[0].mxu0
  %v4300 = vadd.f32 %v4167, %v4299
  %v4301 = vpop.f32.mrb[0].mxu0
  %v4302 = vadd.f32 %v4169, %v4301
  %v4303 = vpop.f32.mrb[0].mxu0
  %v4304 = vadd.f32 %v4171, %v4303
  %4305 = vmatprep.mubr.bf16.mxu0 %v644
  %4306 = vmatmul.mubr.bf16.gmra.mrb[0].mxu0 %v643
  %v4307 = vpop.f32.mrb[0].mxu0
  %v4308 = vadd.f32 %v4175, %v4307
  %v4309 = vpop.f32.mrb[0].mxu0
  %v4310 = vadd.f32 %v4177, %v4309
  %v4311 = vpop.f32.mrb[0].mxu0
  %v4312 = vadd.f32 %v4179, %v4311
  %v4313 = vpop.f32.mrb[0].mxu0
  %v4314 = vadd.f32 %v4181, %v4313
  %4315 = vmatprep.mubr.bf16.mxu0 %v652
  %4316 = vmatmul.mubr.bf16.gmra.mrb[0].mxu0 %v651
  %v4317 = vpop.f32.mrb[0].mxu0
  %v4318 = vadd.f32 %v4185, %v4317
  %v4319 = vpop.f32.mrb[0].mxu0
  %v4320 = vadd.f32 %v4187, %v4319
  %v4321 = vpop.f32.mrb[0].mxu0
  %v4322 = vadd.f32 %v4189, %v4321
  %v4323 = vpop.f32.mrb[0].mxu0
  %v4324 = vadd.f32 %v4191, %v4323
  %4325 = vmatprep.mubr.bf16.mxu0 %v660
  %4326 = vmatmul.mubr.bf16.gmra.mrb[0].mxu0 %v659
  %v4327 = vpop.f32.mrb[0].mxu0
  %v4328 = vadd.f32 %v4195, %v4327
  %v4329 = vpop.f32.mrb[0].mxu0
  %v4330 = vadd.f32 %v4197, %v4329
  %v4331 = vpop.f32.mrb[0].mxu0
  %v4332 = vadd.f32 %v4199, %v4331
  %v4333 = vpop.f32.mrb[0].mxu0
  %v4334 = vadd.f32 %v4201, %v4333
  %4335 = vmatprep.mubr.bf16.mxu0 %v668
  %4336 = vmatmul.mubr.bf16.gmra.mrb[0].mxu0 %v667
  %v4337 = vpop.f32.mrb[0].mxu0
  %v4338 = vadd.f32 %v4205, %v4337
  %v4339 = vpop.f32.mrb[0].mxu0
  %v4340 = vadd.f32 %v4207, %v4339
  %v4341 = vpop.f32.mrb[0].mxu0
  %v4342 = vadd.f32 %v4209, %v4341
  %v4343 = vpop.f32.mrb[0].mxu0
  %v4344 = vadd.f32 %v4211, %v4343
  %4345 = vdwg.mxu0
  %4346 = vmatprep.subr.bf16.mxu0 %v3788
  %4347 = vmatpush1.bf16.msra.mxu0 %v3787
  %4348 = vmatprep.subr.bf16.mxu0 %v3790
  %4349 = vmatpush1.bf16.msra.mxu0 %v3789
  %4350 = vmatprep.subr.bf16.mxu0 %v3792
  %4351 = vmatpush1.bf16.msra.mxu0 %v3791
  %4352 = vmatprep.subr.bf16.mxu0 %v3794
  %4353 = vmatpush1.bf16.msra.mxu0 %v3793
  %4354 = vmatprep.subr.bf16.mxu0 %v3796
  %4355 = vmatpush1.bf16.msra.mxu0 %v3795
  %4356 = vmatprep.subr.bf16.mxu0 %v3798
  %4357 = vmatpush1.bf16.msra.mxu0 %v3797
  %4358 = vmatprep.subr.bf16.mxu0 %v3800
  %4359 = vmatpush1.bf16.msra.mxu0 %v3799
  %4360 = vmatprep.subr.bf16.mxu0 %v3802
  %4361 = vmatpush1.bf16.msra.mxu0 %v3801
  %4362 = vmatprep.subr.bf16.mxu0 %v3804
  %4363 = vmatpush1.bf16.msra.mxu0 %v3803
  %4364 = vmatprep.subr.bf16.mxu0 %v3806
  %4365 = vmatpush1.bf16.msra.mxu0 %v3805
  %4366 = vmatprep.subr.bf16.mxu0 %v3808
  %4367 = vmatpush1.bf16.msra.mxu0 %v3807
  %4368 = vmatprep.subr.bf16.mxu0 %v3810
  %4369 = vmatpush1.bf16.msra.mxu0 %v3809
  %4370 = vmatprep.subr.bf16.mxu0 %v3812
  %4371 = vmatpush1.bf16.msra.mxu0 %v3811
  %4372 = vmatprep.subr.bf16.mxu0 %v3814
  %4373 = vmatpush1.bf16.msra.mxu0 %v3813
  %4374 = vmatprep.subr.bf16.mxu0 %v3816
  %4375 = vmatpush1.bf16.msra.mxu0 %v3815
  %4376 = vmatprep.subr.bf16.mxu0 %v3818
  %4377 = vmatpush1.bf16.msra.mxu0 %v3817
  %4378 = vmatprep.mubr.bf16.mxu0 %v598
  %4379 = vmatmul.mubr.bf16.gmra.mrb[0].mxu0 %v597
  %v4380 = vpop.f32.mrb[0].mxu0
  %v4381 = vadd.f32 %v4248, %v4380
  %v4382 = vpop.f32.mrb[0].mxu0
  %v4383 = vadd.f32 %v4250, %v4382
  %v4384 = vpop.f32.mrb[0].mxu0
  %v4385 = vadd.f32 %v4252, %v4384
  %v4386 = vpop.f32.mrb[0].mxu0
  %v4387 = vadd.f32 %v4254, %v4386
  %4388 = vmatprep.mubr.bf16.mxu0 %v606
  %4389 = vmatmul.mubr.bf16.gmra.mrb[0].mxu0 %v605
  %v4390 = vpop.f32.mrb[0].mxu0
  %v4391 = vadd.f32 %v4258, %v4390
  %v4392 = vpop.f32.mrb[0].mxu0
  %v4393 = vadd.f32 %v4260, %v4392
  %v4394 = vpop.f32.mrb[0].mxu0
  %v4395 = vadd.f32 %v4262, %v4394
  %v4396 = vpop.f32.mrb[0].mxu0
  %v4397 = vadd.f32 %v4264, %v4396
  %4398 = vmatprep.mubr.bf16.mxu0 %v614
  %4399 = vmatmul.mubr.bf16.gmra.mrb[0].mxu0 %v613
  %v4400 = vpop.f32.mrb[0].mxu0
  %v4401 = vadd.f32 %v4268, %v4400
  %v4402 = vpop.f32.mrb[0].mxu0
  %v4403 = vadd.f32 %v4270, %v4402
  %v4404 = vpop.f32.mrb[0].mxu0
  %v4405 = vadd.f32 %v4272, %v4404
  %v4406 = vpop.f32.mrb[0].mxu0
  %v4407 = vadd.f32 %v4274, %v4406
  %4408 = vmatprep.mubr.bf16.mxu0 %v622
  %4409 = vmatmul.mubr.bf16.gmra.mrb[0].mxu0 %v621
  %v4410 = vpop.f32.mrb[0].mxu0
  %v4411 = vadd.f32 %v4278, %v4410
  %v4412 = vpop.f32.mrb[0].mxu0
  %v4413 = vadd.f32 %v4280, %v4412
  %v4414 = vpop.f32.mrb[0].mxu0
  %v4415 = vadd.f32 %v4282, %v4414
  %v4416 = vpop.f32.mrb[0].mxu0
  %v4417 = vadd.f32 %v4284, %v4416
  %4418 = vmatprep.mubr.bf16.mxu0 %v630
  %4419 = vmatmul.mubr.bf16.gmra.mrb[0].mxu0 %v629
  %v4420 = vpop.f32.mrb[0].mxu0
  %v4421 = vadd.f32 %v4288, %v4420
  %v4422 = vpop.f32.mrb[0].mxu0
  %v4423 = vadd.f32 %v4290, %v4422
  %v4424 = vpop.f32.mrb[0].mxu0
  %v4425 = vadd.f32 %v4292, %v4424
  %v4426 = vpop.f32.mrb[0].mxu0
  %v4427 = vadd.f32 %v4294, %v4426
  %4428 = vmatprep.mubr.bf16.mxu0 %v638
  %4429 = vmatmul.mubr.bf16.gmra.mrb[0].mxu0 %v637
  %v4430 = vpop.f32.mrb[0].mxu0
  %v4431 = vadd.f32 %v4298, %v4430
  %v4432 = vpop.f32.mrb[0].mxu0
  %v4433 = vadd.f32 %v4300, %v4432
  %v4434 = vpop.f32.mrb[0].mxu0
  %v4435 = vadd.f32 %v4302, %v4434
  %v4436 = vpop.f32.mrb[0].mxu0
  %v4437 = vadd.f32 %v4304, %v4436
  %4438 = vmatprep.mubr.bf16.mxu0 %v646
  %4439 = vmatmul.mubr.bf16.gmra.mrb[0].mxu0 %v645
  %v4440 = vpop.f32.mrb[0].mxu0
  %v4441 = vadd.f32 %v4308, %v4440
  %v4442 = vpop.f32.mrb[0].mxu0
  %v4443 = vadd.f32 %v4310, %v4442
  %v4444 = vpop.f32.mrb[0].mxu0
  %v4445 = vadd.f32 %v4312, %v4444
  %v4446 = vpop.f32.mrb[0].mxu0
  %v4447 = vadd.f32 %v4314, %v4446
  %4448 = vmatprep.mubr.bf16.mxu0 %v654
  %4449 = vmatmul.mubr.bf16.gmra.mrb[0].mxu0 %v653
  %v4450 = vpop.f32.mrb[0].mxu0
  %v4451 = vadd.f32 %v4318, %v4450
  %v4452 = vpop.f32.mrb[0].mxu0
  %v4453 = vadd.f32 %v4320, %v4452
  %v4454 = vpop.f32.mrb[0].mxu0
  %v4455 = vadd.f32 %v4322, %v4454
  %v4456 = vpop.f32.mrb[0].mxu0
  %v4457 = vadd.f32 %v4324, %v4456
  %4458 = vmatprep.mubr.bf16.mxu0 %v662
  %4459 = vmatmul.mubr.bf16.gmra.mrb[0].mxu0 %v661
  %v4460 = vpop.f32.mrb[0].mxu0
  %v4461 = vadd.f32 %v4328, %v4460
  %v4462 = vpop.f32.mrb[0].mxu0
  %v4463 = vadd.f32 %v4330, %v4462
  %v4464 = vpop.f32.mrb[0].mxu0
  %v4465 = vadd.f32 %v4332, %v4464
  %v4466 = vpop.f32.mrb[0].mxu0
  %v4467 = vadd.f32 %v4334, %v4466
  %4468 = vmatprep.mubr.bf16.mxu0 %v670
  %4469 = vmatmul.mubr.bf16.gmra.mrb[0].mxu0 %v669
  %v4470 = vpop.f32.mrb[0].mxu0
  %v4471 = vadd.f32 %v4338, %v4470
  %v4472 = vpop.f32.mrb[0].mxu0
  %v4473 = vadd.f32 %v4340, %v4472
  %v4474 = vpop.f32.mrb[0].mxu0
  %v4475 = vadd.f32 %v4342, %v4474
  %v4476 = vpop.f32.mrb[0].mxu0
  %v4477 = vadd.f32 %v4344, %v4476
  %4478 = vdwg.mxu0
  %v4479 = vrot.slane %v4381, 2
  %v4480 = vrot.slane %v4383, 2
  %v4481 = vrot.slane %v4385, 2
  %v4482 = vrot.slane %v4387, 2
  %v4483 = vrot.slane %v4391, 2
  %v4484 = vrot.slane %v4393, 2
  %v4485 = vrot.slane %v4395, 2
  %v4486 = vrot.slane %v4397, 2
  %v4487 = vrot.slane %v4401, 2
  %v4488 = vrot.slane %v4403, 2
  %v4489 = vrot.slane %v4405, 2
  %v4490 = vrot.slane %v4407, 2
  %v4491 = vrot.slane %v4411, 2
  %v4492 = vrot.slane %v4413, 2
  %v4493 = vrot.slane %v4415, 2
  %v4494 = vrot.slane %v4417, 2
  %v4495 = vrot.slane %v4421, 2
  %v4496 = vrot.slane %v4423, 2
  %v4497 = vrot.slane %v4425, 2
  %v4498 = vrot.slane %v4427, 2
  %v4499 = vrot.slane %v4431, 2
  %v4500 = vrot.slane %v4433, 2
  %v4501 = vrot.slane %v4435, 2
  %v4502 = vrot.slane %v4437, 2
  %v4503 = vrot.slane %v4441, 2
  %v4504 = vrot.slane %v4443, 2
  %v4505 = vrot.slane %v4445, 2
  %v4506 = vrot.slane %v4447, 2
  %v4507 = vrot.slane %v4451, 2
  %v4508 = vrot.slane %v4453, 2
  %v4509 = vrot.slane %v4455, 2
  %v4510 = vrot.slane %v4457, 2
  %v4511 = vrot.slane %v4461, 2
  %v4512 = vrot.slane %v4463, 2
  %v4513 = vrot.slane %v4465, 2
  %v4514 = vrot.slane %v4467, 2
  %v4515 = vrot.slane %v4471, 2
  %v4516 = vrot.slane %v4473, 2
  %v4517 = vrot.slane %v4475, 2
  %v4518 = vrot.slane %v4477, 2
  %vm4519 = vcmp.lt.s32.totalorder %v1964, 6
  %v4520 = vsel %vm4519, %v4515, %v4517
  %v4521 = vsel %vm4519, %v4516, %v4518
  %v4522 = vsel %vm4519, %v4513, %v4515
  %v4523 = vsel %vm4519, %v4514, %v4516
  %v4524 = vsel %vm4519, %v4511, %v4513
  %v4525 = vsel %vm4519, %v4512, %v4514
  %v4526 = vsel %vm4519, %v4509, %v4511
  %v4527 = vsel %vm4519, %v4510, %v4512
  %v4528 = vsel %vm4519, %v4507, %v4509
  %v4529 = vsel %vm4519, %v4508, %v4510
  %v4530 = vsel %vm4519, %v4505, %v4507
  %v4531 = vsel %vm4519, %v4506, %v4508
  %v4532 = vsel %vm4519, %v4503, %v4505
  %v4533 = vsel %vm4519, %v4504, %v4506
  %v4534 = vsel %vm4519, %v4501, %v4503
  %v4535 = vsel %vm4519, %v4502, %v4504
  %v4536 = vsel %vm4519, %v4499, %v4501
  %v4537 = vsel %vm4519, %v4500, %v4502
  %v4538 = vsel %vm4519, %v4497, %v4499
  %v4539 = vsel %vm4519, %v4498, %v4500
  %v4540 = vsel %vm4519, %v4495, %v4497
  %v4541 = vsel %vm4519, %v4496, %v4498
  %v4542 = vsel %vm4519, %v4493, %v4495
  %v4543 = vsel %vm4519, %v4494, %v4496
  %v4544 = vsel %vm4519, %v4491, %v4493
  %v4545 = vsel %vm4519, %v4492, %v4494
  %v4546 = vsel %vm4519, %v4489, %v4491
  %v4547 = vsel %vm4519, %v4490, %v4492
  %v4548 = vsel %vm4519, %v4487, %v4489
  %v4549 = vsel %vm4519, %v4488, %v4490
  %v4550 = vsel %vm4519, %v4485, %v4487
  %v4551 = vsel %vm4519, %v4486, %v4488
  %v4552 = vsel %vm4519, %v4483, %v4485
  %v4553 = vsel %vm4519, %v4484, %v4486
  %v4554 = vsel %vm4519, %v4481, %v4483
  %v4555 = vsel %vm4519, %v4482, %v4484
  %v4556 = vsel %vm4519, %v4479, %v4481
  %v4557 = vsel %vm4519, %v4480, %v4482
  %v4558 = vsel %vm4519, %v4517, %v4479
  %v4559 = vsel %vm4519, %v4518, %v4480
  %v4560 = vadd.f32 %v3080, %v4556
  %v4561 = vadd.f32 %v3082, %v4557
  %v4562 = vadd.f32 %v3084, %v4554
  %v4563 = vadd.f32 %v3086, %v4555
  %v4564 = vadd.f32 %v3090, %v4552
  %v4565 = vadd.f32 %v3092, %v4553
  %v4566 = vadd.f32 %v3094, %v4550
  %v4567 = vadd.f32 %v3096, %v4551
  %v4568 = vadd.f32 %v3100, %v4548
  %v4569 = vadd.f32 %v3102, %v4549
  %v4570 = vadd.f32 %v3104, %v4546
  %v4571 = vadd.f32 %v3106, %v4547
  %v4572 = vadd.f32 %v3110, %v4544
  %v4573 = vadd.f32 %v3112, %v4545
  %v4574 = vadd.f32 %v3114, %v4542
  %v4575 = vadd.f32 %v3116, %v4543
  %v4576 = vadd.f32 %v3120, %v4540
  %v4577 = vadd.f32 %v3122, %v4541
  %v4578 = vadd.f32 %v3124, %v4538
  %v4579 = vadd.f32 %v3126, %v4539
  %v4580 = vadd.f32 %v3130, %v4536
  %v4581 = vadd.f32 %v3132, %v4537
  %v4582 = vadd.f32 %v3134, %v4534
  %v4583 = vadd.f32 %v3136, %v4535
  %v4584 = vadd.f32 %v3140, %v4532
  %v4585 = vadd.f32 %v3142, %v4533
  %v4586 = vadd.f32 %v3144, %v4530
  %v4587 = vadd.f32 %v3146, %v4531
  %v4588 = vadd.f32 %v3150, %v4528
  %v4589 = vadd.f32 %v3152, %v4529
  %v4590 = vadd.f32 %v3154, %v4526
  %v4591 = vadd.f32 %v3156, %v4527
  %v4592 = vadd.f32 %v3160, %v4524
  %v4593 = vadd.f32 %v3162, %v4525
  %v4594 = vadd.f32 %v3164, %v4522
  %v4595 = vadd.f32 %v3166, %v4523
  %v4596 = vadd.f32 %v3170, %v4520
  %v4597 = vadd.f32 %v3172, %v4521
  %v4598 = vadd.f32 %v3174, %v4558
  %v4599 = vadd.f32 %v3176, %v4559
  %v4640 = vcombine.low %v4560, %v4561
  %v4641 = vcombine.high %v4560, %v4561
  %v4643 = vunpack.c.l.s4 1983009808
  %v4644 = vunpack.c.0.s8 %v4643
  %v4645 = vlaneseq
  %v4646 = vshrl.u32 %v4645, 7
  %v4647 = vsub.s32 %v4644, %v4646
  %v4648 = vrot.slane %v4640, %v4647
  %v4650 = vunpack.c.l.s4 1983009808
  %v4651 = vunpack.c.0.s8 %v4650
  %v4652 = vlaneseq
  %v4653 = vshrl.u32 %v4652, 7
  %v4654 = vsub.s32 %v4651, %v4653
  %v4655 = vrot.slane %v4641, %v4654
  %v4656 = vcombine.high %v4648, %v4648
  %v4657 = vcombine.high %v4655, %v4655
  %v4658 = vcombine.low %v4562, %v4563
  %v4659 = vcombine.high %v4562, %v4563
  %v4661 = vunpack.c.l.s4 1983009808
  %v4662 = vunpack.c.0.s8 %v4661
  %v4663 = vlaneseq
  %v4664 = vshrl.u32 %v4663, 7
  %v4665 = vsub.s32 %v4662, %v4664
  %v4666 = vrot.slane %v4658, %v4665
  %v4668 = vunpack.c.l.s4 1983009808
  %v4669 = vunpack.c.0.s8 %v4668
  %v4670 = vlaneseq
  %v4671 = vshrl.u32 %v4670, 7
  %v4672 = vsub.s32 %v4669, %v4671
  %v4673 = vrot.slane %v4659, %v4672
  %v4674 = vcombine.high %v4666, %v4666
  %v4675 = vcombine.high %v4673, %v4673
  %v4676 = vcombine.low %v4564, %v4565
  %v4677 = vcombine.high %v4564, %v4565
  %v4679 = vunpack.c.l.s4 1983009808
  %v4680 = vunpack.c.0.s8 %v4679
  %v4681 = vlaneseq
  %v4682 = vshrl.u32 %v4681, 7
  %v4683 = vsub.s32 %v4680, %v4682
  %v4684 = vrot.slane %v4676, %v4683
  %v4686 = vunpack.c.l.s4 1983009808
  %v4687 = vunpack.c.0.s8 %v4686
  %v4688 = vlaneseq
  %v4689 = vshrl.u32 %v4688, 7
  %v4690 = vsub.s32 %v4687, %v4689
  %v4691 = vrot.slane %v4677, %v4690
  %v4692 = vcombine.high %v4691, %v4691
  %v4693 = vcombine.low %v4566, %v4567
  %v4694 = vcombine.high %v4566, %v4567
  %v4696 = vunpack.c.l.s4 1983009808
  %v4697 = vunpack.c.0.s8 %v4696
  %v4698 = vlaneseq
  %v4699 = vshrl.u32 %v4698, 7
  %v4700 = vsub.s32 %v4697, %v4699
  %v4701 = vrot.slane %v4693, %v4700
  %v4703 = vunpack.c.l.s4 1983009808
  %v4704 = vunpack.c.0.s8 %v4703
  %v4705 = vlaneseq
  %v4706 = vshrl.u32 %v4705, 7
  %v4707 = vsub.s32 %v4704, %v4706
  %v4708 = vrot.slane %v4694, %v4707
  %v4709 = vcombine.high %v4701, %v4701
  %v4710 = vcombine.high %v4708, %v4708
  %v4711 = vcombine.low %v4568, %v4569
  %v4712 = vcombine.high %v4568, %v4569
  %v4714 = vunpack.c.l.s4 1983009808
  %v4715 = vunpack.c.0.s8 %v4714
  %v4716 = vlaneseq
  %v4717 = vshrl.u32 %v4716, 7
  %v4718 = vsub.s32 %v4715, %v4717
  %v4719 = vrot.slane %v4711, %v4718
  %v4721 = vunpack.c.l.s4 1983009808
  %v4722 = vunpack.c.0.s8 %v4721
  %v4723 = vlaneseq
  %v4724 = vshrl.u32 %v4723, 7
  %v4725 = vsub.s32 %v4722, %v4724
  %v4726 = vrot.slane %v4712, %v4725
  %v4727 = vcombine.high %v4719, %v4719
  %v4728 = vcombine.low %v4570, %v4571
  %v4729 = vcombine.high %v4570, %v4571
  %v4731 = vunpack.c.l.s4 1983009808
  %v4732 = vunpack.c.0.s8 %v4731
  %v4733 = vlaneseq
  %v4734 = vshrl.u32 %v4733, 7
  %v4735 = vsub.s32 %v4732, %v4734
  %v4736 = vrot.slane %v4728, %v4735
  %v4738 = vunpack.c.l.s4 1983009808
  %v4739 = vunpack.c.0.s8 %v4738
  %v4740 = vlaneseq
  %v4741 = vshrl.u32 %v4740, 7
  %v4742 = vsub.s32 %v4739, %v4741
  %v4743 = vrot.slane %v4729, %v4742
  %v4744 = vcombine.high %v4736, %v4736
  %v4745 = vcombine.high %v4743, %v4743
  %v4746 = vcombine.low %v4572, %v4573
  %v4747 = vcombine.high %v4572, %v4573
  %v4749 = vunpack.c.l.s4 1983009808
  %v4750 = vunpack.c.0.s8 %v4749
  %v4751 = vlaneseq
  %v4752 = vshrl.u32 %v4751, 7
  %v4753 = vsub.s32 %v4750, %v4752
  %v4754 = vrot.slane %v4746, %v4753
  %v4756 = vunpack.c.l.s4 1983009808
  %v4757 = vunpack.c.0.s8 %v4756
  %v4758 = vlaneseq
  %v4759 = vshrl.u32 %v4758, 7
  %v4760 = vsub.s32 %v4757, %v4759
  %v4761 = vrot.slane %v4747, %v4760
  %v4762 = vcombine.high %v4754, %v4754
  %v4763 = vcombine.high %v4761, %v4761
  %v4764 = vcombine.low %v4574, %v4575
  %v4765 = vcombine.high %v4574, %v4575
  %v4767 = vunpack.c.l.s4 1983009808
  %v4768 = vunpack.c.0.s8 %v4767
  %v4769 = vlaneseq
  %v4770 = vshrl.u32 %v4769, 7
  %v4771 = vsub.s32 %v4768, %v4770
  %v4772 = vrot.slane %v4764, %v4771
  %v4774 = vunpack.c.l.s4 1983009808
  %v4775 = vunpack.c.0.s8 %v4774
  %v4776 = vlaneseq
  %v4777 = vshrl.u32 %v4776, 7
  %v4778 = vsub.s32 %v4775, %v4777
  %v4779 = vrot.slane %v4765, %v4778
  %v4780 = vcombine.high %v4779, %v4779
  %v4781 = vcombine.low %v4576, %v4577
  %v4782 = vcombine.high %v4576, %v4577
  %v4784 = vunpack.c.l.s4 1983009808
  %v4785 = vunpack.c.0.s8 %v4784
  %v4786 = vlaneseq
  %v4787 = vshrl.u32 %v4786, 7
  %v4788 = vsub.s32 %v4785, %v4787
  %v4789 = vrot.slane %v4781, %v4788
  %v4791 = vunpack.c.l.s4 1983009808
  %v4792 = vunpack.c.0.s8 %v4791
  %v4793 = vlaneseq
  %v4794 = vshrl.u32 %v4793, 7
  %v4795 = vsub.s32 %v4792, %v4794
  %v4796 = vrot.slane %v4782, %v4795
  %v4797 = vcombine.high %v4789, %v4789
  %v4798 = vcombine.high %v4796, %v4796
  %v4799 = vcombine.low %v4578, %v4579
  %v4800 = vcombine.high %v4578, %v4579
  %v4802 = vunpack.c.l.s4 1983009808
  %v4803 = vunpack.c.0.s8 %v4802
  %v4804 = vlaneseq
  %v4805 = vshrl.u32 %v4804, 7
  %v4806 = vsub.s32 %v4803, %v4805
  %v4807 = vrot.slane %v4799, %v4806
  %v4809 = vunpack.c.l.s4 1983009808
  %v4810 = vunpack.c.0.s8 %v4809
  %v4811 = vlaneseq
  %v4812 = vshrl.u32 %v4811, 7
  %v4813 = vsub.s32 %v4810, %v4812
  %v4814 = vrot.slane %v4800, %v4813
  %v4815 = vcombine.high %v4807, %v4807
  %v4816 = vcombine.low %v4580, %v4581
  %v4817 = vcombine.high %v4580, %v4581
  %v4819 = vunpack.c.l.s4 1983009808
  %v4820 = vunpack.c.0.s8 %v4819
  %v4821 = vlaneseq
  %v4822 = vshrl.u32 %v4821, 7
  %v4823 = vsub.s32 %v4820, %v4822
  %v4824 = vrot.slane %v4816, %v4823
  %v4826 = vunpack.c.l.s4 1983009808
  %v4827 = vunpack.c.0.s8 %v4826
  %v4828 = vlaneseq
  %v4829 = vshrl.u32 %v4828, 7
  %v4830 = vsub.s32 %v4827, %v4829
  %v4831 = vrot.slane %v4817, %v4830
  %v4832 = vcombine.high %v4824, %v4824
  %v4833 = vcombine.high %v4831, %v4831
  %v4834 = vcombine.low %v4582, %v4583
  %v4835 = vcombine.high %v4582, %v4583
  %v4837 = vunpack.c.l.s4 1983009808
  %v4838 = vunpack.c.0.s8 %v4837
  %v4839 = vlaneseq
  %v4840 = vshrl.u32 %v4839, 7
  %v4841 = vsub.s32 %v4838, %v4840
  %v4842 = vrot.slane %v4834, %v4841
  %v4844 = vunpack.c.l.s4 1983009808
  %v4845 = vunpack.c.0.s8 %v4844
  %v4846 = vlaneseq
  %v4847 = vshrl.u32 %v4846, 7
  %v4848 = vsub.s32 %v4845, %v4847
  %v4849 = vrot.slane %v4835, %v4848
  %v4850 = vcombine.high %v4842, %v4842
  %v4851 = vcombine.high %v4849, %v4849
  %v4852 = vcombine.low %v4584, %v4585
  %v4853 = vcombine.high %v4584, %v4585
  %v4855 = vunpack.c.l.s4 1983009808
  %v4856 = vunpack.c.0.s8 %v4855
  %v4857 = vlaneseq
  %v4858 = vshrl.u32 %v4857, 7
  %v4859 = vsub.s32 %v4856, %v4858
  %v4860 = vrot.slane %v4852, %v4859
  %v4862 = vunpack.c.l.s4 1983009808
  %v4863 = vunpack.c.0.s8 %v4862
  %v4864 = vlaneseq
  %v4865 = vshrl.u32 %v4864, 7
  %v4866 = vsub.s32 %v4863, %v4865
  %v4867 = vrot.slane %v4853, %v4866
  %v4868 = vcombine.high %v4867, %v4867
  %v4869 = vcombine.low %v4586, %v4587
  %v4870 = vcombine.high %v4586, %v4587
  %v4872 = vunpack.c.l.s4 1983009808
  %v4873 = vunpack.c.0.s8 %v4872
  %v4874 = vlaneseq
  %v4875 = vshrl.u32 %v4874, 7
  %v4876 = vsub.s32 %v4873, %v4875
  %v4877 = vrot.slane %v4869, %v4876
  %v4879 = vunpack.c.l.s4 1983009808
  %v4880 = vunpack.c.0.s8 %v4879
  %v4881 = vlaneseq
  %v4882 = vshrl.u32 %v4881, 7
  %v4883 = vsub.s32 %v4880, %v4882
  %v4884 = vrot.slane %v4870, %v4883
  %v4885 = vcombine.high %v4877, %v4877
  %v4886 = vcombine.high %v4884, %v4884
  %v4887 = vcombine.low %v4588, %v4589
  %v4888 = vcombine.high %v4588, %v4589
  %v4890 = vunpack.c.l.s4 1983009808
  %v4891 = vunpack.c.0.s8 %v4890
  %v4892 = vlaneseq
  %v4893 = vshrl.u32 %v4892, 7
  %v4894 = vsub.s32 %v4891, %v4893
  %v4895 = vrot.slane %v4887, %v4894
  %v4897 = vunpack.c.l.s4 1983009808
  %v4898 = vunpack.c.0.s8 %v4897
  %v4899 = vlaneseq
  %v4900 = vshrl.u32 %v4899, 7
  %v4901 = vsub.s32 %v4898, %v4900
  %v4902 = vrot.slane %v4888, %v4901
  %v4903 = vcombine.high %v4895, %v4895
  %v4904 = vcombine.low %v4590, %v4591
  %v4905 = vcombine.high %v4590, %v4591
  %v4907 = vunpack.c.l.s4 1983009808
  %v4908 = vunpack.c.0.s8 %v4907
  %v4909 = vlaneseq
  %v4910 = vshrl.u32 %v4909, 7
  %v4911 = vsub.s32 %v4908, %v4910
  %v4912 = vrot.slane %v4904, %v4911
  %v4914 = vunpack.c.l.s4 1983009808
  %v4915 = vunpack.c.0.s8 %v4914
  %v4916 = vlaneseq
  %v4917 = vshrl.u32 %v4916, 7
  %v4918 = vsub.s32 %v4915, %v4917
  %v4919 = vrot.slane %v4905, %v4918
  %v4920 = vcombine.high %v4912, %v4912
  %v4921 = vcombine.high %v4919, %v4919
  %v4922 = vcombine.low %v4592, %v4593
  %v4923 = vcombine.high %v4592, %v4593
  %v4925 = vunpack.c.l.s4 1983009808
  %v4926 = vunpack.c.0.s8 %v4925
  %v4927 = vlaneseq
  %v4928 = vshrl.u32 %v4927, 7
  %v4929 = vsub.s32 %v4926, %v4928
  %v4930 = vrot.slane %v4922, %v4929
  %v4932 = vunpack.c.l.s4 1983009808
  %v4933 = vunpack.c.0.s8 %v4932
  %v4934 = vlaneseq
  %v4935 = vshrl.u32 %v4934, 7
  %v4936 = vsub.s32 %v4933, %v4935
  %v4937 = vrot.slane %v4923, %v4936
  %v4938 = vcombine.high %v4930, %v4930
  %v4939 = vcombine.high %v4937, %v4937
  %v4940 = vcombine.low %v4594, %v4595
  %v4941 = vcombine.high %v4594, %v4595
  %v4943 = vunpack.c.l.s4 1983009808
  %v4944 = vunpack.c.0.s8 %v4943
  %v4945 = vlaneseq
  %v4946 = vshrl.u32 %v4945, 7
  %v4947 = vsub.s32 %v4944, %v4946
  %v4948 = vrot.slane %v4940, %v4947
  %v4950 = vunpack.c.l.s4 1983009808
  %v4951 = vunpack.c.0.s8 %v4950
  %v4952 = vlaneseq
  %v4953 = vshrl.u32 %v4952, 7
  %v4954 = vsub.s32 %v4951, %v4953
  %v4955 = vrot.slane %v4941, %v4954
  %v4956 = vcombine.high %v4955, %v4955
  %v4957 = vcombine.low %v4596, %v4597
  %v4958 = vcombine.high %v4596, %v4597
  %v4960 = vunpack.c.l.s4 1983009808
  %v4961 = vunpack.c.0.s8 %v4960
  %v4962 = vlaneseq
  %v4963 = vshrl.u32 %v4962, 7
  %v4964 = vsub.s32 %v4961, %v4963
  %v4965 = vrot.slane %v4957, %v4964
  %v4967 = vunpack.c.l.s4 1983009808
  %v4968 = vunpack.c.0.s8 %v4967
  %v4969 = vlaneseq
  %v4970 = vshrl.u32 %v4969, 7
  %v4971 = vsub.s32 %v4968, %v4970
  %v4972 = vrot.slane %v4958, %v4971
  %v4973 = vcombine.high %v4965, %v4965
  %v4974 = vcombine.high %v4972, %v4972
  %v4975 = vcombine.low %v4598, %v4599
  %v4976 = vcombine.high %v4598, %v4599
  %v4978 = vunpack.c.l.s4 1983009808
  %v4979 = vunpack.c.0.s8 %v4978
  %v4980 = vlaneseq
  %v4981 = vshrl.u32 %v4980, 7
  %v4982 = vsub.s32 %v4979, %v4981
  %v4983 = vrot.slane %v4975, %v4982
  %v4985 = vunpack.c.l.s4 1983009808
  %v4986 = vunpack.c.0.s8 %v4985
  %v4987 = vlaneseq
  %v4988 = vshrl.u32 %v4987, 7
  %v4989 = vsub.s32 %v4986, %v4988
  %v4990 = vrot.slane %v4976, %v4989
  %v4991 = vcombine.high %v4983, %v4983
  %v4993 = vunpack.c.l.s4 1983009808
  %v4994 = vunpack.c.0.s8 %v4993
  %v4995 = vlaneseq
  %v4996 = vshrl.u32 %v4995, 7
  %v4997 = vsub.s32 %v4994, %v4996
  %v4998 = vrot.slane %v4648, %v4997
  %v4999 = vcombine.high %v4998, %v4998
  %v5001 = vunpack.c.l.s4 1983009808
  %v5002 = vunpack.c.0.s8 %v5001
  %v5003 = vlaneseq
  %v5004 = vshrl.u32 %v5003, 7
  %v5005 = vsub.s32 %v5002, %v5004
  %v5006 = vrot.slane %v4656, %v5005
  %v5007 = vcombine.high %v5006, %v5006
  %v5009 = vunpack.c.l.s4 1983009808
  %v5010 = vunpack.c.0.s8 %v5009
  %v5011 = vlaneseq
  %v5012 = vshrl.u32 %v5011, 7
  %v5013 = vsub.s32 %v5010, %v5012
  %v5014 = vrot.slane %v4655, %v5013
  %v5015 = vcombine.high %v5014, %v5014
  %v5017 = vunpack.c.l.s4 1983009808
  %v5018 = vunpack.c.0.s8 %v5017
  %v5019 = vlaneseq
  %v5020 = vshrl.u32 %v5019, 7
  %v5021 = vsub.s32 %v5018, %v5020
  %v5022 = vrot.slane %v4657, %v5021
  %v5023 = vcombine.high %v5022, %v5022
  %v5025 = vunpack.c.l.s4 1983009808
  %v5026 = vunpack.c.0.s8 %v5025
  %v5027 = vlaneseq
  %v5028 = vshrl.u32 %v5027, 7
  %v5029 = vsub.s32 %v5026, %v5028
  %v5030 = vrot.slane %v4674, %v5029
  %v5031 = vcombine.high %v5030, %v5030
  %v5033 = vunpack.c.l.s4 1983009808
  %v5034 = vunpack.c.0.s8 %v5033
  %v5035 = vlaneseq
  %v5036 = vshrl.u32 %v5035, 7
  %v5037 = vsub.s32 %v5034, %v5036
  %v5038 = vrot.slane %v4673, %v5037
  %v5039 = vcombine.high %v5038, %v5038
  %v5041 = vunpack.c.l.s4 1983009808
  %v5042 = vunpack.c.0.s8 %v5041
  %v5043 = vlaneseq
  %v5044 = vshrl.u32 %v5043, 7
  %v5045 = vsub.s32 %v5042, %v5044
  %v5046 = vrot.slane %v4675, %v5045
  %v5047 = vcombine.high %v5046, %v5046
  %v5049 = vunpack.c.l.s4 1983009808
  %v5050 = vunpack.c.0.s8 %v5049
  %v5051 = vlaneseq
  %v5052 = vshrl.u32 %v5051, 7
  %v5053 = vsub.s32 %v5050, %v5052
  %v5054 = vrot.slane %v4684, %v5053
  %v5055 = vcombine.high %v5054, %v5054
  %v5057 = vunpack.c.l.s4 1983009808
  %v5058 = vunpack.c.0.s8 %v5057
  %v5059 = vlaneseq
  %v5060 = vshrl.u32 %v5059, 7
  %v5061 = vsub.s32 %v5058, %v5060
  %v5062 = vrot.slane %v4691, %v5061
  %v5063 = vcombine.high %v5062, %v5062
  %v5065 = vunpack.c.l.s4 1983009808
  %v5066 = vunpack.c.0.s8 %v5065
  %v5067 = vlaneseq
  %v5068 = vshrl.u32 %v5067, 7
  %v5069 = vsub.s32 %v5066, %v5068
  %v5070 = vrot.slane %v4692, %v5069
  %v5071 = vcombine.high %v5070, %v5070
  %v5073 = vunpack.c.l.s4 1983009808
  %v5074 = vunpack.c.0.s8 %v5073
  %v5075 = vlaneseq
  %v5076 = vshrl.u32 %v5075, 7
  %v5077 = vsub.s32 %v5074, %v5076
  %v5078 = vrot.slane %v4701, %v5077
  %v5079 = vcombine.high %v5078, %v5078
  %v5081 = vunpack.c.l.s4 1983009808
  %v5082 = vunpack.c.0.s8 %v5081
  %v5083 = vlaneseq
  %v5084 = vshrl.u32 %v5083, 7
  %v5085 = vsub.s32 %v5082, %v5084
  %v5086 = vrot.slane %v4709, %v5085
  %v5087 = vcombine.high %v5086, %v5086
  %v5089 = vunpack.c.l.s4 1983009808
  %v5090 = vunpack.c.0.s8 %v5089
  %v5091 = vlaneseq
  %v5092 = vshrl.u32 %v5091, 7
  %v5093 = vsub.s32 %v5090, %v5092
  %v5094 = vrot.slane %v4710, %v5093
  %v5095 = vcombine.high %v5094, %v5094
  %v5097 = vunpack.c.l.s4 1983009808
  %v5098 = vunpack.c.0.s8 %v5097
  %v5099 = vlaneseq
  %v5100 = vshrl.u32 %v5099, 7
  %v5101 = vsub.s32 %v5098, %v5100
  %v5102 = vrot.slane %v4719, %v5101
  %v5103 = vcombine.high %v5102, %v5102
  %v5105 = vunpack.c.l.s4 1983009808
  %v5106 = vunpack.c.0.s8 %v5105
  %v5107 = vlaneseq
  %v5108 = vshrl.u32 %v5107, 7
  %v5109 = vsub.s32 %v5106, %v5108
  %v5110 = vrot.slane %v4727, %v5109
  %v5111 = vcombine.high %v5110, %v5110
  %v5113 = vunpack.c.l.s4 1983009808
  %v5114 = vunpack.c.0.s8 %v5113
  %v5115 = vlaneseq
  %v5116 = vshrl.u32 %v5115, 7
  %v5117 = vsub.s32 %v5114, %v5116
  %v5118 = vrot.slane %v4726, %v5117
  %v5119 = vcombine.high %v5118, %v5118
  %v5121 = vunpack.c.l.s4 1983009808
  %v5122 = vunpack.c.0.s8 %v5121
  %v5123 = vlaneseq
  %v5124 = vshrl.u32 %v5123, 7
  %v5125 = vsub.s32 %v5122, %v5124
  %v5126 = vrot.slane %v4736, %v5125
  %v5127 = vcombine.high %v5126, %v5126
  %v5129 = vunpack.c.l.s4 1983009808
  %v5130 = vunpack.c.0.s8 %v5129
  %v5131 = vlaneseq
  %v5132 = vshrl.u32 %v5131, 7
  %v5133 = vsub.s32 %v5130, %v5132
  %v5134 = vrot.slane %v4744, %v5133
  %v5135 = vcombine.high %v5134, %v5134
  %v5137 = vunpack.c.l.s4 1983009808
  %v5138 = vunpack.c.0.s8 %v5137
  %v5139 = vlaneseq
  %v5140 = vshrl.u32 %v5139, 7
  %v5141 = vsub.s32 %v5138, %v5140
  %v5142 = vrot.slane %v4743, %v5141
  %v5143 = vcombine.high %v5142, %v5142
  %v5145 = vunpack.c.l.s4 1983009808
  %v5146 = vunpack.c.0.s8 %v5145
  %v5147 = vlaneseq
  %v5148 = vshrl.u32 %v5147, 7
  %v5149 = vsub.s32 %v5146, %v5148
  %v5150 = vrot.slane %v4745, %v5149
  %v5151 = vcombine.high %v5150, %v5150
  %v5153 = vunpack.c.l.s4 1983009808
  %v5154 = vunpack.c.0.s8 %v5153
  %v5155 = vlaneseq
  %v5156 = vshrl.u32 %v5155, 7
  %v5157 = vsub.s32 %v5154, %v5156
  %v5158 = vrot.slane %v4762, %v5157
  %v5159 = vcombine.high %v5158, %v5158
  %v5161 = vunpack.c.l.s4 1983009808
  %v5162 = vunpack.c.0.s8 %v5161
  %v5163 = vlaneseq
  %v5164 = vshrl.u32 %v5163, 7
  %v5165 = vsub.s32 %v5162, %v5164
  %v5166 = vrot.slane %v4761, %v5165
  %v5167 = vcombine.high %v5166, %v5166
  %v5169 = vunpack.c.l.s4 1983009808
  %v5170 = vunpack.c.0.s8 %v5169
  %v5171 = vlaneseq
  %v5172 = vshrl.u32 %v5171, 7
  %v5173 = vsub.s32 %v5170, %v5172
  %v5174 = vrot.slane %v4763, %v5173
  %v5175 = vcombine.high %v5174, %v5174
  %v5177 = vunpack.c.l.s4 1983009808
  %v5178 = vunpack.c.0.s8 %v5177
  %v5179 = vlaneseq
  %v5180 = vshrl.u32 %v5179, 7
  %v5181 = vsub.s32 %v5178, %v5180
  %v5182 = vrot.slane %v4772, %v5181
  %v5183 = vcombine.high %v5182, %v5182
  %v5185 = vunpack.c.l.s4 1983009808
  %v5186 = vunpack.c.0.s8 %v5185
  %v5187 = vlaneseq
  %v5188 = vshrl.u32 %v5187, 7
  %v5189 = vsub.s32 %v5186, %v5188
  %v5190 = vrot.slane %v4779, %v5189
  %v5191 = vcombine.high %v5190, %v5190
  %v5193 = vunpack.c.l.s4 1983009808
  %v5194 = vunpack.c.0.s8 %v5193
  %v5195 = vlaneseq
  %v5196 = vshrl.u32 %v5195, 7
  %v5197 = vsub.s32 %v5194, %v5196
  %v5198 = vrot.slane %v4780, %v5197
  %v5199 = vcombine.high %v5198, %v5198
  %v5201 = vunpack.c.l.s4 1983009808
  %v5202 = vunpack.c.0.s8 %v5201
  %v5203 = vlaneseq
  %v5204 = vshrl.u32 %v5203, 7
  %v5205 = vsub.s32 %v5202, %v5204
  %v5206 = vrot.slane %v4789, %v5205
  %v5207 = vcombine.high %v5206, %v5206
  %v5209 = vunpack.c.l.s4 1983009808
  %v5210 = vunpack.c.0.s8 %v5209
  %v5211 = vlaneseq
  %v5212 = vshrl.u32 %v5211, 7
  %v5213 = vsub.s32 %v5210, %v5212
  %v5214 = vrot.slane %v4797, %v5213
  %v5215 = vcombine.high %v5214, %v5214
  %v5217 = vunpack.c.l.s4 1983009808
  %v5218 = vunpack.c.0.s8 %v5217
  %v5219 = vlaneseq
  %v5220 = vshrl.u32 %v5219, 7
  %v5221 = vsub.s32 %v5218, %v5220
  %v5222 = vrot.slane %v4798, %v5221
  %v5223 = vcombine.high %v5222, %v5222
  %v5225 = vunpack.c.l.s4 1983009808
  %v5226 = vunpack.c.0.s8 %v5225
  %v5227 = vlaneseq
  %v5228 = vshrl.u32 %v5227, 7
  %v5229 = vsub.s32 %v5226, %v5228
  %v5230 = vrot.slane %v4807, %v5229
  %v5231 = vcombine.high %v5230, %v5230
  %v5233 = vunpack.c.l.s4 1983009808
  %v5234 = vunpack.c.0.s8 %v5233
  %v5235 = vlaneseq
  %v5236 = vshrl.u32 %v5235, 7
  %v5237 = vsub.s32 %v5234, %v5236
  %v5238 = vrot.slane %v4815, %v5237
  %v5239 = vcombine.high %v5238, %v5238
  %v5241 = vunpack.c.l.s4 1983009808
  %v5242 = vunpack.c.0.s8 %v5241
  %v5243 = vlaneseq
  %v5244 = vshrl.u32 %v5243, 7
  %v5245 = vsub.s32 %v5242, %v5244
  %v5246 = vrot.slane %v4814, %v5245
  %v5247 = vcombine.high %v5246, %v5246
  %v5249 = vunpack.c.l.s4 1983009808
  %v5250 = vunpack.c.0.s8 %v5249
  %v5251 = vlaneseq
  %v5252 = vshrl.u32 %v5251, 7
  %v5253 = vsub.s32 %v5250, %v5252
  %v5254 = vrot.slane %v4824, %v5253
  %v5255 = vcombine.high %v5254, %v5254
  %v5257 = vunpack.c.l.s4 1983009808
  %v5258 = vunpack.c.0.s8 %v5257
  %v5259 = vlaneseq
  %v5260 = vshrl.u32 %v5259, 7
  %v5261 = vsub.s32 %v5258, %v5260
  %v5262 = vrot.slane %v4832, %v5261
  %v5263 = vcombine.high %v5262, %v5262
  %v5265 = vunpack.c.l.s4 1983009808
  %v5266 = vunpack.c.0.s8 %v5265
  %v5267 = vlaneseq
  %v5268 = vshrl.u32 %v5267, 7
  %v5269 = vsub.s32 %v5266, %v5268
  %v5270 = vrot.slane %v4831, %v5269
  %v5271 = vcombine.high %v5270, %v5270
  %v5273 = vunpack.c.l.s4 1983009808
  %v5274 = vunpack.c.0.s8 %v5273
  %v5275 = vlaneseq
  %v5276 = vshrl.u32 %v5275, 7
  %v5277 = vsub.s32 %v5274, %v5276
  %v5278 = vrot.slane %v4833, %v5277
  %v5279 = vcombine.high %v5278, %v5278
  %v5281 = vunpack.c.l.s4 1983009808
  %v5282 = vunpack.c.0.s8 %v5281
  %v5283 = vlaneseq
  %v5284 = vshrl.u32 %v5283, 7
  %v5285 = vsub.s32 %v5282, %v5284
  %v5286 = vrot.slane %v4850, %v5285
  %v5287 = vcombine.high %v5286, %v5286
  %v5289 = vunpack.c.l.s4 1983009808
  %v5290 = vunpack.c.0.s8 %v5289
  %v5291 = vlaneseq
  %v5292 = vshrl.u32 %v5291, 7
  %v5293 = vsub.s32 %v5290, %v5292
  %v5294 = vrot.slane %v4849, %v5293
  %v5295 = vcombine.high %v5294, %v5294
  %v5297 = vunpack.c.l.s4 1983009808
  %v5298 = vunpack.c.0.s8 %v5297
  %v5299 = vlaneseq
  %v5300 = vshrl.u32 %v5299, 7
  %v5301 = vsub.s32 %v5298, %v5300
  %v5302 = vrot.slane %v4851, %v5301
  %v5303 = vcombine.high %v5302, %v5302
  %v5305 = vunpack.c.l.s4 1983009808
  %v5306 = vunpack.c.0.s8 %v5305
  %v5307 = vlaneseq
  %v5308 = vshrl.u32 %v5307, 7
  %v5309 = vsub.s32 %v5306, %v5308
  %v5310 = vrot.slane %v4860, %v5309
  %v5311 = vcombine.high %v5310, %v5310
  %v5313 = vunpack.c.l.s4 1983009808
  %v5314 = vunpack.c.0.s8 %v5313
  %v5315 = vlaneseq
  %v5316 = vshrl.u32 %v5315, 7
  %v5317 = vsub.s32 %v5314, %v5316
  %v5318 = vrot.slane %v4867, %v5317
  %v5319 = vcombine.high %v5318, %v5318
  %v5321 = vunpack.c.l.s4 1983009808
  %v5322 = vunpack.c.0.s8 %v5321
  %v5323 = vlaneseq
  %v5324 = vshrl.u32 %v5323, 7
  %v5325 = vsub.s32 %v5322, %v5324
  %v5326 = vrot.slane %v4868, %v5325
  %v5327 = vcombine.high %v5326, %v5326
  %v5329 = vunpack.c.l.s4 1983009808
  %v5330 = vunpack.c.0.s8 %v5329
  %v5331 = vlaneseq
  %v5332 = vshrl.u32 %v5331, 7
  %v5333 = vsub.s32 %v5330, %v5332
  %v5334 = vrot.slane %v4877, %v5333
  %v5335 = vcombine.high %v5334, %v5334
  %v5337 = vunpack.c.l.s4 1983009808
  %v5338 = vunpack.c.0.s8 %v5337
  %v5339 = vlaneseq
  %v5340 = vshrl.u32 %v5339, 7
  %v5341 = vsub.s32 %v5338, %v5340
  %v5342 = vrot.slane %v4885, %v5341
  %v5343 = vcombine.high %v5342, %v5342
  %v5345 = vunpack.c.l.s4 1983009808
  %v5346 = vunpack.c.0.s8 %v5345
  %v5347 = vlaneseq
  %v5348 = vshrl.u32 %v5347, 7
  %v5349 = vsub.s32 %v5346, %v5348
  %v5350 = vrot.slane %v4886, %v5349
  %v5351 = vcombine.high %v5350, %v5350
  %v5353 = vunpack.c.l.s4 1983009808
  %v5354 = vunpack.c.0.s8 %v5353
  %v5355 = vlaneseq
  %v5356 = vshrl.u32 %v5355, 7
  %v5357 = vsub.s32 %v5354, %v5356
  %v5358 = vrot.slane %v4895, %v5357
  %v5359 = vcombine.high %v5358, %v5358
  %v5361 = vunpack.c.l.s4 1983009808
  %v5362 = vunpack.c.0.s8 %v5361
  %v5363 = vlaneseq
  %v5364 = vshrl.u32 %v5363, 7
  %v5365 = vsub.s32 %v5362, %v5364
  %v5366 = vrot.slane %v4903, %v5365
  %v5367 = vcombine.high %v5366, %v5366
  %v5369 = vunpack.c.l.s4 1983009808
  %v5370 = vunpack.c.0.s8 %v5369
  %v5371 = vlaneseq
  %v5372 = vshrl.u32 %v5371, 7
  %v5373 = vsub.s32 %v5370, %v5372
  %v5374 = vrot.slane %v4902, %v5373
  %v5375 = vcombine.high %v5374, %v5374
  %v5377 = vunpack.c.l.s4 1983009808
  %v5378 = vunpack.c.0.s8 %v5377
  %v5379 = vlaneseq
  %v5380 = vshrl.u32 %v5379, 7
  %v5381 = vsub.s32 %v5378, %v5380
  %v5382 = vrot.slane %v4912, %v5381
  %v5383 = vcombine.high %v5382, %v5382
  %v5385 = vunpack.c.l.s4 1983009808
  %v5386 = vunpack.c.0.s8 %v5385
  %v5387 = vlaneseq
  %v5388 = vshrl.u32 %v5387, 7
  %v5389 = vsub.s32 %v5386, %v5388
  %v5390 = vrot.slane %v4920, %v5389
  %v5391 = vcombine.high %v5390, %v5390
  %v5393 = vunpack.c.l.s4 1983009808
  %v5394 = vunpack.c.0.s8 %v5393
  %v5395 = vlaneseq
  %v5396 = vshrl.u32 %v5395, 7
  %v5397 = vsub.s32 %v5394, %v5396
  %v5398 = vrot.slane %v4919, %v5397
  %v5399 = vcombine.high %v5398, %v5398
  %v5401 = vunpack.c.l.s4 1983009808
  %v5402 = vunpack.c.0.s8 %v5401
  %v5403 = vlaneseq
  %v5404 = vshrl.u32 %v5403, 7
  %v5405 = vsub.s32 %v5402, %v5404
  %v5406 = vrot.slane %v4921, %v5405
  %v5407 = vcombine.high %v5406, %v5406
  %v5409 = vunpack.c.l.s4 1983009808
  %v5410 = vunpack.c.0.s8 %v5409
  %v5411 = vlaneseq
  %v5412 = vshrl.u32 %v5411, 7
  %v5413 = vsub.s32 %v5410, %v5412
  %v5414 = vrot.slane %v4938, %v5413
  %v5415 = vcombine.high %v5414, %v5414
  %v5417 = vunpack.c.l.s4 1983009808
  %v5418 = vunpack.c.0.s8 %v5417
  %v5419 = vlaneseq
  %v5420 = vshrl.u32 %v5419, 7
  %v5421 = vsub.s32 %v5418, %v5420
  %v5422 = vrot.slane %v4937, %v5421
  %v5423 = vcombine.high %v5422, %v5422
  %v5425 = vunpack.c.l.s4 1983009808
  %v5426 = vunpack.c.0.s8 %v5425
  %v5427 = vlaneseq
  %v5428 = vshrl.u32 %v5427, 7
  %v5429 = vsub.s32 %v5426, %v5428
  %v5430 = vrot.slane %v4939, %v5429
  %v5431 = vcombine.high %v5430, %v5430
  %v5433 = vunpack.c.l.s4 1983009808
  %v5434 = vunpack.c.0.s8 %v5433
  %v5435 = vlaneseq
  %v5436 = vshrl.u32 %v5435, 7
  %v5437 = vsub.s32 %v5434, %v5436
  %v5438 = vrot.slane %v4948, %v5437
  %v5439 = vcombine.high %v5438, %v5438
  %v5441 = vunpack.c.l.s4 1983009808
  %v5442 = vunpack.c.0.s8 %v5441
  %v5443 = vlaneseq
  %v5444 = vshrl.u32 %v5443, 7
  %v5445 = vsub.s32 %v5442, %v5444
  %v5446 = vrot.slane %v4955, %v5445
  %v5447 = vcombine.high %v5446, %v5446
  %v5449 = vunpack.c.l.s4 1983009808
  %v5450 = vunpack.c.0.s8 %v5449
  %v5451 = vlaneseq
  %v5452 = vshrl.u32 %v5451, 7
  %v5453 = vsub.s32 %v5450, %v5452
  %v5454 = vrot.slane %v4956, %v5453
  %v5455 = vcombine.high %v5454, %v5454
  %v5457 = vunpack.c.l.s4 1983009808
  %v5458 = vunpack.c.0.s8 %v5457
  %v5459 = vlaneseq
  %v5460 = vshrl.u32 %v5459, 7
  %v5461 = vsub.s32 %v5458, %v5460
  %v5462 = vrot.slane %v4965, %v5461
  %v5463 = vcombine.high %v5462, %v5462
  %v5465 = vunpack.c.l.s4 1983009808
  %v5466 = vunpack.c.0.s8 %v5465
  %v5467 = vlaneseq
  %v5468 = vshrl.u32 %v5467, 7
  %v5469 = vsub.s32 %v5466, %v5468
  %v5470 = vrot.slane %v4973, %v5469
  %v5471 = vcombine.high %v5470, %v5470
  %v5473 = vunpack.c.l.s4 1983009808
  %v5474 = vunpack.c.0.s8 %v5473
  %v5475 = vlaneseq
  %v5476 = vshrl.u32 %v5475, 7
  %v5477 = vsub.s32 %v5474, %v5476
  %v5478 = vrot.slane %v4974, %v5477
  %v5479 = vcombine.high %v5478, %v5478
  %v5481 = vunpack.c.l.s4 1983009808
  %v5482 = vunpack.c.0.s8 %v5481
  %v5483 = vlaneseq
  %v5484 = vshrl.u32 %v5483, 7
  %v5485 = vsub.s32 %v5482, %v5484
  %v5486 = vrot.slane %v4983, %v5485
  %v5487 = vcombine.high %v5486, %v5486
  %v5489 = vunpack.c.l.s4 1983009808
  %v5490 = vunpack.c.0.s8 %v5489
  %v5491 = vlaneseq
  %v5492 = vshrl.u32 %v5491, 7
  %v5493 = vsub.s32 %v5490, %v5492
  %v5494 = vrot.slane %v4991, %v5493
  %v5495 = vcombine.high %v5494, %v5494
  %v5497 = vunpack.c.l.s4 1983009808
  %v5498 = vunpack.c.0.s8 %v5497
  %v5499 = vlaneseq
  %v5500 = vshrl.u32 %v5499, 7
  %v5501 = vsub.s32 %v5498, %v5500
  %v5502 = vrot.slane %v4990, %v5501
  %v5503 = vcombine.high %v5502, %v5502
  %vm5632 = vcmask 1041408
  %v5633 = vsel %vm5632, %v4998, -inf
  %v5634 = vrot.slane %v5633, 4
  %v5635 = vmax.f32 %v5633, %v5634
  %v5636 = vrot.slane %v5635, 2
  %v5637 = vmax.f32 %v5635, %v5636
  %v5638 = vrot.slane %v5637, 1
  %v5639 = vmax.f32 %v5637, %v5638
  %v5640 = vsel %vm5632, %v4999, -inf
  %v5641 = vrot.slane %v5640, 4
  %v5642 = vmax.f32 %v5640, %v5641
  %v5643 = vrot.slane %v5642, 2
  %v5644 = vmax.f32 %v5642, %v5643
  %v5645 = vrot.slane %v5644, 1
  %v5646 = vmax.f32 %v5644, %v5645
  %v5647 = vsel %vm5632, %v5006, -inf
  %v5648 = vrot.slane %v5647, 4
  %v5649 = vmax.f32 %v5647, %v5648
  %v5650 = vrot.slane %v5649, 2
  %v5651 = vmax.f32 %v5649, %v5650
  %v5652 = vrot.slane %v5651, 1
  %v5653 = vmax.f32 %v5651, %v5652
  %v5654 = vsel %vm5632, %v5007, -inf
  %v5655 = vrot.slane %v5654, 4
  %v5656 = vmax.f32 %v5654, %v5655
  %v5657 = vrot.slane %v5656, 2
  %v5658 = vmax.f32 %v5656, %v5657
  %v5659 = vrot.slane %v5658, 1
  %v5660 = vmax.f32 %v5658, %v5659
  %v5661 = vsel %vm5632, %v5014, -inf
  %v5662 = vrot.slane %v5661, 4
  %v5663 = vmax.f32 %v5661, %v5662
  %v5664 = vrot.slane %v5663, 2
  %v5665 = vmax.f32 %v5663, %v5664
  %v5666 = vrot.slane %v5665, 1
  %v5667 = vmax.f32 %v5665, %v5666
  %v5668 = vsel %vm5632, %v5015, -inf
  %v5669 = vrot.slane %v5668, 4
  %v5670 = vmax.f32 %v5668, %v5669
  %v5671 = vrot.slane %v5670, 2
  %v5672 = vmax.f32 %v5670, %v5671
  %v5673 = vrot.slane %v5672, 1
  %v5674 = vmax.f32 %v5672, %v5673
  %v5675 = vsel %vm5632, %v5022, -inf
  %v5676 = vrot.slane %v5675, 4
  %v5677 = vmax.f32 %v5675, %v5676
  %v5678 = vrot.slane %v5677, 2
  %v5679 = vmax.f32 %v5677, %v5678
  %v5680 = vrot.slane %v5679, 1
  %v5681 = vmax.f32 %v5679, %v5680
  %v5682 = vsel %vm5632, %v5023, -inf
  %v5683 = vrot.slane %v5682, 4
  %v5684 = vmax.f32 %v5682, %v5683
  %v5685 = vrot.slane %v5684, 2
  %v5686 = vmax.f32 %v5684, %v5685
  %v5687 = vrot.slane %v5686, 1
  %v5688 = vmax.f32 %v5686, %v5687
  %v5689 = vsel %vm5632, %v5030, -inf
  %v5690 = vrot.slane %v5689, 4
  %v5691 = vmax.f32 %v5689, %v5690
  %v5692 = vrot.slane %v5691, 2
  %v5693 = vmax.f32 %v5691, %v5692
  %v5694 = vrot.slane %v5693, 1
  %v5695 = vmax.f32 %v5693, %v5694
  %v5696 = vsel %vm5632, %v5031, -inf
  %v5697 = vrot.slane %v5696, 4
  %v5698 = vmax.f32 %v5696, %v5697
  %v5699 = vrot.slane %v5698, 2
  %v5700 = vmax.f32 %v5698, %v5699
  %v5701 = vrot.slane %v5700, 1
  %v5702 = vmax.f32 %v5700, %v5701
  %v5703 = vsel %vm5632, %v5038, -inf
  %v5704 = vrot.slane %v5703, 4
  %v5705 = vmax.f32 %v5703, %v5704
  %v5706 = vrot.slane %v5705, 2
  %v5707 = vmax.f32 %v5705, %v5706
  %v5708 = vrot.slane %v5707, 1
  %v5709 = vmax.f32 %v5707, %v5708
  %v5710 = vsel %vm5632, %v5039, -inf
  %v5711 = vrot.slane %v5710, 4
  %v5712 = vmax.f32 %v5710, %v5711
  %v5713 = vrot.slane %v5712, 2
  %v5714 = vmax.f32 %v5712, %v5713
  %v5715 = vrot.slane %v5714, 1
  %v5716 = vmax.f32 %v5714, %v5715
  %v5717 = vsel %vm5632, %v5046, -inf
  %v5718 = vrot.slane %v5717, 4
  %v5719 = vmax.f32 %v5717, %v5718
  %v5720 = vrot.slane %v5719, 2
  %v5721 = vmax.f32 %v5719, %v5720
  %v5722 = vrot.slane %v5721, 1
  %v5723 = vmax.f32 %v5721, %v5722
  %v5724 = vsel %vm5632, %v5047, -inf
  %v5725 = vrot.slane %v5724, 4
  %v5726 = vmax.f32 %v5724, %v5725
  %v5727 = vrot.slane %v5726, 2
  %v5728 = vmax.f32 %v5726, %v5727
  %v5729 = vrot.slane %v5728, 1
  %v5730 = vmax.f32 %v5728, %v5729
  %v5731 = vsel %vm5632, %v5054, -inf
  %v5732 = vrot.slane %v5731, 4
  %v5733 = vmax.f32 %v5731, %v5732
  %v5734 = vrot.slane %v5733, 2
  %v5735 = vmax.f32 %v5733, %v5734
  %v5736 = vrot.slane %v5735, 1
  %v5737 = vmax.f32 %v5735, %v5736
  %v5738 = vsel %vm5632, %v5055, -inf
  %v5739 = vrot.slane %v5738, 4
  %v5740 = vmax.f32 %v5738, %v5739
  %v5741 = vrot.slane %v5740, 2
  %v5742 = vmax.f32 %v5740, %v5741
  %v5743 = vrot.slane %v5742, 1
  %v5744 = vmax.f32 %v5742, %v5743
  %v5745 = vsel %vm5632, %v5062, -inf
  %v5746 = vrot.slane %v5745, 4
  %v5747 = vmax.f32 %v5745, %v5746
  %v5748 = vrot.slane %v5747, 2
  %v5749 = vmax.f32 %v5747, %v5748
  %v5750 = vrot.slane %v5749, 1
  %v5751 = vmax.f32 %v5749, %v5750
  %v5752 = vsel %vm5632, %v5063, -inf
  %v5753 = vrot.slane %v5752, 4
  %v5754 = vmax.f32 %v5752, %v5753
  %v5755 = vrot.slane %v5754, 2
  %v5756 = vmax.f32 %v5754, %v5755
  %v5757 = vrot.slane %v5756, 1
  %v5758 = vmax.f32 %v5756, %v5757
  %v5759 = vsel %vm5632, %v5070, -inf
  %v5760 = vrot.slane %v5759, 4
  %v5761 = vmax.f32 %v5759, %v5760
  %v5762 = vrot.slane %v5761, 2
  %v5763 = vmax.f32 %v5761, %v5762
  %v5764 = vrot.slane %v5763, 1
  %v5765 = vmax.f32 %v5763, %v5764
  %v5766 = vsel %vm5632, %v5071, -inf
  %v5767 = vrot.slane %v5766, 4
  %v5768 = vmax.f32 %v5766, %v5767
  %v5769 = vrot.slane %v5768, 2
  %v5770 = vmax.f32 %v5768, %v5769
  %v5771 = vrot.slane %v5770, 1
  %v5772 = vmax.f32 %v5770, %v5771
  %v5773 = vsel %vm5632, %v5078, -inf
  %v5774 = vrot.slane %v5773, 4
  %v5775 = vmax.f32 %v5773, %v5774
  %v5776 = vrot.slane %v5775, 2
  %v5777 = vmax.f32 %v5775, %v5776
  %v5778 = vrot.slane %v5777, 1
  %v5779 = vmax.f32 %v5777, %v5778
  %v5780 = vsel %vm5632, %v5079, -inf
  %v5781 = vrot.slane %v5780, 4
  %v5782 = vmax.f32 %v5780, %v5781
  %v5783 = vrot.slane %v5782, 2
  %v5784 = vmax.f32 %v5782, %v5783
  %v5785 = vrot.slane %v5784, 1
  %v5786 = vmax.f32 %v5784, %v5785
  %v5787 = vsel %vm5632, %v5086, -inf
  %v5788 = vrot.slane %v5787, 4
  %v5789 = vmax.f32 %v5787, %v5788
  %v5790 = vrot.slane %v5789, 2
  %v5791 = vmax.f32 %v5789, %v5790
  %v5792 = vrot.slane %v5791, 1
  %v5793 = vmax.f32 %v5791, %v5792
  %v5794 = vsel %vm5632, %v5087, -inf
  %v5795 = vrot.slane %v5794, 4
  %v5796 = vmax.f32 %v5794, %v5795
  %v5797 = vrot.slane %v5796, 2
  %v5798 = vmax.f32 %v5796, %v5797
  %v5799 = vrot.slane %v5798, 1
  %v5800 = vmax.f32 %v5798, %v5799
  %v5801 = vsel %vm5632, %v5094, -inf
  %v5802 = vrot.slane %v5801, 4
  %v5803 = vmax.f32 %v5801, %v5802
  %v5804 = vrot.slane %v5803, 2
  %v5805 = vmax.f32 %v5803, %v5804
  %v5806 = vrot.slane %v5805, 1
  %v5807 = vmax.f32 %v5805, %v5806
  %v5808 = vsel %vm5632, %v5095, -inf
  %v5809 = vrot.slane %v5808, 4
  %v5810 = vmax.f32 %v5808, %v5809
  %v5811 = vrot.slane %v5810, 2
  %v5812 = vmax.f32 %v5810, %v5811
  %v5813 = vrot.slane %v5812, 1
  %v5814 = vmax.f32 %v5812, %v5813
  %v5815 = vsel %vm5632, %v5102, -inf
  %v5816 = vrot.slane %v5815, 4
  %v5817 = vmax.f32 %v5815, %v5816
  %v5818 = vrot.slane %v5817, 2
  %v5819 = vmax.f32 %v5817, %v5818
  %v5820 = vrot.slane %v5819, 1
  %v5821 = vmax.f32 %v5819, %v5820
  %v5822 = vsel %vm5632, %v5103, -inf
  %v5823 = vrot.slane %v5822, 4
  %v5824 = vmax.f32 %v5822, %v5823
  %v5825 = vrot.slane %v5824, 2
  %v5826 = vmax.f32 %v5824, %v5825
  %v5827 = vrot.slane %v5826, 1
  %v5828 = vmax.f32 %v5826, %v5827
  %v5829 = vsel %vm5632, %v5110, -inf
  %v5830 = vrot.slane %v5829, 4
  %v5831 = vmax.f32 %v5829, %v5830
  %v5832 = vrot.slane %v5831, 2
  %v5833 = vmax.f32 %v5831, %v5832
  %v5834 = vrot.slane %v5833, 1
  %v5835 = vmax.f32 %v5833, %v5834
  %v5836 = vsel %vm5632, %v5111, -inf
  %v5837 = vrot.slane %v5836, 4
  %v5838 = vmax.f32 %v5836, %v5837
  %v5839 = vrot.slane %v5838, 2
  %v5840 = vmax.f32 %v5838, %v5839
  %v5841 = vrot.slane %v5840, 1
  %v5842 = vmax.f32 %v5840, %v5841
  %v5843 = vsel %vm5632, %v5118, -inf
  %v5844 = vrot.slane %v5843, 4
  %v5845 = vmax.f32 %v5843, %v5844
  %v5846 = vrot.slane %v5845, 2
  %v5847 = vmax.f32 %v5845, %v5846
  %v5848 = vrot.slane %v5847, 1
  %v5849 = vmax.f32 %v5847, %v5848
  %v5850 = vsel %vm5632, %v5119, -inf
  %v5851 = vrot.slane %v5850, 4
  %v5852 = vmax.f32 %v5850, %v5851
  %v5853 = vrot.slane %v5852, 2
  %v5854 = vmax.f32 %v5852, %v5853
  %v5855 = vrot.slane %v5854, 1
  %v5856 = vmax.f32 %v5854, %v5855
  %v5857 = vsel %vm5632, %v5126, -inf
  %v5858 = vrot.slane %v5857, 4
  %v5859 = vmax.f32 %v5857, %v5858
  %v5860 = vrot.slane %v5859, 2
  %v5861 = vmax.f32 %v5859, %v5860
  %v5862 = vrot.slane %v5861, 1
  %v5863 = vmax.f32 %v5861, %v5862
  %v5864 = vsel %vm5632, %v5127, -inf
  %v5865 = vrot.slane %v5864, 4
  %v5866 = vmax.f32 %v5864, %v5865
  %v5867 = vrot.slane %v5866, 2
  %v5868 = vmax.f32 %v5866, %v5867
  %v5869 = vrot.slane %v5868, 1
  %v5870 = vmax.f32 %v5868, %v5869
  %v5871 = vsel %vm5632, %v5134, -inf
  %v5872 = vrot.slane %v5871, 4
  %v5873 = vmax.f32 %v5871, %v5872
  %v5874 = vrot.slane %v5873, 2
  %v5875 = vmax.f32 %v5873, %v5874
  %v5876 = vrot.slane %v5875, 1
  %v5877 = vmax.f32 %v5875, %v5876
  %v5878 = vsel %vm5632, %v5135, -inf
  %v5879 = vrot.slane %v5878, 4
  %v5880 = vmax.f32 %v5878, %v5879
  %v5881 = vrot.slane %v5880, 2
  %v5882 = vmax.f32 %v5880, %v5881
  %v5883 = vrot.slane %v5882, 1
  %v5884 = vmax.f32 %v5882, %v5883
  %v5885 = vsel %vm5632, %v5142, -inf
  %v5886 = vrot.slane %v5885, 4
  %v5887 = vmax.f32 %v5885, %v5886
  %v5888 = vrot.slane %v5887, 2
  %v5889 = vmax.f32 %v5887, %v5888
  %v5890 = vrot.slane %v5889, 1
  %v5891 = vmax.f32 %v5889, %v5890
  %v5892 = vsel %vm5632, %v5143, -inf
  %v5893 = vrot.slane %v5892, 4
  %v5894 = vmax.f32 %v5892, %v5893
  %v5895 = vrot.slane %v5894, 2
  %v5896 = vmax.f32 %v5894, %v5895
  %v5897 = vrot.slane %v5896, 1
  %v5898 = vmax.f32 %v5896, %v5897
  %v5899 = vsel %vm5632, %v5150, -inf
  %v5900 = vrot.slane %v5899, 4
  %v5901 = vmax.f32 %v5899, %v5900
  %v5902 = vrot.slane %v5901, 2
  %v5903 = vmax.f32 %v5901, %v5902
  %v5904 = vrot.slane %v5903, 1
  %v5905 = vmax.f32 %v5903, %v5904
  %v5906 = vsel %vm5632, %v5151, -inf
  %v5907 = vrot.slane %v5906, 4
  %v5908 = vmax.f32 %v5906, %v5907
  %v5909 = vrot.slane %v5908, 2
  %v5910 = vmax.f32 %v5908, %v5909
  %v5911 = vrot.slane %v5910, 1
  %v5912 = vmax.f32 %v5910, %v5911
  %v5913 = vsel %vm5632, %v5158, -inf
  %v5914 = vrot.slane %v5913, 4
  %v5915 = vmax.f32 %v5913, %v5914
  %v5916 = vrot.slane %v5915, 2
  %v5917 = vmax.f32 %v5915, %v5916
  %v5918 = vrot.slane %v5917, 1
  %v5919 = vmax.f32 %v5917, %v5918
  %v5920 = vsel %vm5632, %v5159, -inf
  %v5921 = vrot.slane %v5920, 4
  %v5922 = vmax.f32 %v5920, %v5921
  %v5923 = vrot.slane %v5922, 2
  %v5924 = vmax.f32 %v5922, %v5923
  %v5925 = vrot.slane %v5924, 1
  %v5926 = vmax.f32 %v5924, %v5925
  %v5927 = vsel %vm5632, %v5166, -inf
  %v5928 = vrot.slane %v5927, 4
  %v5929 = vmax.f32 %v5927, %v5928
  %v5930 = vrot.slane %v5929, 2
  %v5931 = vmax.f32 %v5929, %v5930
  %v5932 = vrot.slane %v5931, 1
  %v5933 = vmax.f32 %v5931, %v5932
  %v5934 = vsel %vm5632, %v5167, -inf
  %v5935 = vrot.slane %v5934, 4
  %v5936 = vmax.f32 %v5934, %v5935
  %v5937 = vrot.slane %v5936, 2
  %v5938 = vmax.f32 %v5936, %v5937
  %v5939 = vrot.slane %v5938, 1
  %v5940 = vmax.f32 %v5938, %v5939
  %v5941 = vsel %vm5632, %v5174, -inf
  %v5942 = vrot.slane %v5941, 4
  %v5943 = vmax.f32 %v5941, %v5942
  %v5944 = vrot.slane %v5943, 2
  %v5945 = vmax.f32 %v5943, %v5944
  %v5946 = vrot.slane %v5945, 1
  %v5947 = vmax.f32 %v5945, %v5946
  %v5948 = vsel %vm5632, %v5175, -inf
  %v5949 = vrot.slane %v5948, 4
  %v5950 = vmax.f32 %v5948, %v5949
  %v5951 = vrot.slane %v5950, 2
  %v5952 = vmax.f32 %v5950, %v5951
  %v5953 = vrot.slane %v5952, 1
  %v5954 = vmax.f32 %v5952, %v5953
  %v5955 = vsel %vm5632, %v5182, -inf
  %v5956 = vrot.slane %v5955, 4
  %v5957 = vmax.f32 %v5955, %v5956
  %v5958 = vrot.slane %v5957, 2
  %v5959 = vmax.f32 %v5957, %v5958
  %v5960 = vrot.slane %v5959, 1
  %v5961 = vmax.f32 %v5959, %v5960
  %v5962 = vsel %vm5632, %v5183, -inf
  %v5963 = vrot.slane %v5962, 4
  %v5964 = vmax.f32 %v5962, %v5963
  %v5965 = vrot.slane %v5964, 2
  %v5966 = vmax.f32 %v5964, %v5965
  %v5967 = vrot.slane %v5966, 1
  %v5968 = vmax.f32 %v5966, %v5967
  %v5969 = vsel %vm5632, %v5190, -inf
  %v5970 = vrot.slane %v5969, 4
  %v5971 = vmax.f32 %v5969, %v5970
  %v5972 = vrot.slane %v5971, 2
  %v5973 = vmax.f32 %v5971, %v5972
  %v5974 = vrot.slane %v5973, 1
  %v5975 = vmax.f32 %v5973, %v5974
  %v5976 = vsel %vm5632, %v5191, -inf
  %v5977 = vrot.slane %v5976, 4
  %v5978 = vmax.f32 %v5976, %v5977
  %v5979 = vrot.slane %v5978, 2
  %v5980 = vmax.f32 %v5978, %v5979
  %v5981 = vrot.slane %v5980, 1
  %v5982 = vmax.f32 %v5980, %v5981
  %v5983 = vsel %vm5632, %v5198, -inf
  %v5984 = vrot.slane %v5983, 4
  %v5985 = vmax.f32 %v5983, %v5984
  %v5986 = vrot.slane %v5985, 2
  %v5987 = vmax.f32 %v5985, %v5986
  %v5988 = vrot.slane %v5987, 1
  %v5989 = vmax.f32 %v5987, %v5988
  %v5990 = vsel %vm5632, %v5199, -inf
  %v5991 = vrot.slane %v5990, 4
  %v5992 = vmax.f32 %v5990, %v5991
  %v5993 = vrot.slane %v5992, 2
  %v5994 = vmax.f32 %v5992, %v5993
  %v5995 = vrot.slane %v5994, 1
  %v5996 = vmax.f32 %v5994, %v5995
  %v5997 = vsel %vm5632, %v5206, -inf
  %v5998 = vrot.slane %v5997, 4
  %v5999 = vmax.f32 %v5997, %v5998
  %v6000 = vrot.slane %v5999, 2
  %v6001 = vmax.f32 %v5999, %v6000
  %v6002 = vrot.slane %v6001, 1
  %v6003 = vmax.f32 %v6001, %v6002
  %v6004 = vsel %vm5632, %v5207, -inf
  %v6005 = vrot.slane %v6004, 4
  %v6006 = vmax.f32 %v6004, %v6005
  %v6007 = vrot.slane %v6006, 2
  %v6008 = vmax.f32 %v6006, %v6007
  %v6009 = vrot.slane %v6008, 1
  %v6010 = vmax.f32 %v6008, %v6009
  %v6011 = vsel %vm5632, %v5214, -inf
  %v6012 = vrot.slane %v6011, 4
  %v6013 = vmax.f32 %v6011, %v6012
  %v6014 = vrot.slane %v6013, 2
  %v6015 = vmax.f32 %v6013, %v6014
  %v6016 = vrot.slane %v6015, 1
  %v6017 = vmax.f32 %v6015, %v6016
  %v6018 = vsel %vm5632, %v5215, -inf
  %v6019 = vrot.slane %v6018, 4
  %v6020 = vmax.f32 %v6018, %v6019
  %v6021 = vrot.slane %v6020, 2
  %v6022 = vmax.f32 %v6020, %v6021
  %v6023 = vrot.slane %v6022, 1
  %v6024 = vmax.f32 %v6022, %v6023
  %v6025 = vsel %vm5632, %v5222, -inf
  %v6026 = vrot.slane %v6025, 4
  %v6027 = vmax.f32 %v6025, %v6026
  %v6028 = vrot.slane %v6027, 2
  %v6029 = vmax.f32 %v6027, %v6028
  %v6030 = vrot.slane %v6029, 1
  %v6031 = vmax.f32 %v6029, %v6030
  %v6032 = vsel %vm5632, %v5223, -inf
  %v6033 = vrot.slane %v6032, 4
  %v6034 = vmax.f32 %v6032, %v6033
  %v6035 = vrot.slane %v6034, 2
  %v6036 = vmax.f32 %v6034, %v6035
  %v6037 = vrot.slane %v6036, 1
  %v6038 = vmax.f32 %v6036, %v6037
  %v6039 = vsel %vm5632, %v5230, -inf
  %v6040 = vrot.slane %v6039, 4
  %v6041 = vmax.f32 %v6039, %v6040
  %v6042 = vrot.slane %v6041, 2
  %v6043 = vmax.f32 %v6041, %v6042
  %v6044 = vrot.slane %v6043, 1
  %v6045 = vmax.f32 %v6043, %v6044
  %v6046 = vsel %vm5632, %v5231, -inf
  %v6047 = vrot.slane %v6046, 4
  %v6048 = vmax.f32 %v6046, %v6047
  %v6049 = vrot.slane %v6048, 2
  %v6050 = vmax.f32 %v6048, %v6049
  %v6051 = vrot.slane %v6050, 1
  %v6052 = vmax.f32 %v6050, %v6051
  %v6053 = vsel %vm5632, %v5238, -inf
  %v6054 = vrot.slane %v6053, 4
  %v6055 = vmax.f32 %v6053, %v6054
  %v6056 = vrot.slane %v6055, 2
  %v6057 = vmax.f32 %v6055, %v6056
  %v6058 = vrot.slane %v6057, 1
  %v6059 = vmax.f32 %v6057, %v6058
  %v6060 = vsel %vm5632, %v5239, -inf
  %v6061 = vrot.slane %v6060, 4
  %v6062 = vmax.f32 %v6060, %v6061
  %v6063 = vrot.slane %v6062, 2
  %v6064 = vmax.f32 %v6062, %v6063
  %v6065 = vrot.slane %v6064, 1
  %v6066 = vmax.f32 %v6064, %v6065
  %v6067 = vsel %vm5632, %v5246, -inf
  %v6068 = vrot.slane %v6067, 4
  %v6069 = vmax.f32 %v6067, %v6068
  %v6070 = vrot.slane %v6069, 2
  %v6071 = vmax.f32 %v6069, %v6070
  %v6072 = vrot.slane %v6071, 1
  %v6073 = vmax.f32 %v6071, %v6072
  %v6074 = vsel %vm5632, %v5247, -inf
  %v6075 = vrot.slane %v6074, 4
  %v6076 = vmax.f32 %v6074, %v6075
  %v6077 = vrot.slane %v6076, 2
  %v6078 = vmax.f32 %v6076, %v6077
  %v6079 = vrot.slane %v6078, 1
  %v6080 = vmax.f32 %v6078, %v6079
  %v6081 = vsel %vm5632, %v5254, -inf
  %v6082 = vrot.slane %v6081, 4
  %v6083 = vmax.f32 %v6081, %v6082
  %v6084 = vrot.slane %v6083, 2
  %v6085 = vmax.f32 %v6083, %v6084
  %v6086 = vrot.slane %v6085, 1
  %v6087 = vmax.f32 %v6085, %v6086
  %v6088 = vsel %vm5632, %v5255, -inf
  %v6089 = vrot.slane %v6088, 4
  %v6090 = vmax.f32 %v6088, %v6089
  %v6091 = vrot.slane %v6090, 2
  %v6092 = vmax.f32 %v6090, %v6091
  %v6093 = vrot.slane %v6092, 1
  %v6094 = vmax.f32 %v6092, %v6093
  %v6095 = vsel %vm5632, %v5262, -inf
  %v6096 = vrot.slane %v6095, 4
  %v6097 = vmax.f32 %v6095, %v6096
  %v6098 = vrot.slane %v6097, 2
  %v6099 = vmax.f32 %v6097, %v6098
  %v6100 = vrot.slane %v6099, 1
  %v6101 = vmax.f32 %v6099, %v6100
  %v6102 = vsel %vm5632, %v5263, -inf
  %v6103 = vrot.slane %v6102, 4
  %v6104 = vmax.f32 %v6102, %v6103
  %v6105 = vrot.slane %v6104, 2
  %v6106 = vmax.f32 %v6104, %v6105
  %v6107 = vrot.slane %v6106, 1
  %v6108 = vmax.f32 %v6106, %v6107
  %v6109 = vsel %vm5632, %v5270, -inf
  %v6110 = vrot.slane %v6109, 4
  %v6111 = vmax.f32 %v6109, %v6110
  %v6112 = vrot.slane %v6111, 2
  %v6113 = vmax.f32 %v6111, %v6112
  %v6114 = vrot.slane %v6113, 1
  %v6115 = vmax.f32 %v6113, %v6114
  %v6116 = vsel %vm5632, %v5271, -inf
  %v6117 = vrot.slane %v6116, 4
  %v6118 = vmax.f32 %v6116, %v6117
  %v6119 = vrot.slane %v6118, 2
  %v6120 = vmax.f32 %v6118, %v6119
  %v6121 = vrot.slane %v6120, 1
  %v6122 = vmax.f32 %v6120, %v6121
  %v6123 = vsel %vm5632, %v5278, -inf
  %v6124 = vrot.slane %v6123, 4
  %v6125 = vmax.f32 %v6123, %v6124
  %v6126 = vrot.slane %v6125, 2
  %v6127 = vmax.f32 %v6125, %v6126
  %v6128 = vrot.slane %v6127, 1
  %v6129 = vmax.f32 %v6127, %v6128
  %v6130 = vsel %vm5632, %v5279, -inf
  %v6131 = vrot.slane %v6130, 4
  %v6132 = vmax.f32 %v6130, %v6131
  %v6133 = vrot.slane %v6132, 2
  %v6134 = vmax.f32 %v6132, %v6133
  %v6135 = vrot.slane %v6134, 1
  %v6136 = vmax.f32 %v6134, %v6135
  %v6137 = vsel %vm5632, %v5286, -inf
  %v6138 = vrot.slane %v6137, 4
  %v6139 = vmax.f32 %v6137, %v6138
  %v6140 = vrot.slane %v6139, 2
  %v6141 = vmax.f32 %v6139, %v6140
  %v6142 = vrot.slane %v6141, 1
  %v6143 = vmax.f32 %v6141, %v6142
  %v6144 = vsel %vm5632, %v5287, -inf
  %v6145 = vrot.slane %v6144, 4
  %v6146 = vmax.f32 %v6144, %v6145
  %v6147 = vrot.slane %v6146, 2
  %v6148 = vmax.f32 %v6146, %v6147
  %v6149 = vrot.slane %v6148, 1
  %v6150 = vmax.f32 %v6148, %v6149
  %v6151 = vsel %vm5632, %v5294, -inf
  %v6152 = vrot.slane %v6151, 4
  %v6153 = vmax.f32 %v6151, %v6152
  %v6154 = vrot.slane %v6153, 2
  %v6155 = vmax.f32 %v6153, %v6154
  %v6156 = vrot.slane %v6155, 1
  %v6157 = vmax.f32 %v6155, %v6156
  %v6158 = vsel %vm5632, %v5295, -inf
  %v6159 = vrot.slane %v6158, 4
  %v6160 = vmax.f32 %v6158, %v6159
  %v6161 = vrot.slane %v6160, 2
  %v6162 = vmax.f32 %v6160, %v6161
  %v6163 = vrot.slane %v6162, 1
  %v6164 = vmax.f32 %v6162, %v6163
  %v6165 = vsel %vm5632, %v5302, -inf
  %v6166 = vrot.slane %v6165, 4
  %v6167 = vmax.f32 %v6165, %v6166
  %v6168 = vrot.slane %v6167, 2
  %v6169 = vmax.f32 %v6167, %v6168
  %v6170 = vrot.slane %v6169, 1
  %v6171 = vmax.f32 %v6169, %v6170
  %v6172 = vsel %vm5632, %v5303, -inf
  %v6173 = vrot.slane %v6172, 4
  %v6174 = vmax.f32 %v6172, %v6173
  %v6175 = vrot.slane %v6174, 2
  %v6176 = vmax.f32 %v6174, %v6175
  %v6177 = vrot.slane %v6176, 1
  %v6178 = vmax.f32 %v6176, %v6177
  %v6179 = vsel %vm5632, %v5310, -inf
  %v6180 = vrot.slane %v6179, 4
  %v6181 = vmax.f32 %v6179, %v6180
  %v6182 = vrot.slane %v6181, 2
  %v6183 = vmax.f32 %v6181, %v6182
  %v6184 = vrot.slane %v6183, 1
  %v6185 = vmax.f32 %v6183, %v6184
  %v6186 = vsel %vm5632, %v5311, -inf
  %v6187 = vrot.slane %v6186, 4
  %v6188 = vmax.f32 %v6186, %v6187
  %v6189 = vrot.slane %v6188, 2
  %v6190 = vmax.f32 %v6188, %v6189
  %v6191 = vrot.slane %v6190, 1
  %v6192 = vmax.f32 %v6190, %v6191
  %v6193 = vsel %vm5632, %v5318, -inf
  %v6194 = vrot.slane %v6193, 4
  %v6195 = vmax.f32 %v6193, %v6194
  %v6196 = vrot.slane %v6195, 2
  %v6197 = vmax.f32 %v6195, %v6196
  %v6198 = vrot.slane %v6197, 1
  %v6199 = vmax.f32 %v6197, %v6198
  %v6200 = vsel %vm5632, %v5319, -inf
  %v6201 = vrot.slane %v6200, 4
  %v6202 = vmax.f32 %v6200, %v6201
  %v6203 = vrot.slane %v6202, 2
  %v6204 = vmax.f32 %v6202, %v6203
  %v6205 = vrot.slane %v6204, 1
  %v6206 = vmax.f32 %v6204, %v6205
  %v6207 = vsel %vm5632, %v5326, -inf
  %v6208 = vrot.slane %v6207, 4
  %v6209 = vmax.f32 %v6207, %v6208
  %v6210 = vrot.slane %v6209, 2
  %v6211 = vmax.f32 %v6209, %v6210
  %v6212 = vrot.slane %v6211, 1
  %v6213 = vmax.f32 %v6211, %v6212
  %v6214 = vsel %vm5632, %v5327, -inf
  %v6215 = vrot.slane %v6214, 4
  %v6216 = vmax.f32 %v6214, %v6215
  %v6217 = vrot.slane %v6216, 2
  %v6218 = vmax.f32 %v6216, %v6217
  %v6219 = vrot.slane %v6218, 1
  %v6220 = vmax.f32 %v6218, %v6219
  %v6221 = vsel %vm5632, %v5334, -inf
  %v6222 = vrot.slane %v6221, 4
  %v6223 = vmax.f32 %v6221, %v6222
  %v6224 = vrot.slane %v6223, 2
  %v6225 = vmax.f32 %v6223, %v6224
  %v6226 = vrot.slane %v6225, 1
  %v6227 = vmax.f32 %v6225, %v6226
  %v6228 = vsel %vm5632, %v5335, -inf
  %v6229 = vrot.slane %v6228, 4
  %v6230 = vmax.f32 %v6228, %v6229
  %v6231 = vrot.slane %v6230, 2
  %v6232 = vmax.f32 %v6230, %v6231
  %v6233 = vrot.slane %v6232, 1
  %v6234 = vmax.f32 %v6232, %v6233
  %v6235 = vsel %vm5632, %v5342, -inf
  %v6236 = vrot.slane %v6235, 4
  %v6237 = vmax.f32 %v6235, %v6236
  %v6238 = vrot.slane %v6237, 2
  %v6239 = vmax.f32 %v6237, %v6238
  %v6240 = vrot.slane %v6239, 1
  %v6241 = vmax.f32 %v6239, %v6240
  %v6242 = vsel %vm5632, %v5343, -inf
  %v6243 = vrot.slane %v6242, 4
  %v6244 = vmax.f32 %v6242, %v6243
  %v6245 = vrot.slane %v6244, 2
  %v6246 = vmax.f32 %v6244, %v6245
  %v6247 = vrot.slane %v6246, 1
  %v6248 = vmax.f32 %v6246, %v6247
  %v6249 = vsel %vm5632, %v5350, -inf
  %v6250 = vrot.slane %v6249, 4
  %v6251 = vmax.f32 %v6249, %v6250
  %v6252 = vrot.slane %v6251, 2
  %v6253 = vmax.f32 %v6251, %v6252
  %v6254 = vrot.slane %v6253, 1
  %v6255 = vmax.f32 %v6253, %v6254
  %v6256 = vsel %vm5632, %v5351, -inf
  %v6257 = vrot.slane %v6256, 4
  %v6258 = vmax.f32 %v6256, %v6257
  %v6259 = vrot.slane %v6258, 2
  %v6260 = vmax.f32 %v6258, %v6259
  %v6261 = vrot.slane %v6260, 1
  %v6262 = vmax.f32 %v6260, %v6261
  %v6263 = vsel %vm5632, %v5358, -inf
  %v6264 = vrot.slane %v6263, 4
  %v6265 = vmax.f32 %v6263, %v6264
  %v6266 = vrot.slane %v6265, 2
  %v6267 = vmax.f32 %v6265, %v6266
  %v6268 = vrot.slane %v6267, 1
  %v6269 = vmax.f32 %v6267, %v6268
  %v6270 = vsel %vm5632, %v5359, -inf
  %v6271 = vrot.slane %v6270, 4
  %v6272 = vmax.f32 %v6270, %v6271
  %v6273 = vrot.slane %v6272, 2
  %v6274 = vmax.f32 %v6272, %v6273
  %v6275 = vrot.slane %v6274, 1
  %v6276 = vmax.f32 %v6274, %v6275
  %v6277 = vsel %vm5632, %v5366, -inf
  %v6278 = vrot.slane %v6277, 4
  %v6279 = vmax.f32 %v6277, %v6278
  %v6280 = vrot.slane %v6279, 2
  %v6281 = vmax.f32 %v6279, %v6280
  %v6282 = vrot.slane %v6281, 1
  %v6283 = vmax.f32 %v6281, %v6282
  %v6284 = vsel %vm5632, %v5367, -inf
  %v6285 = vrot.slane %v6284, 4
  %v6286 = vmax.f32 %v6284, %v6285
  %v6287 = vrot.slane %v6286, 2
  %v6288 = vmax.f32 %v6286, %v6287
  %v6289 = vrot.slane %v6288, 1
  %v6290 = vmax.f32 %v6288, %v6289
  %v6291 = vsel %vm5632, %v5374, -inf
  %v6292 = vrot.slane %v6291, 4
  %v6293 = vmax.f32 %v6291, %v6292
  %v6294 = vrot.slane %v6293, 2
  %v6295 = vmax.f32 %v6293, %v6294
  %v6296 = vrot.slane %v6295, 1
  %v6297 = vmax.f32 %v6295, %v6296
  %v6298 = vsel %vm5632, %v5375, -inf
  %v6299 = vrot.slane %v6298, 4
  %v6300 = vmax.f32 %v6298, %v6299
  %v6301 = vrot.slane %v6300, 2
  %v6302 = vmax.f32 %v6300, %v6301
  %v6303 = vrot.slane %v6302, 1
  %v6304 = vmax.f32 %v6302, %v6303
  %v6305 = vsel %vm5632, %v5382, -inf
  %v6306 = vrot.slane %v6305, 4
  %v6307 = vmax.f32 %v6305, %v6306
  %v6308 = vrot.slane %v6307, 2
  %v6309 = vmax.f32 %v6307, %v6308
  %v6310 = vrot.slane %v6309, 1
  %v6311 = vmax.f32 %v6309, %v6310
  %v6312 = vsel %vm5632, %v5383, -inf
  %v6313 = vrot.slane %v6312, 4
  %v6314 = vmax.f32 %v6312, %v6313
  %v6315 = vrot.slane %v6314, 2
  %v6316 = vmax.f32 %v6314, %v6315
  %v6317 = vrot.slane %v6316, 1
  %v6318 = vmax.f32 %v6316, %v6317
  %v6319 = vsel %vm5632, %v5390, -inf
  %v6320 = vrot.slane %v6319, 4
  %v6321 = vmax.f32 %v6319, %v6320
  %v6322 = vrot.slane %v6321, 2
  %v6323 = vmax.f32 %v6321, %v6322
  %v6324 = vrot.slane %v6323, 1
  %v6325 = vmax.f32 %v6323, %v6324
  %v6326 = vsel %vm5632, %v5391, -inf
  %v6327 = vrot.slane %v6326, 4
  %v6328 = vmax.f32 %v6326, %v6327
  %v6329 = vrot.slane %v6328, 2
  %v6330 = vmax.f32 %v6328, %v6329
  %v6331 = vrot.slane %v6330, 1
  %v6332 = vmax.f32 %v6330, %v6331
  %v6333 = vsel %vm5632, %v5398, -inf
  %v6334 = vrot.slane %v6333, 4
  %v6335 = vmax.f32 %v6333, %v6334
  %v6336 = vrot.slane %v6335, 2
  %v6337 = vmax.f32 %v6335, %v6336
  %v6338 = vrot.slane %v6337, 1
  %v6339 = vmax.f32 %v6337, %v6338
  %v6340 = vsel %vm5632, %v5399, -inf
  %v6341 = vrot.slane %v6340, 4
  %v6342 = vmax.f32 %v6340, %v6341
  %v6343 = vrot.slane %v6342, 2
  %v6344 = vmax.f32 %v6342, %v6343
  %v6345 = vrot.slane %v6344, 1
  %v6346 = vmax.f32 %v6344, %v6345
  %v6347 = vsel %vm5632, %v5406, -inf
  %v6348 = vrot.slane %v6347, 4
  %v6349 = vmax.f32 %v6347, %v6348
  %v6350 = vrot.slane %v6349, 2
  %v6351 = vmax.f32 %v6349, %v6350
  %v6352 = vrot.slane %v6351, 1
  %v6353 = vmax.f32 %v6351, %v6352
  %v6354 = vsel %vm5632, %v5407, -inf
  %v6355 = vrot.slane %v6354, 4
  %v6356 = vmax.f32 %v6354, %v6355
  %v6357 = vrot.slane %v6356, 2
  %v6358 = vmax.f32 %v6356, %v6357
  %v6359 = vrot.slane %v6358, 1
  %v6360 = vmax.f32 %v6358, %v6359
  %v6361 = vsel %vm5632, %v5414, -inf
  %v6362 = vrot.slane %v6361, 4
  %v6363 = vmax.f32 %v6361, %v6362
  %v6364 = vrot.slane %v6363, 2
  %v6365 = vmax.f32 %v6363, %v6364
  %v6366 = vrot.slane %v6365, 1
  %v6367 = vmax.f32 %v6365, %v6366
  %v6368 = vsel %vm5632, %v5415, -inf
  %v6369 = vrot.slane %v6368, 4
  %v6370 = vmax.f32 %v6368, %v6369
  %v6371 = vrot.slane %v6370, 2
  %v6372 = vmax.f32 %v6370, %v6371
  %v6373 = vrot.slane %v6372, 1
  %v6374 = vmax.f32 %v6372, %v6373
  %v6375 = vsel %vm5632, %v5422, -inf
  %v6376 = vrot.slane %v6375, 4
  %v6377 = vmax.f32 %v6375, %v6376
  %v6378 = vrot.slane %v6377, 2
  %v6379 = vmax.f32 %v6377, %v6378
  %v6380 = vrot.slane %v6379, 1
  %v6381 = vmax.f32 %v6379, %v6380
  %v6382 = vsel %vm5632, %v5423, -inf
  %v6383 = vrot.slane %v6382, 4
  %v6384 = vmax.f32 %v6382, %v6383
  %v6385 = vrot.slane %v6384, 2
  %v6386 = vmax.f32 %v6384, %v6385
  %v6387 = vrot.slane %v6386, 1
  %v6388 = vmax.f32 %v6386, %v6387
  %v6389 = vsel %vm5632, %v5430, -inf
  %v6390 = vrot.slane %v6389, 4
  %v6391 = vmax.f32 %v6389, %v6390
  %v6392 = vrot.slane %v6391, 2
  %v6393 = vmax.f32 %v6391, %v6392
  %v6394 = vrot.slane %v6393, 1
  %v6395 = vmax.f32 %v6393, %v6394
  %v6396 = vsel %vm5632, %v5431, -inf
  %v6397 = vrot.slane %v6396, 4
  %v6398 = vmax.f32 %v6396, %v6397
  %v6399 = vrot.slane %v6398, 2
  %v6400 = vmax.f32 %v6398, %v6399
  %v6401 = vrot.slane %v6400, 1
  %v6402 = vmax.f32 %v6400, %v6401
  %v6403 = vsel %vm5632, %v5438, -inf
  %v6404 = vrot.slane %v6403, 4
  %v6405 = vmax.f32 %v6403, %v6404
  %v6406 = vrot.slane %v6405, 2
  %v6407 = vmax.f32 %v6405, %v6406
  %v6408 = vrot.slane %v6407, 1
  %v6409 = vmax.f32 %v6407, %v6408
  %v6410 = vsel %vm5632, %v5439, -inf
  %v6411 = vrot.slane %v6410, 4
  %v6412 = vmax.f32 %v6410, %v6411
  %v6413 = vrot.slane %v6412, 2
  %v6414 = vmax.f32 %v6412, %v6413
  %v6415 = vrot.slane %v6414, 1
  %v6416 = vmax.f32 %v6414, %v6415
  %v6417 = vsel %vm5632, %v5446, -inf
  %v6418 = vrot.slane %v6417, 4
  %v6419 = vmax.f32 %v6417, %v6418
  %v6420 = vrot.slane %v6419, 2
  %v6421 = vmax.f32 %v6419, %v6420
  %v6422 = vrot.slane %v6421, 1
  %v6423 = vmax.f32 %v6421, %v6422
  %v6424 = vsel %vm5632, %v5447, -inf
  %v6425 = vrot.slane %v6424, 4
  %v6426 = vmax.f32 %v6424, %v6425
  %v6427 = vrot.slane %v6426, 2
  %v6428 = vmax.f32 %v6426, %v6427
  %v6429 = vrot.slane %v6428, 1
  %v6430 = vmax.f32 %v6428, %v6429
  %v6431 = vsel %vm5632, %v5454, -inf
  %v6432 = vrot.slane %v6431, 4
  %v6433 = vmax.f32 %v6431, %v6432
  %v6434 = vrot.slane %v6433, 2
  %v6435 = vmax.f32 %v6433, %v6434
  %v6436 = vrot.slane %v6435, 1
  %v6437 = vmax.f32 %v6435, %v6436
  %v6438 = vsel %vm5632, %v5455, -inf
  %v6439 = vrot.slane %v6438, 4
  %v6440 = vmax.f32 %v6438, %v6439
  %v6441 = vrot.slane %v6440, 2
  %v6442 = vmax.f32 %v6440, %v6441
  %v6443 = vrot.slane %v6442, 1
  %v6444 = vmax.f32 %v6442, %v6443
  %v6445 = vsel %vm5632, %v5462, -inf
  %v6446 = vrot.slane %v6445, 4
  %v6447 = vmax.f32 %v6445, %v6446
  %v6448 = vrot.slane %v6447, 2
  %v6449 = vmax.f32 %v6447, %v6448
  %v6450 = vrot.slane %v6449, 1
  %v6451 = vmax.f32 %v6449, %v6450
  %v6452 = vsel %vm5632, %v5463, -inf
  %v6453 = vrot.slane %v6452, 4
  %v6454 = vmax.f32 %v6452, %v6453
  %v6455 = vrot.slane %v6454, 2
  %v6456 = vmax.f32 %v6454, %v6455
  %v6457 = vrot.slane %v6456, 1
  %v6458 = vmax.f32 %v6456, %v6457
  %v6459 = vsel %vm5632, %v5470, -inf
  %v6460 = vrot.slane %v6459, 4
  %v6461 = vmax.f32 %v6459, %v6460
  %v6462 = vrot.slane %v6461, 2
  %v6463 = vmax.f32 %v6461, %v6462
  %v6464 = vrot.slane %v6463, 1
  %v6465 = vmax.f32 %v6463, %v6464
  %v6466 = vsel %vm5632, %v5471, -inf
  %v6467 = vrot.slane %v6466, 4
  %v6468 = vmax.f32 %v6466, %v6467
  %v6469 = vrot.slane %v6468, 2
  %v6470 = vmax.f32 %v6468, %v6469
  %v6471 = vrot.slane %v6470, 1
  %v6472 = vmax.f32 %v6470, %v6471
  %v6473 = vsel %vm5632, %v5478, -inf
  %v6474 = vrot.slane %v6473, 4
  %v6475 = vmax.f32 %v6473, %v6474
  %v6476 = vrot.slane %v6475, 2
  %v6477 = vmax.f32 %v6475, %v6476
  %v6478 = vrot.slane %v6477, 1
  %v6479 = vmax.f32 %v6477, %v6478
  %v6480 = vsel %vm5632, %v5479, -inf
  %v6481 = vrot.slane %v6480, 4
  %v6482 = vmax.f32 %v6480, %v6481
  %v6483 = vrot.slane %v6482, 2
  %v6484 = vmax.f32 %v6482, %v6483
  %v6485 = vrot.slane %v6484, 1
  %v6486 = vmax.f32 %v6484, %v6485
  %v6487 = vsel %vm5632, %v5486, -inf
  %v6488 = vrot.slane %v6487, 4
  %v6489 = vmax.f32 %v6487, %v6488
  %v6490 = vrot.slane %v6489, 2
  %v6491 = vmax.f32 %v6489, %v6490
  %v6492 = vrot.slane %v6491, 1
  %v6493 = vmax.f32 %v6491, %v6492
  %v6494 = vsel %vm5632, %v5487, -inf
  %v6495 = vrot.slane %v6494, 4
  %v6496 = vmax.f32 %v6494, %v6495
  %v6497 = vrot.slane %v6496, 2
  %v6498 = vmax.f32 %v6496, %v6497
  %v6499 = vrot.slane %v6498, 1
  %v6500 = vmax.f32 %v6498, %v6499
  %v6501 = vsel %vm5632, %v5494, -inf
  %v6502 = vrot.slane %v6501, 4
  %v6503 = vmax.f32 %v6501, %v6502
  %v6504 = vrot.slane %v6503, 2
  %v6505 = vmax.f32 %v6503, %v6504
  %v6506 = vrot.slane %v6505, 1
  %v6507 = vmax.f32 %v6505, %v6506
  %v6508 = vsel %vm5632, %v5495, -inf
  %v6509 = vrot.slane %v6508, 4
  %v6510 = vmax.f32 %v6508, %v6509
  %v6511 = vrot.slane %v6510, 2
  %v6512 = vmax.f32 %v6510, %v6511
  %v6513 = vrot.slane %v6512, 1
  %v6514 = vmax.f32 %v6512, %v6513
  %v6515 = vsel %vm5632, %v5502, -inf
  %v6516 = vrot.slane %v6515, 4
  %v6517 = vmax.f32 %v6515, %v6516
  %v6518 = vrot.slane %v6517, 2
  %v6519 = vmax.f32 %v6517, %v6518
  %v6520 = vrot.slane %v6519, 1
  %v6521 = vmax.f32 %v6519, %v6520
  %v6522 = vsel %vm5632, %v5503, -inf
  %v6523 = vrot.slane %v6522, 4
  %v6524 = vmax.f32 %v6522, %v6523
  %v6525 = vrot.slane %v6524, 2
  %v6526 = vmax.f32 %v6524, %v6525
  %v6527 = vrot.slane %v6526, 1
  %v6528 = vmax.f32 %v6526, %v6527
  %v6529 = vmax.f32 %v5639, %v5695
  %v6530 = vmax.f32 %v5646, %v5702
  %v6531 = vmax.f32 %v5653, %v5709
  %v6532 = vmax.f32 %v5660, %v5716
  %v6533 = vmax.f32 %v5667, %v5723
  %v6534 = vmax.f32 %v5674, %v5730
  %v6535 = vmax.f32 %v5681, %v5737
  %v6536 = vmax.f32 %v5688, %v5744
  %v6537 = vmax.f32 %v5751, %v5807
  %v6538 = vmax.f32 %v5758, %v5814
  %v6539 = vmax.f32 %v5765, %v5821
  %v6540 = vmax.f32 %v5772, %v5828
  %v6541 = vmax.f32 %v5779, %v5835
  %v6542 = vmax.f32 %v5786, %v5842
  %v6543 = vmax.f32 %v5793, %v5849
  %v6544 = vmax.f32 %v5800, %v5856
  %v6545 = vmax.f32 %v5863, %v5919
  %v6546 = vmax.f32 %v5870, %v5926
  %v6547 = vmax.f32 %v5877, %v5933
  %v6548 = vmax.f32 %v5884, %v5940
  %v6549 = vmax.f32 %v5891, %v5947
  %v6550 = vmax.f32 %v5898, %v5954
  %v6551 = vmax.f32 %v5905, %v5961
  %v6552 = vmax.f32 %v5912, %v5968
  %v6553 = vmax.f32 %v5975, %v6031
  %v6554 = vmax.f32 %v5982, %v6038
  %v6555 = vmax.f32 %v5989, %v6045
  %v6556 = vmax.f32 %v5996, %v6052
  %v6557 = vmax.f32 %v6003, %v6059
  %v6558 = vmax.f32 %v6010, %v6066
  %v6559 = vmax.f32 %v6017, %v6073
  %v6560 = vmax.f32 %v6024, %v6080
  %v6561 = vmax.f32 %v6087, %v6143
  %v6562 = vmax.f32 %v6094, %v6150
  %v6563 = vmax.f32 %v6101, %v6157
  %v6564 = vmax.f32 %v6108, %v6164
  %v6565 = vmax.f32 %v6115, %v6171
  %v6566 = vmax.f32 %v6122, %v6178
  %v6567 = vmax.f32 %v6129, %v6185
  %v6568 = vmax.f32 %v6136, %v6192
  %v6569 = vmax.f32 %v6199, %v6255
  %v6570 = vmax.f32 %v6206, %v6262
  %v6571 = vmax.f32 %v6213, %v6269
  %v6572 = vmax.f32 %v6220, %v6276
  %v6573 = vmax.f32 %v6227, %v6283
  %v6574 = vmax.f32 %v6234, %v6290
  %v6575 = vmax.f32 %v6241, %v6297
  %v6576 = vmax.f32 %v6248, %v6304
  %v6577 = vmax.f32 %v6311, %v6367
  %v6578 = vmax.f32 %v6318, %v6374
  %v6579 = vmax.f32 %v6325, %v6381
  %v6580 = vmax.f32 %v6332, %v6388
  %v6581 = vmax.f32 %v6339, %v6395
  %v6582 = vmax.f32 %v6346, %v6402
  %v6583 = vmax.f32 %v6353, %v6409
  %v6584 = vmax.f32 %v6360, %v6416
  %v6585 = vmax.f32 %v6423, %v6479
  %v6586 = vmax.f32 %v6430, %v6486
  %v6587 = vmax.f32 %v6437, %v6493
  %v6588 = vmax.f32 %v6444, %v6500
  %v6589 = vmax.f32 %v6451, %v6507
  %v6590 = vmax.f32 %v6458, %v6514
  %v6591 = vmax.f32 %v6465, %v6521
  %v6592 = vmax.f32 %v6472, %v6528
  %v6593 = vld [vmem:[%s2] sm:$0x3]
  %v6595 = vlaneseq
  %v6596 = vshrl.u32 %v6595, 7
  %v6597 = vsub.s32 0, %v6596
  %v6598 = vrot.slane %v6593, %v6597
  %v6599 = vlaneseq
  %v6600 = vshrl.u32 %v6599, 7
  %v6601 = vsub.s32 1, %v6600
  %v6602 = vrot.slane %v6593, %v6601
  %v6605 = vadd.f32 %v6529, %v6598
  %v6606 = vadd.f32 %v6530, %v6602
  %v6607 = vadd.f32 %v6531, %v6598
  %v6608 = vadd.f32 %v6532, %v6602
  %v6609 = vadd.f32 %v6533, %v6598
  %v6610 = vadd.f32 %v6534, %v6602
  %v6611 = vadd.f32 %v6535, %v6598
  %v6612 = vadd.f32 %v6536, %v6602
  %v6613 = vadd.f32 %v6537, %v6598
  %v6614 = vadd.f32 %v6538, %v6602
  %v6615 = vadd.f32 %v6539, %v6598
  %v6616 = vadd.f32 %v6540, %v6602
  %v6617 = vadd.f32 %v6541, %v6598
  %v6618 = vadd.f32 %v6542, %v6602
  %v6619 = vadd.f32 %v6543, %v6598
  %v6620 = vadd.f32 %v6544, %v6602
  %v6621 = vadd.f32 %v6545, %v6598
  %v6622 = vadd.f32 %v6546, %v6602
  %v6623 = vadd.f32 %v6547, %v6598
  %v6624 = vadd.f32 %v6548, %v6602
  %v6625 = vadd.f32 %v6549, %v6598
  %v6626 = vadd.f32 %v6550, %v6602
  %v6627 = vadd.f32 %v6551, %v6598
  %v6628 = vadd.f32 %v6552, %v6602
  %v6629 = vadd.f32 %v6553, %v6598
  %v6630 = vadd.f32 %v6554, %v6602
  %v6631 = vadd.f32 %v6555, %v6598
  %v6632 = vadd.f32 %v6556, %v6602
  %v6633 = vadd.f32 %v6557, %v6598
  %v6634 = vadd.f32 %v6558, %v6602
  %v6635 = vadd.f32 %v6559, %v6598
  %v6636 = vadd.f32 %v6560, %v6602
  %v6637 = vadd.f32 %v6561, %v6598
  %v6638 = vadd.f32 %v6562, %v6602
  %v6639 = vadd.f32 %v6563, %v6598
  %v6640 = vadd.f32 %v6564, %v6602
  %v6641 = vadd.f32 %v6565, %v6598
  %v6642 = vadd.f32 %v6566, %v6602
  %v6643 = vadd.f32 %v6567, %v6598
  %v6644 = vadd.f32 %v6568, %v6602
  %v6645 = vadd.f32 %v6569, %v6598
  %v6646 = vadd.f32 %v6570, %v6602
  %v6647 = vadd.f32 %v6571, %v6598
  %v6648 = vadd.f32 %v6572, %v6602
  %v6649 = vadd.f32 %v6573, %v6598
  %v6650 = vadd.f32 %v6574, %v6602
  %v6651 = vadd.f32 %v6575, %v6598
  %v6652 = vadd.f32 %v6576, %v6602
  %v6653 = vadd.f32 %v6577, %v6598
  %v6654 = vadd.f32 %v6578, %v6602
  %v6655 = vadd.f32 %v6579, %v6598
  %v6656 = vadd.f32 %v6580, %v6602
  %v6657 = vadd.f32 %v6581, %v6598
  %v6658 = vadd.f32 %v6582, %v6602
  %v6659 = vadd.f32 %v6583, %v6598
  %v6660 = vadd.f32 %v6584, %v6602
  %v6661 = vadd.f32 %v6585, %v6598
  %v6662 = vadd.f32 %v6586, %v6602
  %v6663 = vadd.f32 %v6587, %v6598
  %v6664 = vadd.f32 %v6588, %v6602
  %v6665 = vadd.f32 %v6589, %v6598
  %v6666 = vadd.f32 %v6590, %v6602
  %v6667 = vadd.f32 %v6591, %v6598
  %v6668 = vadd.f32 %v6592, %v6602
  %v6669 = vmax.f32 %v6605, 0.0
  %v6670 = vmax.f32 %v6606, 0.0
  %v6671 = vmax.f32 %v6607, 0.0
  %v6672 = vmax.f32 %v6608, 0.0
  %v6673 = vmax.f32 %v6609, 0.0
  %v6674 = vmax.f32 %v6610, 0.0
  %v6675 = vmax.f32 %v6611, 0.0
  %v6676 = vmax.f32 %v6612, 0.0
  %v6677 = vmax.f32 %v6613, 0.0
  %v6678 = vmax.f32 %v6614, 0.0
  %v6679 = vmax.f32 %v6615, 0.0
  %v6680 = vmax.f32 %v6616, 0.0
  %v6681 = vmax.f32 %v6617, 0.0
  %v6682 = vmax.f32 %v6618, 0.0
  %v6683 = vmax.f32 %v6619, 0.0
  %v6684 = vmax.f32 %v6620, 0.0
  %v6685 = vmax.f32 %v6621, 0.0
  %v6686 = vmax.f32 %v6622, 0.0
  %v6687 = vmax.f32 %v6623, 0.0
  %v6688 = vmax.f32 %v6624, 0.0
  %v6689 = vmax.f32 %v6625, 0.0
  %v6690 = vmax.f32 %v6626, 0.0
  %v6691 = vmax.f32 %v6627, 0.0
  %v6692 = vmax.f32 %v6628, 0.0
  %v6693 = vmax.f32 %v6629, 0.0
  %v6694 = vmax.f32 %v6630, 0.0
  %v6695 = vmax.f32 %v6631, 0.0
  %v6696 = vmax.f32 %v6632, 0.0
  %v6697 = vmax.f32 %v6633, 0.0
  %v6698 = vmax.f32 %v6634, 0.0
  %v6699 = vmax.f32 %v6635, 0.0
  %v6700 = vmax.f32 %v6636, 0.0
  %v6701 = vmax.f32 %v6637, 0.0
  %v6702 = vmax.f32 %v6638, 0.0
  %v6703 = vmax.f32 %v6639, 0.0
  %v6704 = vmax.f32 %v6640, 0.0
  %v6705 = vmax.f32 %v6641, 0.0
  %v6706 = vmax.f32 %v6642, 0.0
  %v6707 = vmax.f32 %v6643, 0.0
  %v6708 = vmax.f32 %v6644, 0.0
  %v6709 = vmax.f32 %v6645, 0.0
  %v6710 = vmax.f32 %v6646, 0.0
  %v6711 = vmax.f32 %v6647, 0.0
  %v6712 = vmax.f32 %v6648, 0.0
  %v6713 = vmax.f32 %v6649, 0.0
  %v6714 = vmax.f32 %v6650, 0.0
  %v6715 = vmax.f32 %v6651, 0.0
  %v6716 = vmax.f32 %v6652, 0.0
  %v6717 = vmax.f32 %v6653, 0.0
  %v6718 = vmax.f32 %v6654, 0.0
  %v6719 = vmax.f32 %v6655, 0.0
  %v6720 = vmax.f32 %v6656, 0.0
  %v6721 = vmax.f32 %v6657, 0.0
  %v6722 = vmax.f32 %v6658, 0.0
  %v6723 = vmax.f32 %v6659, 0.0
  %v6724 = vmax.f32 %v6660, 0.0
  %v6725 = vmax.f32 %v6661, 0.0
  %v6726 = vmax.f32 %v6662, 0.0
  %v6727 = vmax.f32 %v6663, 0.0
  %v6728 = vmax.f32 %v6664, 0.0
  %v6729 = vmax.f32 %v6665, 0.0
  %v6730 = vmax.f32 %v6666, 0.0
  %v6731 = vmax.f32 %v6667, 0.0
  %v6732 = vmax.f32 %v6668, 0.0
  %v6797 = vrot.slane %v6671, 7
  %vm6798 = vcmask 1041409
  %v6799 = vsel %vm6798, %v6797, %v6669
  %v6800 = vrot.slane %v6673, 6
  %vm6801 = vcmask 1042434
  %v6802 = vsel %vm6801, %v6800, %v6799
  %v6803 = vrot.slane %v6675, 5
  %vm6804 = vcmask 1043459
  %v6805 = vsel %vm6804, %v6803, %v6802
  %v6806 = vrot.slane %v6677, 4
  %vm6807 = vcmask 1044484
  %v6808 = vsel %vm6807, %v6806, %v6805
  %v6809 = vrot.slane %v6679, 3
  %vm6810 = vcmask 1045509
  %v6811 = vsel %vm6810, %v6809, %v6808
  %v6812 = vrot.slane %v6681, 2
  %vm6813 = vcmask 1046534
  %v6814 = vsel %vm6813, %v6812, %v6811
  %v6815 = vrot.slane %v6683, 1
  %vm6816 = vcmask 1047559
  %v6817 = vsel %vm6816, %v6815, %v6814
  %v6818 = vrot.slane %v6672, 7
  %v6819 = vsel %vm6798, %v6818, %v6670
  %v6820 = vrot.slane %v6674, 6
  %v6821 = vsel %vm6801, %v6820, %v6819
  %v6822 = vrot.slane %v6676, 5
  %v6823 = vsel %vm6804, %v6822, %v6821
  %v6824 = vrot.slane %v6678, 4
  %v6825 = vsel %vm6807, %v6824, %v6823
  %v6826 = vrot.slane %v6680, 3
  %v6827 = vsel %vm6810, %v6826, %v6825
  %v6828 = vrot.slane %v6682, 2
  %v6829 = vsel %vm6813, %v6828, %v6827
  %v6830 = vrot.slane %v6684, 1
  %v6831 = vsel %vm6816, %v6830, %v6829
  %v6832 = vrot.slane %v6687, 7
  %v6833 = vsel %vm6798, %v6832, %v6685
  %v6834 = vrot.slane %v6689, 6
  %v6835 = vsel %vm6801, %v6834, %v6833
  %v6836 = vrot.slane %v6691, 5
  %v6837 = vsel %vm6804, %v6836, %v6835
  %v6838 = vrot.slane %v6693, 4
  %v6839 = vsel %vm6807, %v6838, %v6837
  %v6840 = vrot.slane %v6695, 3
  %v6841 = vsel %vm6810, %v6840, %v6839
  %v6842 = vrot.slane %v6697, 2
  %v6843 = vsel %vm6813, %v6842, %v6841
  %v6844 = vrot.slane %v6699, 1
  %v6845 = vsel %vm6816, %v6844, %v6843
  %v6846 = vrot.slane %v6688, 7
  %v6847 = vsel %vm6798, %v6846, %v6686
  %v6848 = vrot.slane %v6690, 6
  %v6849 = vsel %vm6801, %v6848, %v6847
  %v6850 = vrot.slane %v6692, 5
  %v6851 = vsel %vm6804, %v6850, %v6849
  %v6852 = vrot.slane %v6694, 4
  %v6853 = vsel %vm6807, %v6852, %v6851
  %v6854 = vrot.slane %v6696, 3
  %v6855 = vsel %vm6810, %v6854, %v6853
  %v6856 = vrot.slane %v6698, 2
  %v6857 = vsel %vm6813, %v6856, %v6855
  %v6858 = vrot.slane %v6700, 1
  %v6859 = vsel %vm6816, %v6858, %v6857
  %v6860 = vrot.slane %v6703, 7
  %v6861 = vsel %vm6798, %v6860, %v6701
  %v6862 = vrot.slane %v6705, 6
  %v6863 = vsel %vm6801, %v6862, %v6861
  %v6864 = vrot.slane %v6707, 5
  %v6865 = vsel %vm6804, %v6864, %v6863
  %v6866 = vrot.slane %v6709, 4
  %v6867 = vsel %vm6807, %v6866, %v6865
  %v6868 = vrot.slane %v6711, 3
  %v6869 = vsel %vm6810, %v6868, %v6867
  %v6870 = vrot.slane %v6713, 2
  %v6871 = vsel %vm6813, %v6870, %v6869
  %v6872 = vrot.slane %v6715, 1
  %v6873 = vsel %vm6816, %v6872, %v6871
  %v6874 = vrot.slane %v6704, 7
  %v6875 = vsel %vm6798, %v6874, %v6702
  %v6876 = vrot.slane %v6706, 6
  %v6877 = vsel %vm6801, %v6876, %v6875
  %v6878 = vrot.slane %v6708, 5
  %v6879 = vsel %vm6804, %v6878, %v6877
  %v6880 = vrot.slane %v6710, 4
  %v6881 = vsel %vm6807, %v6880, %v6879
  %v6882 = vrot.slane %v6712, 3
  %v6883 = vsel %vm6810, %v6882, %v6881
  %v6884 = vrot.slane %v6714, 2
  %v6885 = vsel %vm6813, %v6884, %v6883
  %v6886 = vrot.slane %v6716, 1
  %v6887 = vsel %vm6816, %v6886, %v6885
  %v6888 = vrot.slane %v6719, 7
  %v6889 = vsel %vm6798, %v6888, %v6717
  %v6890 = vrot.slane %v6721, 6
  %v6891 = vsel %vm6801, %v6890, %v6889
  %v6892 = vrot.slane %v6723, 5
  %v6893 = vsel %vm6804, %v6892, %v6891
  %v6894 = vrot.slane %v6725, 4
  %v6895 = vsel %vm6807, %v6894, %v6893
  %v6896 = vrot.slane %v6727, 3
  %v6897 = vsel %vm6810, %v6896, %v6895
  %v6898 = vrot.slane %v6729, 2
  %v6899 = vsel %vm6813, %v6898, %v6897
  %v6900 = vrot.slane %v6731, 1
  %v6901 = vsel %vm6816, %v6900, %v6899
  %v6902 = vrot.slane %v6720, 7
  %v6903 = vsel %vm6798, %v6902, %v6718
  %v6904 = vrot.slane %v6722, 6
  %v6905 = vsel %vm6801, %v6904, %v6903
  %v6906 = vrot.slane %v6724, 5
  %v6907 = vsel %vm6804, %v6906, %v6905
  %v6908 = vrot.slane %v6726, 4
  %v6909 = vsel %vm6807, %v6908, %v6907
  %v6910 = vrot.slane %v6728, 3
  %v6911 = vsel %vm6810, %v6910, %v6909
  %v6912 = vrot.slane %v6730, 2
  %v6913 = vsel %vm6813, %v6912, %v6911
  %v6914 = vrot.slane %v6732, 1
  %v6915 = vsel %vm6816, %v6914, %v6913
  %6924 = vst [vmem:[%s3] sm:$0xff] %v6817
  %6925 = vst [vmem:[%s3 + $0x8] sm:$0xff] %v6831
  %6926 = vst [vmem:[%s3 + $0x10] sm:$0xff] %v6845
  %6927 = vst [vmem:[%s3 + $0x18] sm:$0xff] %v6859
  %6928 = vst [vmem:[%s3 + $0x20] sm:$0xff] %v6873
  %6929 = vst [vmem:[%s3 + $0x28] sm:$0xff] %v6887
  %6930 = vst [vmem:[%s3 + $0x30] sm:$0xff] %v6901
  %6931 = vst [vmem:[%s3 + $0x38] sm:$0xff] %v6915
  // Predicated region
  $region14: #{net_forward.1} parent=0 // pred_check
    _
  $region15: #{net_forward.1} parent=0 // pred_check_branch
    %6933 = sbr.rel (0) target = $region17
  $region16: #{net_forward.1} parent=0 // pred_region
    _
  $region17: #{net_forward.1} parent=0 // pred_fallthru
    _
  // Predicated region
  $region18: #{net_forward.1} parent=0 // pred_check
    _
  $region19: #{net_forward.1} parent=0 // pred_check_branch
    %6935 = sbr.rel (0) target = $region21
  $region20: #{net_forward.1} parent=0 // pred_region
    _
  $region21: #{net_forward.1} parent=0 // pred_fallthru
    _

</llo_original>
